<compile_context>
chip_gen: v7x
topology: tpu7x:2x2x1
jax: 0.10.0
libtpu: 0.0.40
codegen_flags: <defaults>
</compile_context>

<pallas_src>
import functools

import jax
import jax.numpy as jnp
from jax.experimental import pallas as pl
from jax.experimental.pallas import tpu as pltpu


# ----------------------------- fused Pallas kernel ---------------------------

def _lstm_predictor_kernel(x_ref, h0_ref, c0_ref, w_ref, b_ref, fcw_ref, fcb_ref,
                           out_ref):
    """Fused LSTMPredictor forward.

    x_ref  : (T, B, I)  f32   observed sequence (time-major)
    h0_ref : (L, B, H)  f32   initial hidden state
    c0_ref : (L, B, H)  f32   initial cell state
    w_ref  : (L, PAD+H, 4H)   stacked fused weights, rows [0:in_dim_l] = W_ih^T,
                              rows [PAD:PAD+H] = W_hh^T (zero-padded), matmul dtype
    b_ref  : (L, 1, 4H) f32   combined bias b_ih + b_hh
    fcw_ref: (H, I)           fc_out weight (transposed), matmul dtype
    fcb_ref: (1, I)     f32   fc_out bias
    out_ref: (FUT*L, B, H) f32
    """
    T, B, I = x_ref.shape
    L, _, H = h0_ref.shape
    FUT = out_ref.shape[0] // L
    PAD = w_ref.shape[1] - H                   # padded per-layer input width
    md = w_ref.dtype                           # matmul (MXU input) dtype
    in_dims = [I] + [H] * (L - 1)

    # ---- hoisted parameter loads (done exactly once) -------------------------
    w_full = [w_ref[l] for l in range(L)]                       # (PAD+H, 4H)
    w_x = [w_full[l][:in_dims[l], :] for l in range(L)]         # (in_dim_l, 4H)
    w_h = [w_full[l][PAD:, :] for l in range(L)]                # (H, 4H)
    bias = [jnp.broadcast_to(b_ref[l], (B, 4 * H)) for l in range(L)]
    fcw = fcw_ref[...]                                          # (H, I)
    fcb = jnp.broadcast_to(fcb_ref[...], (L * B, I))            # (L*B, I)

    # ---- hoisted gate-activation constants (iota emitted once, not per cell) --
    lane = jax.lax.broadcasted_iota(jnp.int32, (B, 4 * H), 1)
    is_g = (lane >= 2 * H) & (lane < 3 * H)
    scale = jnp.where(is_g, 1.0, 0.5).astype(jnp.float32)       # 1 on g, 0.5 else
    offs = jnp.where(is_g, 0.0, 0.5).astype(jnp.float32)        # 0 on g, 0.5 else

    def gates_to_hc(gates, c_prev):
        """PyTorch gate order i, f, g, o.  One tanh per gate vreg:
        sigmoid(x) = 0.5*(1 + tanh(x/2)); g-gate lanes get plain tanh."""
        t = jnp.tanh(gates * scale)
        act = t * scale + offs
        i_g = act[:, 0 * H:1 * H]
        f_g = act[:, 1 * H:2 * H]
        g_g = act[:, 2 * H:3 * H]
        o_g = act[:, 3 * H:4 * H]
        c_new = f_g * c_prev + i_g * g_g
        h_new = o_g * jnp.tanh(c_new)
        return h_new, c_new

    def stack_step(inp, h, c, gx0=None):
        """Advance the whole num_layers stack by one (pseudo-)timestep.
        gx0, if given, is the precomputed layer-0 input contribution (B, 4H)."""
        for l in range(L):
            if l == 0 and gx0 is not None:
                gx = gx0
            else:
                gx = jnp.dot(inp.astype(md), w_x[l],
                             preferred_element_type=jnp.float32)
            gates = (gx
                     + jnp.dot(h[l].astype(md), w_h[l],
                               preferred_element_type=jnp.float32)
                     + bias[l])
            h[l], c[l] = gates_to_hc(gates, c[l])
            inp = h[l]
        return h, c

    h = [h0_ref[l] for l in range(L)]
    c = [c0_ref[l] for l in range(L)]

    # ---- Phase 1: observed sequence ------------------------------------------
    # Layer-0 input contributions for ALL timesteps in one MXU op (off the
    # recurrence's critical path); only the h-dependent dots stay serial.
    x_all = x_ref[...].reshape(T * B, I).astype(md)
    x_proj = jnp.dot(x_all, w_x[0],
                     preferred_element_type=jnp.float32).reshape(T, B, 4 * H)
    for t in range(T):
        h, c = stack_step(None, h, c, gx0=x_proj[t])

    # ---- Phase 2: autoregressive future rollout -------------------------------
    # fc_out is applied to the h-stack *snapshot* at the start of each future step
    # (one batched (L*B,H)x(H,I) dot); the result is run through the stacked LSTM
    # as a length-L pseudo-sequence (faithful to the PyTorch module).
    out_blocks = []
    for f in range(FUT):
        h_stack = jnp.concatenate(h, axis=0)                    # (L*B, H) snapshot
        nxt_all = jnp.dot(h_stack.astype(md), fcw,
                          preferred_element_type=jnp.float32) + fcb
        for s in range(L):
            h, c = stack_step(nxt_all[s * B:(s + 1) * B, :], h, c)
        out_blocks.extend(h)                                    # h[0..L-1] snapshot
    out_ref[...] = jnp.stack(out_blocks, axis=0)                # single store


def _full_spec(shape):
    nd = len(shape)
    # Single-block spec: block == full array (satisfies the (8,128) rule trivially).
    return pl.BlockSpec(shape, lambda i, _nd=nd: (0,) * _nd)


# ----------------------------- host-side wrappers ----------------------------

def pack_params(w_ih, w_hh, b_ih, b_hh, fc_w, fc_b, matmul_dtype=jnp.bfloat16):
    """Stack/fuse the per-layer PyTorch-layout parameters into the kernel layout.

    w_ih[l]: (4H, in_dim_l), w_hh[l]: (4H, H), b_ih[l]/b_hh[l]: (4H,),
    fc_w: (I, H), fc_b: (I,).
    Returns (w_all (L, PAD+H, 4H) in matmul_dtype, b_all (L,1,4H) f32,
             fc_w_t (H, I) in matmul_dtype, fc_b2 (1, I) f32).
    """
    L = len(w_ih)
    H = w_hh[0].shape[1]
    I = w_ih[0].shape[1]
    PAD = max(I, H)
    w_all = jnp.zeros((L, PAD + H, 4 * H), jnp.float32)
    b_all = jnp.zeros((L, 1, 4 * H), jnp.float32)
    for l in range(L):
        in_dim = w_ih[l].shape[1]
        w_all = w_all.at[l, :in_dim, :].set(w_ih[l].T)
        w_all = w_all.at[l, PAD:, :].set(w_hh[l].T)
        b_all = b_all.at[l, 0, :].set(b_ih[l] + b_hh[l])
    # Pre-cast MXU operands OUTSIDE the kernel (halves weight DMA bytes for bf16).
    return (w_all.astype(matmul_dtype), b_all,
            fc_w.T.astype(matmul_dtype), fc_b[None, :].astype(jnp.float32))


@functools.partial(jax.jit, static_argnames=("future_steps",))
def lstm_predictor_forward(x, h0, c0, w_all, b_all, fc_w_t, fc_b, *, future_steps):
    """x: (B,T,I); h0/c0: (L,B,H); packed params from pack_params().
    Returns (B, future_steps*L, H) float32."""
    B, T, I = x.shape
    L, _, H = h0.shape

    x_t = jnp.transpose(x, (1, 0, 2))                    # (T, B, I): time-major
    inputs = (x_t, h0, c0, w_all, b_all, fc_w_t, fc_b)

    # Advisory cost estimate so XLA schedules the fused custom call sensibly.
    in_dims = [I] + [H] * (L - 1)
    n_steps = T + future_steps * L
    flops = n_steps * sum(2 * B * (d + H) * 4 * H for d in in_dims)
    flops += future_steps * 2 * (L * B) * H * I
    transcendentals = n_steps * L * B * 5 * H            # one 4H tanh + one H tanh / cell
    bytes_accessed = (sum(int(a.size) * a.dtype.itemsize for a in inputs)
                      + future_steps * L * B * H * 4)

    out = pl.pallas_call(
        _lstm_predictor_kernel,
        # grid=(1,): the whole forward is one resident step.  On v7x with larger
        # batches, add a leading "parallel" grid axis over batch tiles to use the
        # second TensorCore; at B=2 it would be pure overhead.
        grid=(1,),
        in_specs=[_full_spec(a.shape) for a in inputs],
        out_specs=_full_spec((future_steps * L, B, H)),
        out_shape=jax.ShapeDtypeStruct((future_steps * L, B, H), jnp.float32),
        compiler_params=pltpu.CompilerParams(dimension_semantics=("arbitrary",)),
        cost_estimate=pl.CostEstimate(flops=flops,
                                      transcendentals=transcendentals,
                                      bytes_accessed=bytes_accessed),
    )(*inputs)
    return jnp.transpose(out, (1, 0, 2))                 # (B, future_steps*L, H)


# ----------------------------- pure-JAX reference ----------------------------

def lstm_predictor_reference(x, h0, c0, w_ih, w_hh, b_ih, b_hh, fc_w, fc_b,
                             future_steps):
    """Faithful f32 port of the PyTorch module (gate order i, f, g, o)."""
    B, T, I = x.shape
    L, _, H = h0.shape

    def cell(inp, h, c, l):
        gates = inp @ w_ih[l].T + h @ w_hh[l].T + b_ih[l] + b_hh[l]
        i = jax.nn.sigmoid(gates[:, :H])
        f = jax.nn.sigmoid(gates[:, H:2 * H])
        g = jnp.tanh(gates[:, 2 * H:3 * H])
        o = jax.nn.sigmoid(gates[:, 3 * H:])
        c_new = f * c + i * g
        return o * jnp.tanh(c_new), c_new

    def stack_step(inp, h, c):
        for l in range(L):
            h[l], c[l] = cell(inp, h[l], c[l], l)
            inp = h[l]
        return h, c

    h = [h0[l] for l in range(L)]
    c = [c0[l] for l in range(L)]
    for t in range(T):
        h, c = stack_step(x[:, t, :], h, c)
    outs = []
    for _ in range(future_steps):
        nxt = [h[s] @ fc_w.T + fc_b for s in range(L)]   # fc on the h snapshot
        for s in range(L):
            h, c = stack_step(nxt[s], h, c)
        outs.append(jnp.stack(h, axis=0))                # (L, B, H)
    out = jnp.concatenate(outs, axis=0)                  # (future_steps*L, B, H)
    return jnp.transpose(out, (1, 0, 2))


# ----------------------------- main -------------------------------------------

if __name__ == "__main__":
    B, T, I, H, L, FUT = 2, 8, 16, 32, 2, 3

    key = jax.random.PRNGKey(0)
    keys = jax.random.split(key, 4 * L + 5)
    k = 1.0 / jnp.sqrt(jnp.float32(H))

    w_ih, w_hh, b_ih, b_hh = [], [], [], []
    ki = 0
    for l in range(L):
        in_dim = I if l == 0 else H
        w_ih.append(jax.random.uniform(keys[ki], (4 * H, in_dim), jnp.float32, -k, k)); ki += 1
        w_hh.append(jax.random.uniform(keys[ki], (4 * H, H), jnp.float32, -k, k)); ki += 1
        b_ih.append(jax.random.uniform(keys[ki], (4 * H,), jnp.float32, -k, k)); ki += 1
        b_hh.append(jax.random.uniform(keys[ki], (4 * H,), jnp.float32, -k, k)); ki += 1
    fc_w = jax.random.uniform(keys[ki], (I, H), jnp.float32, -k, k); ki += 1
    fc_b = jax.random.uniform(keys[ki], (I,), jnp.float32, -k, k); ki += 1

    x = jax.random.normal(keys[ki], (B, T, I), jnp.float32); ki += 1
    h0 = jax.random.normal(keys[ki], (L, B, H), jnp.float32); ki += 1
    c0 = jax.random.normal(keys[ki], (L, B, H), jnp.float32); ki += 1

    ref = jax.block_until_ready(
        lstm_predictor_reference(x, h0, c0, w_ih, w_hh, b_ih, b_hh, fc_w, fc_b, FUT))

    # f32 MXU path: tight correctness check.
    params_f32 = pack_params(w_ih, w_hh, b_ih, b_hh, fc_w, fc_b,
                             matmul_dtype=jnp.float32)
    out_f32 = jax.block_until_ready(
        lstm_predictor_forward(x, h0, c0, *params_f32, future_steps=FUT))
    assert out_f32.shape == (B, FUT * L, H), out_f32.shape
    assert jnp.allclose(out_f32, ref, atol=1e-4, rtol=1e-4), \
        float(jnp.max(jnp.abs(out_f32 - ref)))

    # Default bf16 MXU path (single-pass MXU on v5e/v6e/v7x; f32 accumulation/state):
    # reference check with loosened tolerance as expected for bf16 weights.
    params_bf16 = pack_params(w_ih, w_hh, b_ih, b_hh, fc_w, fc_b)
    out_bf16 = jax.block_until_ready(
        lstm_predictor_forward(x, h0, c0, *params_bf16, future_steps=FUT))
    assert out_bf16.shape == (B, FUT * L, H), out_bf16.shape
    assert jnp.allclose(out_bf16, ref, atol=5e-2, rtol=5e-2), \
        float(jnp.max(jnp.abs(out_bf16 - ref)))

    print("KERNEL_OK")
</pallas_src>

<mosaic_0001>
module attributes {stable_mosaic.version = 11 : i64} {
  func.func @_lstm_predictor_kernel(%arg0: i32, %arg1: memref<8x2x16xf32, #tpu.memory_space<vmem>>, %arg2: memref<2x2x32xf32, #tpu.memory_space<vmem>>, %arg3: memref<2x2x32xf32, #tpu.memory_space<vmem>>, %arg4: memref<2x64x128xf32, #tpu.memory_space<vmem>>, %arg5: memref<2x1x128xf32, #tpu.memory_space<vmem>>, %arg6: memref<32x16xf32, #tpu.memory_space<vmem>>, %arg7: memref<1x16xf32, #tpu.memory_space<vmem>>, %arg8: memref<6x2x32xf32, #tpu.memory_space<vmem>>) attributes {dimension_semantics = [#tpu.dimension_semantics<arbitrary>], iteration_bounds = array<i64: 1>, scalar_prefetch = 0 : i64, scratch_operands = 0 : i64, tpu.core_type = #tpu.core_type<tc>, window_params = [{pipeline_mode = #tpu.pipeline_mode<synchronous>, transform_indices = @transform_0, window_bounds = array<i64: 8, 2, 16>}, {pipeline_mode = #tpu.pipeline_mode<synchronous>, transform_indices = @transform_1, window_bounds = array<i64: 2, 2, 32>}, {pipeline_mode = #tpu.pipeline_mode<synchronous>, transform_indices = @transform_2, window_bounds = array<i64: 2, 2, 32>}, {pipeline_mode = #tpu.pipeline_mode<synchronous>, transform_indices = @transform_3, window_bounds = array<i64: 2, 64, 128>}, {pipeline_mode = #tpu.pipeline_mode<synchronous>, transform_indices = @transform_4, window_bounds = array<i64: 2, 1, 128>}, {pipeline_mode = #tpu.pipeline_mode<synchronous>, transform_indices = @transform_5, window_bounds = array<i64: 32, 16>}, {pipeline_mode = #tpu.pipeline_mode<synchronous>, transform_indices = @transform_6, window_bounds = array<i64: 1, 16>}, {pipeline_mode = #tpu.pipeline_mode<synchronous>, transform_indices = @transform_7, window_bounds = array<i64: 6, 2, 32>}]} {
    %c0 = arith.constant 0 : index
    %c0_0 = arith.constant 0 : index
    %c0_1 = arith.constant 0 : index
    %0 = vector.load %arg4[%c0, %c0_0, %c0_1] : memref<2x64x128xf32, #tpu.memory_space<vmem>>, vector<1x64x128xf32>
    %1 = vector.shape_cast %0 : vector<1x64x128xf32> to vector<64x128xf32>
    %c1 = arith.constant 1 : index
    %c0_2 = arith.constant 0 : index
    %c0_3 = arith.constant 0 : index
    %2 = vector.load %arg4[%c1, %c0_2, %c0_3] : memref<2x64x128xf32, #tpu.memory_space<vmem>>, vector<1x64x128xf32>
    %3 = vector.shape_cast %2 : vector<1x64x128xf32> to vector<64x128xf32>
    %4 = vector.extract_strided_slice %1 {offsets = [0, 0], sizes = [16, 128], strides = [1, 1]} : vector<64x128xf32> to vector<16x128xf32>
    %5 = vector.extract_strided_slice %3 {offsets = [0, 0], sizes = [32, 128], strides = [1, 1]} : vector<64x128xf32> to vector<32x128xf32>
    %6 = vector.extract_strided_slice %1 {offsets = [32, 0], sizes = [32, 128], strides = [1, 1]} : vector<64x128xf32> to vector<32x128xf32>
    %7 = vector.extract_strided_slice %3 {offsets = [32, 0], sizes = [32, 128], strides = [1, 1]} : vector<64x128xf32> to vector<32x128xf32>
    %c0_4 = arith.constant 0 : index
    %c0_5 = arith.constant 0 : index
    %c0_6 = arith.constant 0 : index
    %8 = vector.load %arg5[%c0_4, %c0_5, %c0_6] : memref<2x1x128xf32, #tpu.memory_space<vmem>>, vector<1x1x128xf32>
    %9 = vector.shape_cast %8 : vector<1x1x128xf32> to vector<1x128xf32>
    %10 = vector.shape_cast %9 : vector<1x128xf32> to vector<1x128xf32>
    %11 = vector.broadcast %10 : vector<1x128xf32> to vector<2x128xf32>
    %c1_7 = arith.constant 1 : index
    %c0_8 = arith.constant 0 : index
    %c0_9 = arith.constant 0 : index
    %12 = vector.load %arg5[%c1_7, %c0_8, %c0_9] : memref<2x1x128xf32, #tpu.memory_space<vmem>>, vector<1x1x128xf32>
    %13 = vector.shape_cast %12 : vector<1x1x128xf32> to vector<1x128xf32>
    %14 = vector.shape_cast %13 : vector<1x128xf32> to vector<1x128xf32>
    %15 = vector.broadcast %14 : vector<1x128xf32> to vector<2x128xf32>
    %c0_10 = arith.constant 0 : index
    %c0_11 = arith.constant 0 : index
    %16 = vector.load %arg6[%c0_10, %c0_11] : memref<32x16xf32, #tpu.memory_space<vmem>>, vector<32x16xf32>
    %c0_12 = arith.constant 0 : index
    %c0_13 = arith.constant 0 : index
    %17 = vector.load %arg7[%c0_12, %c0_13] : memref<1x16xf32, #tpu.memory_space<vmem>>, vector<1x16xf32>
    %18 = vector.shape_cast %17 : vector<1x16xf32> to vector<1x16xf32>
    %19 = vector.broadcast %18 : vector<1x16xf32> to vector<4x16xf32>
    %20 = tpu.iota {dimensions = array<i32: 1>} : vector<2x128xi32>
    %c64_i32 = arith.constant 64 : i32
    %21 = vector.broadcast %c64_i32 : i32 to vector<2x128xi32>
    %22 = arith.cmpi sge, %20, %21 : vector<2x128xi32>
    %c96_i32 = arith.constant 96 : i32
    %23 = vector.broadcast %c96_i32 : i32 to vector<2x128xi32>
    %24 = arith.cmpi slt, %20, %23 : vector<2x128xi32>
    %25 = arith.andi %22, %24 : vector<2x128xi1>
    %cst = arith.constant 1.000000e+00 : f32
    %cst_14 = arith.constant 5.000000e-01 : f32
    %26 = vector.broadcast %cst : f32 to vector<2x128xf32>
    %27 = vector.broadcast %cst_14 : f32 to vector<2x128xf32>
    %28 = arith.select %25, %26, %27 : vector<2x128xi1>, vector<2x128xf32>
    %cst_15 = arith.constant 0.000000e+00 : f32
    %cst_16 = arith.constant 5.000000e-01 : f32
    %29 = vector.broadcast %cst_15 : f32 to vector<2x128xf32>
    %30 = vector.broadcast %cst_16 : f32 to vector<2x128xf32>
    %31 = arith.select %25, %29, %30 : vector<2x128xi1>, vector<2x128xf32>
    %c0_17 = arith.constant 0 : index
    %c0_18 = arith.constant 0 : index
    %c0_19 = arith.constant 0 : index
    %32 = vector.load %arg2[%c0_17, %c0_18, %c0_19] : memref<2x2x32xf32, #tpu.memory_space<vmem>>, vector<1x2x32xf32>
    %33 = vector.shape_cast %32 : vector<1x2x32xf32> to vector<2x32xf32>
    %c1_20 = arith.constant 1 : index
    %c0_21 = arith.constant 0 : index
    %c0_22 = arith.constant 0 : index
    %34 = vector.load %arg2[%c1_20, %c0_21, %c0_22] : memref<2x2x32xf32, #tpu.memory_space<vmem>>, vector<1x2x32xf32>
    %35 = vector.shape_cast %34 : vector<1x2x32xf32> to vector<2x32xf32>
    %c0_23 = arith.constant 0 : index
    %c0_24 = arith.constant 0 : index
    %c0_25 = arith.constant 0 : index
    %36 = vector.load %arg3[%c0_23, %c0_24, %c0_25] : memref<2x2x32xf32, #tpu.memory_space<vmem>>, vector<1x2x32xf32>
    %37 = vector.shape_cast %36 : vector<1x2x32xf32> to vector<2x32xf32>
    %c1_26 = arith.constant 1 : index
    %c0_27 = arith.constant 0 : index
    %c0_28 = arith.constant 0 : index
    %38 = vector.load %arg3[%c1_26, %c0_27, %c0_28] : memref<2x2x32xf32, #tpu.memory_space<vmem>>, vector<1x2x32xf32>
    %39 = vector.shape_cast %38 : vector<1x2x32xf32> to vector<2x32xf32>
    %c0_29 = arith.constant 0 : index
    %c0_30 = arith.constant 0 : index
    %c0_31 = arith.constant 0 : index
    %40 = vector.load %arg1[%c0_29, %c0_30, %c0_31] : memref<8x2x16xf32, #tpu.memory_space<vmem>>, vector<8x2x16xf32>
    %41 = vector.shape_cast %40 : vector<8x2x16xf32> to vector<16x16xf32>
    %cst_32 = arith.constant dense<0.000000e+00> : vector<16x128xf32>
    %42 = tpu.matmul %41, %4, %cst_32 {dimension_numbers = #tpu.dot_dimension_numbers<[1], [0], [0], [1], [0, 0, 1, 1], [], []>} : vector<16x16xf32>, vector<16x128xf32>, vector<16x128xf32> -> vector<16x128xf32>
    %43 = vector.shape_cast %42 : vector<16x128xf32> to vector<8x2x128xf32>
    %44 = vector.extract_strided_slice %43 {offsets = [0, 0, 0], sizes = [1, 2, 128], strides = [1, 1, 1]} : vector<8x2x128xf32> to vector<1x2x128xf32>
    %45 = vector.shape_cast %44 : vector<1x2x128xf32> to vector<2x128xf32>
    %cst_33 = arith.constant dense<0.000000e+00> : vector<2x128xf32>
    %46 = tpu.matmul %33, %6, %cst_33 {dimension_numbers = #tpu.dot_dimension_numbers<[1], [0], [0], [1], [0, 0, 1, 1], [], []>} : vector<2x32xf32>, vector<32x128xf32>, vector<2x128xf32> -> vector<2x128xf32>
    %47 = arith.addf %45, %46 : vector<2x128xf32>
    %48 = arith.addf %47, %11 : vector<2x128xf32>
    %49 = arith.mulf %48, %28 : vector<2x128xf32>
    %50 = math.tanh %49 : vector<2x128xf32>
    %51 = arith.mulf %50, %28 : vector<2x128xf32>
    %52 = arith.addf %51, %31 : vector<2x128xf32>
    %53 = vector.extract_strided_slice %52 {offsets = [0, 0], sizes = [2, 32], strides = [1, 1]} : vector<2x128xf32> to vector<2x32xf32>
    %54 = vector.extract_strided_slice %52 {offsets = [0, 32], sizes = [2, 32], strides = [1, 1]} : vector<2x128xf32> to vector<2x32xf32>
    %55 = vector.extract_strided_slice %52 {offsets = [0, 64], sizes = [2, 32], strides = [1, 1]} : vector<2x128xf32> to vector<2x32xf32>
    %56 = vector.extract_strided_slice %52 {offsets = [0, 96], sizes = [2, 32], strides = [1, 1]} : vector<2x128xf32> to vector<2x32xf32>
    %57 = arith.mulf %54, %37 : vector<2x32xf32>
    %58 = arith.mulf %53, %55 : vector<2x32xf32>
    %59 = arith.addf %57, %58 : vector<2x32xf32>
    %60 = math.tanh %59 : vector<2x32xf32>
    %61 = arith.mulf %56, %60 : vector<2x32xf32>
    %cst_34 = arith.constant dense<0.000000e+00> : vector<2x128xf32>
    %62 = tpu.matmul %61, %5, %cst_34 {dimension_numbers = #tpu.dot_dimension_numbers<[1], [0], [0], [1], [0, 0, 1, 1], [], []>} : vector<2x32xf32>, vector<32x128xf32>, vector<2x128xf32> -> vector<2x128xf32>
    %cst_35 = arith.constant dense<0.000000e+00> : vector<2x128xf32>
    %63 = tpu.matmul %35, %7, %cst_35 {dimension_numbers = #tpu.dot_dimension_numbers<[1], [0], [0], [1], [0, 0, 1, 1], [], []>} : vector<2x32xf32>, vector<32x128xf32>, vector<2x128xf32> -> vector<2x128xf32>
    %64 = arith.addf %62, %63 : vector<2x128xf32>
    %65 = arith.addf %64, %15 : vector<2x128xf32>
    %66 = arith.mulf %65, %28 : vector<2x128xf32>
    %67 = math.tanh %66 : vector<2x128xf32>
    %68 = arith.mulf %67, %28 : vector<2x128xf32>
    %69 = arith.addf %68, %31 : vector<2x128xf32>
    %70 = vector.extract_strided_slice %69 {offsets = [0, 0], sizes = [2, 32], strides = [1, 1]} : vector<2x128xf32> to vector<2x32xf32>
    %71 = vector.extract_strided_slice %69 {offsets = [0, 32], sizes = [2, 32], strides = [1, 1]} : vector<2x128xf32> to vector<2x32xf32>
    %72 = vector.extract_strided_slice %69 {offsets = [0, 64], sizes = [2, 32], strides = [1, 1]} : vector<2x128xf32> to vector<2x32xf32>
    %73 = vector.extract_strided_slice %69 {offsets = [0, 96], sizes = [2, 32], strides = [1, 1]} : vector<2x128xf32> to vector<2x32xf32>
    %74 = arith.mulf %71, %39 : vector<2x32xf32>
    %75 = arith.mulf %70, %72 : vector<2x32xf32>
    %76 = arith.addf %74, %75 : vector<2x32xf32>
    %77 = math.tanh %76 : vector<2x32xf32>
    %78 = arith.mulf %73, %77 : vector<2x32xf32>
    %79 = vector.extract_strided_slice %43 {offsets = [1, 0, 0], sizes = [1, 2, 128], strides = [1, 1, 1]} : vector<8x2x128xf32> to vector<1x2x128xf32>
    %80 = vector.shape_cast %79 : vector<1x2x128xf32> to vector<2x128xf32>
    %cst_36 = arith.constant dense<0.000000e+00> : vector<2x128xf32>
    %81 = tpu.matmul %61, %6, %cst_36 {dimension_numbers = #tpu.dot_dimension_numbers<[1], [0], [0], [1], [0, 0, 1, 1], [], []>} : vector<2x32xf32>, vector<32x128xf32>, vector<2x128xf32> -> vector<2x128xf32>
    %82 = arith.addf %80, %81 : vector<2x128xf32>
    %83 = arith.addf %82, %11 : vector<2x128xf32>
    %84 = arith.mulf %83, %28 : vector<2x128xf32>
    %85 = math.tanh %84 : vector<2x128xf32>
    %86 = arith.mulf %85, %28 : vector<2x128xf32>
    %87 = arith.addf %86, %31 : vector<2x128xf32>
    %88 = vector.extract_strided_slice %87 {offsets = [0, 0], sizes = [2, 32], strides = [1, 1]} : vector<2x128xf32> to vector<2x32xf32>
    %89 = vector.extract_strided_slice %87 {offsets = [0, 32], sizes = [2, 32], strides = [1, 1]} : vector<2x128xf32> to vector<2x32xf32>
    %90 = vector.extract_strided_slice %87 {offsets = [0, 64], sizes = [2, 32], strides = [1, 1]} : vector<2x128xf32> to vector<2x32xf32>
    %91 = vector.extract_strided_slice %87 {offsets = [0, 96], sizes = [2, 32], strides = [1, 1]} : vector<2x128xf32> to vector<2x32xf32>
    %92 = arith.mulf %89, %59 : vector<2x32xf32>
    %93 = arith.mulf %88, %90 : vector<2x32xf32>
    %94 = arith.addf %92, %93 : vector<2x32xf32>
    %95 = math.tanh %94 : vector<2x32xf32>
    %96 = arith.mulf %91, %95 : vector<2x32xf32>
    %cst_37 = arith.constant dense<0.000000e+00> : vector<2x128xf32>
    %97 = tpu.matmul %96, %5, %cst_37 {dimension_numbers = #tpu.dot_dimension_numbers<[1], [0], [0], [1], [0, 0, 1, 1], [], []>} : vector<2x32xf32>, vector<32x128xf32>, vector<2x128xf32> -> vector<2x128xf32>
    %cst_38 = arith.constant dense<0.000000e+00> : vector<2x128xf32>
    %98 = tpu.matmul %78, %7, %cst_38 {dimension_numbers = #tpu.dot_dimension_numbers<[1], [0], [0], [1], [0, 0, 1, 1], [], []>} : vector<2x32xf32>, vector<32x128xf32>, vector<2x128xf32> -> vector<2x128xf32>
    %99 = arith.addf %97, %98 : vector<2x128xf32>
    %100 = arith.addf %99, %15 : vector<2x128xf32>
    %101 = arith.mulf %100, %28 : vector<2x128xf32>
    %102 = math.tanh %101 : vector<2x128xf32>
    %103 = arith.mulf %102, %28 : vector<2x128xf32>
    %104 = arith.addf %103, %31 : vector<2x128xf32>
    %105 = vector.extract_strided_slice %104 {offsets = [0, 0], sizes = [2, 32], strides = [1, 1]} : vector<2x128xf32> to vector<2x32xf32>
    %106 = vector.extract_strided_slice %104 {offsets = [0, 32], sizes = [2, 32], strides = [1, 1]} : vector<2x128xf32> to vector<2x32xf32>
    %107 = vector.extract_strided_slice %104 {offsets = [0, 64], sizes = [2, 32], strides = [1, 1]} : vector<2x128xf32> to vector<2x32xf32>
    %108 = vector.extract_strided_slice %104 {offsets = [0, 96], sizes = [2, 32], strides = [1, 1]} : vector<2x128xf32> to vector<2x32xf32>
    %109 = arith.mulf %106, %76 : vector<2x32xf32>
    %110 = arith.mulf %105, %107 : vector<2x32xf32>
    %111 = arith.addf %109, %110 : vector<2x32xf32>
    %112 = math.tanh %111 : vector<2x32xf32>
    %113 = arith.mulf %108, %112 : vector<2x32xf32>
    %114 = vector.extract_strided_slice %43 {offsets = [2, 0, 0], sizes = [1, 2, 128], strides = [1, 1, 1]} : vector<8x2x128xf32> to vector<1x2x128xf32>
    %115 = vector.shape_cast %114 : vector<1x2x128xf32> to vector<2x128xf32>
    %cst_39 = arith.constant dense<0.000000e+00> : vector<2x128xf32>
    %116 = tpu.matmul %96, %6, %cst_39 {dimension_numbers = #tpu.dot_dimension_numbers<[1], [0], [0], [1], [0, 0, 1, 1], [], []>} : vector<2x32xf32>, vector<32x128xf32>, vector<2x128xf32> -> vector<2x128xf32>
    %117 = arith.addf %115, %116 : vector<2x128xf32>
    %118 = arith.addf %117, %11 : vector<2x128xf32>
    %119 = arith.mulf %118, %28 : vector<2x128xf32>
    %120 = math.tanh %119 : vector<2x128xf32>
    %121 = arith.mulf %120, %28 : vector<2x128xf32>
    %122 = arith.addf %121, %31 : vector<2x128xf32>
    %123 = vector.extract_strided_slice %122 {offsets = [0, 0], sizes = [2, 32], strides = [1, 1]} : vector<2x128xf32> to vector<2x32xf32>
    %124 = vector.extract_strided_slice %122 {offsets = [0, 32], sizes = [2, 32], strides = [1, 1]} : vector<2x128xf32> to vector<2x32xf32>
    %125 = vector.extract_strided_slice %122 {offsets = [0, 64], sizes = [2, 32], strides = [1, 1]} : vector<2x128xf32> to vector<2x32xf32>
    %126 = vector.extract_strided_slice %122 {offsets = [0, 96], sizes = [2, 32], strides = [1, 1]} : vector<2x128xf32> to vector<2x32xf32>
    %127 = arith.mulf %124, %94 : vector<2x32xf32>
    %128 = arith.mulf %123, %125 : vector<2x32xf32>
    %129 = arith.addf %127, %128 : vector<2x32xf32>
    %130 = math.tanh %129 : vector<2x32xf32>
    %131 = arith.mulf %126, %130 : vector<2x32xf32>
    %cst_40 = arith.constant dense<0.000000e+00> : vector<2x128xf32>
    %132 = tpu.matmul %131, %5, %cst_40 {dimension_numbers = #tpu.dot_dimension_numbers<[1], [0], [0], [1], [0, 0, 1, 1], [], []>} : vector<2x32xf32>, vector<32x128xf32>, vector<2x128xf32> -> vector<2x128xf32>
    %cst_41 = arith.constant dense<0.000000e+00> : vector<2x128xf32>
    %133 = tpu.matmul %113, %7, %cst_41 {dimension_numbers = #tpu.dot_dimension_numbers<[1], [0], [0], [1], [0, 0, 1, 1], [], []>} : vector<2x32xf32>, vector<32x128xf32>, vector<2x128xf32> -> vector<2x128xf32>
    %134 = arith.addf %132, %133 : vector<2x128xf32>
    %135 = arith.addf %134, %15 : vector<2x128xf32>
    %136 = arith.mulf %135, %28 : vector<2x128xf32>
    %137 = math.tanh %136 : vector<2x128xf32>
    %138 = arith.mulf %137, %28 : vector<2x128xf32>
    %139 = arith.addf %138, %31 : vector<2x128xf32>
    %140 = vector.extract_strided_slice %139 {offsets = [0, 0], sizes = [2, 32], strides = [1, 1]} : vector<2x128xf32> to vector<2x32xf32>
    %141 = vector.extract_strided_slice %139 {offsets = [0, 32], sizes = [2, 32], strides = [1, 1]} : vector<2x128xf32> to vector<2x32xf32>
    %142 = vector.extract_strided_slice %139 {offsets = [0, 64], sizes = [2, 32], strides = [1, 1]} : vector<2x128xf32> to vector<2x32xf32>
    %143 = vector.extract_strided_slice %139 {offsets = [0, 96], sizes = [2, 32], strides = [1, 1]} : vector<2x128xf32> to vector<2x32xf32>
    %144 = arith.mulf %141, %111 : vector<2x32xf32>
    %145 = arith.mulf %140, %142 : vector<2x32xf32>
    %146 = arith.addf %144, %145 : vector<2x32xf32>
    %147 = math.tanh %146 : vector<2x32xf32>
    %148 = arith.mulf %143, %147 : vector<2x32xf32>
    %149 = vector.extract_strided_slice %43 {offsets = [3, 0, 0], sizes = [1, 2, 128], strides = [1, 1, 1]} : vector<8x2x128xf32> to vector<1x2x128xf32>
    %150 = vector.shape_cast %149 : vector<1x2x128xf32> to vector<2x128xf32>
    %cst_42 = arith.constant dense<0.000000e+00> : vector<2x128xf32>
    %151 = tpu.matmul %131, %6, %cst_42 {dimension_numbers = #tpu.dot_dimension_numbers<[1], [0], [0], [1], [0, 0, 1, 1], [], []>} : vector<2x32xf32>, vector<32x128xf32>, vector<2x128xf32> -> vector<2x128xf32>
    %152 = arith.addf %150, %151 : vector<2x128xf32>
    %153 = arith.addf %152, %11 : vector<2x128xf32>
    %154 = arith.mulf %153, %28 : vector<2x128xf32>
    %155 = math.tanh %154 : vector<2x128xf32>
    %156 = arith.mulf %155, %28 : vector<2x128xf32>
    %157 = arith.addf %156, %31 : vector<2x128xf32>
    %158 = vector.extract_strided_slice %157 {offsets = [0, 0], sizes = [2, 32], strides = [1, 1]} : vector<2x128xf32> to vector<2x32xf32>
    %159 = vector.extract_strided_slice %157 {offsets = [0, 32], sizes = [2, 32], strides = [1, 1]} : vector<2x128xf32> to vector<2x32xf32>
    %160 = vector.extract_strided_slice %157 {offsets = [0, 64], sizes = [2, 32], strides = [1, 1]} : vector<2x128xf32> to vector<2x32xf32>
    %161 = vector.extract_strided_slice %157 {offsets = [0, 96], sizes = [2, 32], strides = [1, 1]} : vector<2x128xf32> to vector<2x32xf32>
    %162 = arith.mulf %159, %129 : vector<2x32xf32>
    %163 = arith.mulf %158, %160 : vector<2x32xf32>
    %164 = arith.addf %162, %163 : vector<2x32xf32>
    %165 = math.tanh %164 : vector<2x32xf32>
    %166 = arith.mulf %161, %165 : vector<2x32xf32>
    %cst_43 = arith.constant dense<0.000000e+00> : vector<2x128xf32>
    %167 = tpu.matmul %166, %5, %cst_43 {dimension_numbers = #tpu.dot_dimension_numbers<[1], [0], [0], [1], [0, 0, 1, 1], [], []>} : vector<2x32xf32>, vector<32x128xf32>, vector<2x128xf32> -> vector<2x128xf32>
    %cst_44 = arith.constant dense<0.000000e+00> : vector<2x128xf32>
    %168 = tpu.matmul %148, %7, %cst_44 {dimension_numbers = #tpu.dot_dimension_numbers<[1], [0], [0], [1], [0, 0, 1, 1], [], []>} : vector<2x32xf32>, vector<32x128xf32>, vector<2x128xf32> -> vector<2x128xf32>
    %169 = arith.addf %167, %168 : vector<2x128xf32>
    %170 = arith.addf %169, %15 : vector<2x128xf32>
    %171 = arith.mulf %170, %28 : vector<2x128xf32>
    %172 = math.tanh %171 : vector<2x128xf32>
    %173 = arith.mulf %172, %28 : vector<2x128xf32>
    %174 = arith.addf %173, %31 : vector<2x128xf32>
    %175 = vector.extract_strided_slice %174 {offsets = [0, 0], sizes = [2, 32], strides = [1, 1]} : vector<2x128xf32> to vector<2x32xf32>
    %176 = vector.extract_strided_slice %174 {offsets = [0, 32], sizes = [2, 32], strides = [1, 1]} : vector<2x128xf32> to vector<2x32xf32>
    %177 = vector.extract_strided_slice %174 {offsets = [0, 64], sizes = [2, 32], strides = [1, 1]} : vector<2x128xf32> to vector<2x32xf32>
    %178 = vector.extract_strided_slice %174 {offsets = [0, 96], sizes = [2, 32], strides = [1, 1]} : vector<2x128xf32> to vector<2x32xf32>
    %179 = arith.mulf %176, %146 : vector<2x32xf32>
    %180 = arith.mulf %175, %177 : vector<2x32xf32>
    %181 = arith.addf %179, %180 : vector<2x32xf32>
    %182 = math.tanh %181 : vector<2x32xf32>
    %183 = arith.mulf %178, %182 : vector<2x32xf32>
    %184 = vector.extract_strided_slice %43 {offsets = [4, 0, 0], sizes = [1, 2, 128], strides = [1, 1, 1]} : vector<8x2x128xf32> to vector<1x2x128xf32>
    %185 = vector.shape_cast %184 : vector<1x2x128xf32> to vector<2x128xf32>
    %cst_45 = arith.constant dense<0.000000e+00> : vector<2x128xf32>
    %186 = tpu.matmul %166, %6, %cst_45 {dimension_numbers = #tpu.dot_dimension_numbers<[1], [0], [0], [1], [0, 0, 1, 1], [], []>} : vector<2x32xf32>, vector<32x128xf32>, vector<2x128xf32> -> vector<2x128xf32>
    %187 = arith.addf %185, %186 : vector<2x128xf32>
    %188 = arith.addf %187, %11 : vector<2x128xf32>
    %189 = arith.mulf %188, %28 : vector<2x128xf32>
    %190 = math.tanh %189 : vector<2x128xf32>
    %191 = arith.mulf %190, %28 : vector<2x128xf32>
    %192 = arith.addf %191, %31 : vector<2x128xf32>
    %193 = vector.extract_strided_slice %192 {offsets = [0, 0], sizes = [2, 32], strides = [1, 1]} : vector<2x128xf32> to vector<2x32xf32>
    %194 = vector.extract_strided_slice %192 {offsets = [0, 32], sizes = [2, 32], strides = [1, 1]} : vector<2x128xf32> to vector<2x32xf32>
    %195 = vector.extract_strided_slice %192 {offsets = [0, 64], sizes = [2, 32], strides = [1, 1]} : vector<2x128xf32> to vector<2x32xf32>
    %196 = vector.extract_strided_slice %192 {offsets = [0, 96], sizes = [2, 32], strides = [1, 1]} : vector<2x128xf32> to vector<2x32xf32>
    %197 = arith.mulf %194, %164 : vector<2x32xf32>
    %198 = arith.mulf %193, %195 : vector<2x32xf32>
    %199 = arith.addf %197, %198 : vector<2x32xf32>
    %200 = math.tanh %199 : vector<2x32xf32>
    %201 = arith.mulf %196, %200 : vector<2x32xf32>
    %cst_46 = arith.constant dense<0.000000e+00> : vector<2x128xf32>
    %202 = tpu.matmul %201, %5, %cst_46 {dimension_numbers = #tpu.dot_dimension_numbers<[1], [0], [0], [1], [0, 0, 1, 1], [], []>} : vector<2x32xf32>, vector<32x128xf32>, vector<2x128xf32> -> vector<2x128xf32>
    %cst_47 = arith.constant dense<0.000000e+00> : vector<2x128xf32>
    %203 = tpu.matmul %183, %7, %cst_47 {dimension_numbers = #tpu.dot_dimension_numbers<[1], [0], [0], [1], [0, 0, 1, 1], [], []>} : vector<2x32xf32>, vector<32x128xf32>, vector<2x128xf32> -> vector<2x128xf32>
    %204 = arith.addf %202, %203 : vector<2x128xf32>
    %205 = arith.addf %204, %15 : vector<2x128xf32>
    %206 = arith.mulf %205, %28 : vector<2x128xf32>
    %207 = math.tanh %206 : vector<2x128xf32>
    %208 = arith.mulf %207, %28 : vector<2x128xf32>
    %209 = arith.addf %208, %31 : vector<2x128xf32>
    %210 = vector.extract_strided_slice %209 {offsets = [0, 0], sizes = [2, 32], strides = [1, 1]} : vector<2x128xf32> to vector<2x32xf32>
    %211 = vector.extract_strided_slice %209 {offsets = [0, 32], sizes = [2, 32], strides = [1, 1]} : vector<2x128xf32> to vector<2x32xf32>
    %212 = vector.extract_strided_slice %209 {offsets = [0, 64], sizes = [2, 32], strides = [1, 1]} : vector<2x128xf32> to vector<2x32xf32>
    %213 = vector.extract_strided_slice %209 {offsets = [0, 96], sizes = [2, 32], strides = [1, 1]} : vector<2x128xf32> to vector<2x32xf32>
    %214 = arith.mulf %211, %181 : vector<2x32xf32>
    %215 = arith.mulf %210, %212 : vector<2x32xf32>
    %216 = arith.addf %214, %215 : vector<2x32xf32>
    %217 = math.tanh %216 : vector<2x32xf32>
    %218 = arith.mulf %213, %217 : vector<2x32xf32>
    %219 = vector.extract_strided_slice %43 {offsets = [5, 0, 0], sizes = [1, 2, 128], strides = [1, 1, 1]} : vector<8x2x128xf32> to vector<1x2x128xf32>
    %220 = vector.shape_cast %219 : vector<1x2x128xf32> to vector<2x128xf32>
    %cst_48 = arith.constant dense<0.000000e+00> : vector<2x128xf32>
    %221 = tpu.matmul %201, %6, %cst_48 {dimension_numbers = #tpu.dot_dimension_numbers<[1], [0], [0], [1], [0, 0, 1, 1], [], []>} : vector<2x32xf32>, vector<32x128xf32>, vector<2x128xf32> -> vector<2x128xf32>
    %222 = arith.addf %220, %221 : vector<2x128xf32>
    %223 = arith.addf %222, %11 : vector<2x128xf32>
    %224 = arith.mulf %223, %28 : vector<2x128xf32>
    %225 = math.tanh %224 : vector<2x128xf32>
    %226 = arith.mulf %225, %28 : vector<2x128xf32>
    %227 = arith.addf %226, %31 : vector<2x128xf32>
    %228 = vector.extract_strided_slice %227 {offsets = [0, 0], sizes = [2, 32], strides = [1, 1]} : vector<2x128xf32> to vector<2x32xf32>
    %229 = vector.extract_strided_slice %227 {offsets = [0, 32], sizes = [2, 32], strides = [1, 1]} : vector<2x128xf32> to vector<2x32xf32>
    %230 = vector.extract_strided_slice %227 {offsets = [0, 64], sizes = [2, 32], strides = [1, 1]} : vector<2x128xf32> to vector<2x32xf32>
    %231 = vector.extract_strided_slice %227 {offsets = [0, 96], sizes = [2, 32], strides = [1, 1]} : vector<2x128xf32> to vector<2x32xf32>
    %232 = arith.mulf %229, %199 : vector<2x32xf32>
    %233 = arith.mulf %228, %230 : vector<2x32xf32>
    %234 = arith.addf %232, %233 : vector<2x32xf32>
    %235 = math.tanh %234 : vector<2x32xf32>
    %236 = arith.mulf %231, %235 : vector<2x32xf32>
    %cst_49 = arith.constant dense<0.000000e+00> : vector<2x128xf32>
    %237 = tpu.matmul %236, %5, %cst_49 {dimension_numbers = #tpu.dot_dimension_numbers<[1], [0], [0], [1], [0, 0, 1, 1], [], []>} : vector<2x32xf32>, vector<32x128xf32>, vector<2x128xf32> -> vector<2x128xf32>
    %cst_50 = arith.constant dense<0.000000e+00> : vector<2x128xf32>
    %238 = tpu.matmul %218, %7, %cst_50 {dimension_numbers = #tpu.dot_dimension_numbers<[1], [0], [0], [1], [0, 0, 1, 1], [], []>} : vector<2x32xf32>, vector<32x128xf32>, vector<2x128xf32> -> vector<2x128xf32>
    %239 = arith.addf %237, %238 : vector<2x128xf32>
    %240 = arith.addf %239, %15 : vector<2x128xf32>
    %241 = arith.mulf %240, %28 : vector<2x128xf32>
    %242 = math.tanh %241 : vector<2x128xf32>
    %243 = arith.mulf %242, %28 : vector<2x128xf32>
    %244 = arith.addf %243, %31 : vector<2x128xf32>
    %245 = vector.extract_strided_slice %244 {offsets = [0, 0], sizes = [2, 32], strides = [1, 1]} : vector<2x128xf32> to vector<2x32xf32>
    %246 = vector.extract_strided_slice %244 {offsets = [0, 32], sizes = [2, 32], strides = [1, 1]} : vector<2x128xf32> to vector<2x32xf32>
    %247 = vector.extract_strided_slice %244 {offsets = [0, 64], sizes = [2, 32], strides = [1, 1]} : vector<2x128xf32> to vector<2x32xf32>
    %248 = vector.extract_strided_slice %244 {offsets = [0, 96], sizes = [2, 32], strides = [1, 1]} : vector<2x128xf32> to vector<2x32xf32>
    %249 = arith.mulf %246, %216 : vector<2x32xf32>
    %250 = arith.mulf %245, %247 : vector<2x32xf32>
    %251 = arith.addf %249, %250 : vector<2x32xf32>
    %252 = math.tanh %251 : vector<2x32xf32>
    %253 = arith.mulf %248, %252 : vector<2x32xf32>
    %254 = vector.extract_strided_slice %43 {offsets = [6, 0, 0], sizes = [1, 2, 128], strides = [1, 1, 1]} : vector<8x2x128xf32> to vector<1x2x128xf32>
    %255 = vector.shape_cast %254 : vector<1x2x128xf32> to vector<2x128xf32>
    %cst_51 = arith.constant dense<0.000000e+00> : vector<2x128xf32>
    %256 = tpu.matmul %236, %6, %cst_51 {dimension_numbers = #tpu.dot_dimension_numbers<[1], [0], [0], [1], [0, 0, 1, 1], [], []>} : vector<2x32xf32>, vector<32x128xf32>, vector<2x128xf32> -> vector<2x128xf32>
    %257 = arith.addf %255, %256 : vector<2x128xf32>
    %258 = arith.addf %257, %11 : vector<2x128xf32>
    %259 = arith.mulf %258, %28 : vector<2x128xf32>
    %260 = math.tanh %259 : vector<2x128xf32>
    %261 = arith.mulf %260, %28 : vector<2x128xf32>
    %262 = arith.addf %261, %31 : vector<2x128xf32>
    %263 = vector.extract_strided_slice %262 {offsets = [0, 0], sizes = [2, 32], strides = [1, 1]} : vector<2x128xf32> to vector<2x32xf32>
    %264 = vector.extract_strided_slice %262 {offsets = [0, 32], sizes = [2, 32], strides = [1, 1]} : vector<2x128xf32> to vector<2x32xf32>
    %265 = vector.extract_strided_slice %262 {offsets = [0, 64], sizes = [2, 32], strides = [1, 1]} : vector<2x128xf32> to vector<2x32xf32>
    %266 = vector.extract_strided_slice %262 {offsets = [0, 96], sizes = [2, 32], strides = [1, 1]} : vector<2x128xf32> to vector<2x32xf32>
    %267 = arith.mulf %264, %234 : vector<2x32xf32>
    %268 = arith.mulf %263, %265 : vector<2x32xf32>
    %269 = arith.addf %267, %268 : vector<2x32xf32>
    %270 = math.tanh %269 : vector<2x32xf32>
    %271 = arith.mulf %266, %270 : vector<2x32xf32>
    %cst_52 = arith.constant dense<0.000000e+00> : vector<2x128xf32>
    %272 = tpu.matmul %271, %5, %cst_52 {dimension_numbers = #tpu.dot_dimension_numbers<[1], [0], [0], [1], [0, 0, 1, 1], [], []>} : vector<2x32xf32>, vector<32x128xf32>, vector<2x128xf32> -> vector<2x128xf32>
    %cst_53 = arith.constant dense<0.000000e+00> : vector<2x128xf32>
    %273 = tpu.matmul %253, %7, %cst_53 {dimension_numbers = #tpu.dot_dimension_numbers<[1], [0], [0], [1], [0, 0, 1, 1], [], []>} : vector<2x32xf32>, vector<32x128xf32>, vector<2x128xf32> -> vector<2x128xf32>
    %274 = arith.addf %272, %273 : vector<2x128xf32>
    %275 = arith.addf %274, %15 : vector<2x128xf32>
    %276 = arith.mulf %275, %28 : vector<2x128xf32>
    %277 = math.tanh %276 : vector<2x128xf32>
    %278 = arith.mulf %277, %28 : vector<2x128xf32>
    %279 = arith.addf %278, %31 : vector<2x128xf32>
    %280 = vector.extract_strided_slice %279 {offsets = [0, 0], sizes = [2, 32], strides = [1, 1]} : vector<2x128xf32> to vector<2x32xf32>
    %281 = vector.extract_strided_slice %279 {offsets = [0, 32], sizes = [2, 32], strides = [1, 1]} : vector<2x128xf32> to vector<2x32xf32>
    %282 = vector.extract_strided_slice %279 {offsets = [0, 64], sizes = [2, 32], strides = [1, 1]} : vector<2x128xf32> to vector<2x32xf32>
    %283 = vector.extract_strided_slice %279 {offsets = [0, 96], sizes = [2, 32], strides = [1, 1]} : vector<2x128xf32> to vector<2x32xf32>
    %284 = arith.mulf %281, %251 : vector<2x32xf32>
    %285 = arith.mulf %280, %282 : vector<2x32xf32>
    %286 = arith.addf %284, %285 : vector<2x32xf32>
    %287 = math.tanh %286 : vector<2x32xf32>
    %288 = arith.mulf %283, %287 : vector<2x32xf32>
    %289 = vector.extract_strided_slice %43 {offsets = [7, 0, 0], sizes = [1, 2, 128], strides = [1, 1, 1]} : vector<8x2x128xf32> to vector<1x2x128xf32>
    %290 = vector.shape_cast %289 : vector<1x2x128xf32> to vector<2x128xf32>
    %cst_54 = arith.constant dense<0.000000e+00> : vector<2x128xf32>
    %291 = tpu.matmul %271, %6, %cst_54 {dimension_numbers = #tpu.dot_dimension_numbers<[1], [0], [0], [1], [0, 0, 1, 1], [], []>} : vector<2x32xf32>, vector<32x128xf32>, vector<2x128xf32> -> vector<2x128xf32>
    %292 = arith.addf %290, %291 : vector<2x128xf32>
    %293 = arith.addf %292, %11 : vector<2x128xf32>
    %294 = arith.mulf %293, %28 : vector<2x128xf32>
    %295 = math.tanh %294 : vector<2x128xf32>
    %296 = arith.mulf %295, %28 : vector<2x128xf32>
    %297 = arith.addf %296, %31 : vector<2x128xf32>
    %298 = vector.extract_strided_slice %297 {offsets = [0, 0], sizes = [2, 32], strides = [1, 1]} : vector<2x128xf32> to vector<2x32xf32>
    %299 = vector.extract_strided_slice %297 {offsets = [0, 32], sizes = [2, 32], strides = [1, 1]} : vector<2x128xf32> to vector<2x32xf32>
    %300 = vector.extract_strided_slice %297 {offsets = [0, 64], sizes = [2, 32], strides = [1, 1]} : vector<2x128xf32> to vector<2x32xf32>
    %301 = vector.extract_strided_slice %297 {offsets = [0, 96], sizes = [2, 32], strides = [1, 1]} : vector<2x128xf32> to vector<2x32xf32>
    %302 = arith.mulf %299, %269 : vector<2x32xf32>
    %303 = arith.mulf %298, %300 : vector<2x32xf32>
    %304 = arith.addf %302, %303 : vector<2x32xf32>
    %305 = math.tanh %304 : vector<2x32xf32>
    %306 = arith.mulf %301, %305 : vector<2x32xf32>
    %cst_55 = arith.constant dense<0.000000e+00> : vector<2x128xf32>
    %307 = tpu.matmul %306, %5, %cst_55 {dimension_numbers = #tpu.dot_dimension_numbers<[1], [0], [0], [1], [0, 0, 1, 1], [], []>} : vector<2x32xf32>, vector<32x128xf32>, vector<2x128xf32> -> vector<2x128xf32>
    %cst_56 = arith.constant dense<0.000000e+00> : vector<2x128xf32>
    %308 = tpu.matmul %288, %7, %cst_56 {dimension_numbers = #tpu.dot_dimension_numbers<[1], [0], [0], [1], [0, 0, 1, 1], [], []>} : vector<2x32xf32>, vector<32x128xf32>, vector<2x128xf32> -> vector<2x128xf32>
    %309 = arith.addf %307, %308 : vector<2x128xf32>
    %310 = arith.addf %309, %15 : vector<2x128xf32>
    %311 = arith.mulf %310, %28 : vector<2x128xf32>
    %312 = math.tanh %311 : vector<2x128xf32>
    %313 = arith.mulf %312, %28 : vector<2x128xf32>
    %314 = arith.addf %313, %31 : vector<2x128xf32>
    %315 = vector.extract_strided_slice %314 {offsets = [0, 0], sizes = [2, 32], strides = [1, 1]} : vector<2x128xf32> to vector<2x32xf32>
    %316 = vector.extract_strided_slice %314 {offsets = [0, 32], sizes = [2, 32], strides = [1, 1]} : vector<2x128xf32> to vector<2x32xf32>
    %317 = vector.extract_strided_slice %314 {offsets = [0, 64], sizes = [2, 32], strides = [1, 1]} : vector<2x128xf32> to vector<2x32xf32>
    %318 = vector.extract_strided_slice %314 {offsets = [0, 96], sizes = [2, 32], strides = [1, 1]} : vector<2x128xf32> to vector<2x32xf32>
    %319 = arith.mulf %316, %286 : vector<2x32xf32>
    %320 = arith.mulf %315, %317 : vector<2x32xf32>
    %321 = arith.addf %319, %320 : vector<2x32xf32>
    %322 = math.tanh %321 : vector<2x32xf32>
    %323 = arith.mulf %318, %322 : vector<2x32xf32>
    %324 = tpu.concatenate %306, %323 in 0 : vector<2x32xf32>, vector<2x32xf32> -> vector<4x32xf32>
    %cst_57 = arith.constant dense<0.000000e+00> : vector<4x16xf32>
    %325 = tpu.matmul %324, %16, %cst_57 {dimension_numbers = #tpu.dot_dimension_numbers<[1], [0], [0], [1], [0, 0, 1, 1], [], []>} : vector<4x32xf32>, vector<32x16xf32>, vector<4x16xf32> -> vector<4x16xf32>
    %326 = arith.addf %325, %19 : vector<4x16xf32>
    %327 = vector.extract_strided_slice %326 {offsets = [0, 0], sizes = [2, 16], strides = [1, 1]} : vector<4x16xf32> to vector<2x16xf32>
    %cst_58 = arith.constant dense<0.000000e+00> : vector<2x128xf32>
    %328 = tpu.matmul %327, %4, %cst_58 {dimension_numbers = #tpu.dot_dimension_numbers<[1], [0], [0], [1], [0, 0, 1, 1], [], []>} : vector<2x16xf32>, vector<16x128xf32>, vector<2x128xf32> -> vector<2x128xf32>
    %cst_59 = arith.constant dense<0.000000e+00> : vector<2x128xf32>
    %329 = tpu.matmul %306, %6, %cst_59 {dimension_numbers = #tpu.dot_dimension_numbers<[1], [0], [0], [1], [0, 0, 1, 1], [], []>} : vector<2x32xf32>, vector<32x128xf32>, vector<2x128xf32> -> vector<2x128xf32>
    %330 = arith.addf %328, %329 : vector<2x128xf32>
    %331 = arith.addf %330, %11 : vector<2x128xf32>
    %332 = arith.mulf %331, %28 : vector<2x128xf32>
    %333 = math.tanh %332 : vector<2x128xf32>
    %334 = arith.mulf %333, %28 : vector<2x128xf32>
    %335 = arith.addf %334, %31 : vector<2x128xf32>
    %336 = vector.extract_strided_slice %335 {offsets = [0, 0], sizes = [2, 32], strides = [1, 1]} : vector<2x128xf32> to vector<2x32xf32>
    %337 = vector.extract_strided_slice %335 {offsets = [0, 32], sizes = [2, 32], strides = [1, 1]} : vector<2x128xf32> to vector<2x32xf32>
    %338 = vector.extract_strided_slice %335 {offsets = [0, 64], sizes = [2, 32], strides = [1, 1]} : vector<2x128xf32> to vector<2x32xf32>
    %339 = vector.extract_strided_slice %335 {offsets = [0, 96], sizes = [2, 32], strides = [1, 1]} : vector<2x128xf32> to vector<2x32xf32>
    %340 = arith.mulf %337, %304 : vector<2x32xf32>
    %341 = arith.mulf %336, %338 : vector<2x32xf32>
    %342 = arith.addf %340, %341 : vector<2x32xf32>
    %343 = math.tanh %342 : vector<2x32xf32>
    %344 = arith.mulf %339, %343 : vector<2x32xf32>
    %cst_60 = arith.constant dense<0.000000e+00> : vector<2x128xf32>
    %345 = tpu.matmul %344, %5, %cst_60 {dimension_numbers = #tpu.dot_dimension_numbers<[1], [0], [0], [1], [0, 0, 1, 1], [], []>} : vector<2x32xf32>, vector<32x128xf32>, vector<2x128xf32> -> vector<2x128xf32>
    %cst_61 = arith.constant dense<0.000000e+00> : vector<2x128xf32>
    %346 = tpu.matmul %323, %7, %cst_61 {dimension_numbers = #tpu.dot_dimension_numbers<[1], [0], [0], [1], [0, 0, 1, 1], [], []>} : vector<2x32xf32>, vector<32x128xf32>, vector<2x128xf32> -> vector<2x128xf32>
    %347 = arith.addf %345, %346 : vector<2x128xf32>
    %348 = arith.addf %347, %15 : vector<2x128xf32>
    %349 = arith.mulf %348, %28 : vector<2x128xf32>
    %350 = math.tanh %349 : vector<2x128xf32>
    %351 = arith.mulf %350, %28 : vector<2x128xf32>
    %352 = arith.addf %351, %31 : vector<2x128xf32>
    %353 = vector.extract_strided_slice %352 {offsets = [0, 0], sizes = [2, 32], strides = [1, 1]} : vector<2x128xf32> to vector<2x32xf32>
    %354 = vector.extract_strided_slice %352 {offsets = [0, 32], sizes = [2, 32], strides = [1, 1]} : vector<2x128xf32> to vector<2x32xf32>
    %355 = vector.extract_strided_slice %352 {offsets = [0, 64], sizes = [2, 32], strides = [1, 1]} : vector<2x128xf32> to vector<2x32xf32>
    %356 = vector.extract_strided_slice %352 {offsets = [0, 96], sizes = [2, 32], strides = [1, 1]} : vector<2x128xf32> to vector<2x32xf32>
    %357 = arith.mulf %354, %321 : vector<2x32xf32>
    %358 = arith.mulf %353, %355 : vector<2x32xf32>
    %359 = arith.addf %357, %358 : vector<2x32xf32>
    %360 = math.tanh %359 : vector<2x32xf32>
    %361 = arith.mulf %356, %360 : vector<2x32xf32>
    %362 = vector.extract_strided_slice %326 {offsets = [2, 0], sizes = [2, 16], strides = [1, 1]} : vector<4x16xf32> to vector<2x16xf32>
    %cst_62 = arith.constant dense<0.000000e+00> : vector<2x128xf32>
    %363 = tpu.matmul %362, %4, %cst_62 {dimension_numbers = #tpu.dot_dimension_numbers<[1], [0], [0], [1], [0, 0, 1, 1], [], []>} : vector<2x16xf32>, vector<16x128xf32>, vector<2x128xf32> -> vector<2x128xf32>
    %cst_63 = arith.constant dense<0.000000e+00> : vector<2x128xf32>
    %364 = tpu.matmul %344, %6, %cst_63 {dimension_numbers = #tpu.dot_dimension_numbers<[1], [0], [0], [1], [0, 0, 1, 1], [], []>} : vector<2x32xf32>, vector<32x128xf32>, vector<2x128xf32> -> vector<2x128xf32>
    %365 = arith.addf %363, %364 : vector<2x128xf32>
    %366 = arith.addf %365, %11 : vector<2x128xf32>
    %367 = arith.mulf %366, %28 : vector<2x128xf32>
    %368 = math.tanh %367 : vector<2x128xf32>
    %369 = arith.mulf %368, %28 : vector<2x128xf32>
    %370 = arith.addf %369, %31 : vector<2x128xf32>
    %371 = vector.extract_strided_slice %370 {offsets = [0, 0], sizes = [2, 32], strides = [1, 1]} : vector<2x128xf32> to vector<2x32xf32>
    %372 = vector.extract_strided_slice %370 {offsets = [0, 32], sizes = [2, 32], strides = [1, 1]} : vector<2x128xf32> to vector<2x32xf32>
    %373 = vector.extract_strided_slice %370 {offsets = [0, 64], sizes = [2, 32], strides = [1, 1]} : vector<2x128xf32> to vector<2x32xf32>
    %374 = vector.extract_strided_slice %370 {offsets = [0, 96], sizes = [2, 32], strides = [1, 1]} : vector<2x128xf32> to vector<2x32xf32>
    %375 = arith.mulf %372, %342 : vector<2x32xf32>
    %376 = arith.mulf %371, %373 : vector<2x32xf32>
    %377 = arith.addf %375, %376 : vector<2x32xf32>
    %378 = math.tanh %377 : vector<2x32xf32>
    %379 = arith.mulf %374, %378 : vector<2x32xf32>
    %cst_64 = arith.constant dense<0.000000e+00> : vector<2x128xf32>
    %380 = tpu.matmul %379, %5, %cst_64 {dimension_numbers = #tpu.dot_dimension_numbers<[1], [0], [0], [1], [0, 0, 1, 1], [], []>} : vector<2x32xf32>, vector<32x128xf32>, vector<2x128xf32> -> vector<2x128xf32>
    %cst_65 = arith.constant dense<0.000000e+00> : vector<2x128xf32>
    %381 = tpu.matmul %361, %7, %cst_65 {dimension_numbers = #tpu.dot_dimension_numbers<[1], [0], [0], [1], [0, 0, 1, 1], [], []>} : vector<2x32xf32>, vector<32x128xf32>, vector<2x128xf32> -> vector<2x128xf32>
    %382 = arith.addf %380, %381 : vector<2x128xf32>
    %383 = arith.addf %382, %15 : vector<2x128xf32>
    %384 = arith.mulf %383, %28 : vector<2x128xf32>
    %385 = math.tanh %384 : vector<2x128xf32>
    %386 = arith.mulf %385, %28 : vector<2x128xf32>
    %387 = arith.addf %386, %31 : vector<2x128xf32>
    %388 = vector.extract_strided_slice %387 {offsets = [0, 0], sizes = [2, 32], strides = [1, 1]} : vector<2x128xf32> to vector<2x32xf32>
    %389 = vector.extract_strided_slice %387 {offsets = [0, 32], sizes = [2, 32], strides = [1, 1]} : vector<2x128xf32> to vector<2x32xf32>
    %390 = vector.extract_strided_slice %387 {offsets = [0, 64], sizes = [2, 32], strides = [1, 1]} : vector<2x128xf32> to vector<2x32xf32>
    %391 = vector.extract_strided_slice %387 {offsets = [0, 96], sizes = [2, 32], strides = [1, 1]} : vector<2x128xf32> to vector<2x32xf32>
    %392 = arith.mulf %389, %359 : vector<2x32xf32>
    %393 = arith.mulf %388, %390 : vector<2x32xf32>
    %394 = arith.addf %392, %393 : vector<2x32xf32>
    %395 = math.tanh %394 : vector<2x32xf32>
    %396 = arith.mulf %391, %395 : vector<2x32xf32>
    %397 = tpu.concatenate %379, %396 in 0 : vector<2x32xf32>, vector<2x32xf32> -> vector<4x32xf32>
    %cst_66 = arith.constant dense<0.000000e+00> : vector<4x16xf32>
    %398 = tpu.matmul %397, %16, %cst_66 {dimension_numbers = #tpu.dot_dimension_numbers<[1], [0], [0], [1], [0, 0, 1, 1], [], []>} : vector<4x32xf32>, vector<32x16xf32>, vector<4x16xf32> -> vector<4x16xf32>
    %399 = arith.addf %398, %19 : vector<4x16xf32>
    %400 = vector.extract_strided_slice %399 {offsets = [0, 0], sizes = [2, 16], strides = [1, 1]} : vector<4x16xf32> to vector<2x16xf32>
    %cst_67 = arith.constant dense<0.000000e+00> : vector<2x128xf32>
    %401 = tpu.matmul %400, %4, %cst_67 {dimension_numbers = #tpu.dot_dimension_numbers<[1], [0], [0], [1], [0, 0, 1, 1], [], []>} : vector<2x16xf32>, vector<16x128xf32>, vector<2x128xf32> -> vector<2x128xf32>
    %cst_68 = arith.constant dense<0.000000e+00> : vector<2x128xf32>
    %402 = tpu.matmul %379, %6, %cst_68 {dimension_numbers = #tpu.dot_dimension_numbers<[1], [0], [0], [1], [0, 0, 1, 1], [], []>} : vector<2x32xf32>, vector<32x128xf32>, vector<2x128xf32> -> vector<2x128xf32>
    %403 = arith.addf %401, %402 : vector<2x128xf32>
    %404 = arith.addf %403, %11 : vector<2x128xf32>
    %405 = arith.mulf %404, %28 : vector<2x128xf32>
    %406 = math.tanh %405 : vector<2x128xf32>
    %407 = arith.mulf %406, %28 : vector<2x128xf32>
    %408 = arith.addf %407, %31 : vector<2x128xf32>
    %409 = vector.extract_strided_slice %408 {offsets = [0, 0], sizes = [2, 32], strides = [1, 1]} : vector<2x128xf32> to vector<2x32xf32>
    %410 = vector.extract_strided_slice %408 {offsets = [0, 32], sizes = [2, 32], strides = [1, 1]} : vector<2x128xf32> to vector<2x32xf32>
    %411 = vector.extract_strided_slice %408 {offsets = [0, 64], sizes = [2, 32], strides = [1, 1]} : vector<2x128xf32> to vector<2x32xf32>
    %412 = vector.extract_strided_slice %408 {offsets = [0, 96], sizes = [2, 32], strides = [1, 1]} : vector<2x128xf32> to vector<2x32xf32>
    %413 = arith.mulf %410, %377 : vector<2x32xf32>
    %414 = arith.mulf %409, %411 : vector<2x32xf32>
    %415 = arith.addf %413, %414 : vector<2x32xf32>
    %416 = math.tanh %415 : vector<2x32xf32>
    %417 = arith.mulf %412, %416 : vector<2x32xf32>
    %cst_69 = arith.constant dense<0.000000e+00> : vector<2x128xf32>
    %418 = tpu.matmul %417, %5, %cst_69 {dimension_numbers = #tpu.dot_dimension_numbers<[1], [0], [0], [1], [0, 0, 1, 1], [], []>} : vector<2x32xf32>, vector<32x128xf32>, vector<2x128xf32> -> vector<2x128xf32>
    %cst_70 = arith.constant dense<0.000000e+00> : vector<2x128xf32>
    %419 = tpu.matmul %396, %7, %cst_70 {dimension_numbers = #tpu.dot_dimension_numbers<[1], [0], [0], [1], [0, 0, 1, 1], [], []>} : vector<2x32xf32>, vector<32x128xf32>, vector<2x128xf32> -> vector<2x128xf32>
    %420 = arith.addf %418, %419 : vector<2x128xf32>
    %421 = arith.addf %420, %15 : vector<2x128xf32>
    %422 = arith.mulf %421, %28 : vector<2x128xf32>
    %423 = math.tanh %422 : vector<2x128xf32>
    %424 = arith.mulf %423, %28 : vector<2x128xf32>
    %425 = arith.addf %424, %31 : vector<2x128xf32>
    %426 = vector.extract_strided_slice %425 {offsets = [0, 0], sizes = [2, 32], strides = [1, 1]} : vector<2x128xf32> to vector<2x32xf32>
    %427 = vector.extract_strided_slice %425 {offsets = [0, 32], sizes = [2, 32], strides = [1, 1]} : vector<2x128xf32> to vector<2x32xf32>
    %428 = vector.extract_strided_slice %425 {offsets = [0, 64], sizes = [2, 32], strides = [1, 1]} : vector<2x128xf32> to vector<2x32xf32>
    %429 = vector.extract_strided_slice %425 {offsets = [0, 96], sizes = [2, 32], strides = [1, 1]} : vector<2x128xf32> to vector<2x32xf32>
    %430 = arith.mulf %427, %394 : vector<2x32xf32>
    %431 = arith.mulf %426, %428 : vector<2x32xf32>
    %432 = arith.addf %430, %431 : vector<2x32xf32>
    %433 = math.tanh %432 : vector<2x32xf32>
    %434 = arith.mulf %429, %433 : vector<2x32xf32>
    %435 = vector.extract_strided_slice %399 {offsets = [2, 0], sizes = [2, 16], strides = [1, 1]} : vector<4x16xf32> to vector<2x16xf32>
    %cst_71 = arith.constant dense<0.000000e+00> : vector<2x128xf32>
    %436 = tpu.matmul %435, %4, %cst_71 {dimension_numbers = #tpu.dot_dimension_numbers<[1], [0], [0], [1], [0, 0, 1, 1], [], []>} : vector<2x16xf32>, vector<16x128xf32>, vector<2x128xf32> -> vector<2x128xf32>
    %cst_72 = arith.constant dense<0.000000e+00> : vector<2x128xf32>
    %437 = tpu.matmul %417, %6, %cst_72 {dimension_numbers = #tpu.dot_dimension_numbers<[1], [0], [0], [1], [0, 0, 1, 1], [], []>} : vector<2x32xf32>, vector<32x128xf32>, vector<2x128xf32> -> vector<2x128xf32>
    %438 = arith.addf %436, %437 : vector<2x128xf32>
    %439 = arith.addf %438, %11 : vector<2x128xf32>
    %440 = arith.mulf %439, %28 : vector<2x128xf32>
    %441 = math.tanh %440 : vector<2x128xf32>
    %442 = arith.mulf %441, %28 : vector<2x128xf32>
    %443 = arith.addf %442, %31 : vector<2x128xf32>
    %444 = vector.extract_strided_slice %443 {offsets = [0, 0], sizes = [2, 32], strides = [1, 1]} : vector<2x128xf32> to vector<2x32xf32>
    %445 = vector.extract_strided_slice %443 {offsets = [0, 32], sizes = [2, 32], strides = [1, 1]} : vector<2x128xf32> to vector<2x32xf32>
    %446 = vector.extract_strided_slice %443 {offsets = [0, 64], sizes = [2, 32], strides = [1, 1]} : vector<2x128xf32> to vector<2x32xf32>
    %447 = vector.extract_strided_slice %443 {offsets = [0, 96], sizes = [2, 32], strides = [1, 1]} : vector<2x128xf32> to vector<2x32xf32>
    %448 = arith.mulf %445, %415 : vector<2x32xf32>
    %449 = arith.mulf %444, %446 : vector<2x32xf32>
    %450 = arith.addf %448, %449 : vector<2x32xf32>
    %451 = math.tanh %450 : vector<2x32xf32>
    %452 = arith.mulf %447, %451 : vector<2x32xf32>
    %cst_73 = arith.constant dense<0.000000e+00> : vector<2x128xf32>
    %453 = tpu.matmul %452, %5, %cst_73 {dimension_numbers = #tpu.dot_dimension_numbers<[1], [0], [0], [1], [0, 0, 1, 1], [], []>} : vector<2x32xf32>, vector<32x128xf32>, vector<2x128xf32> -> vector<2x128xf32>
    %cst_74 = arith.constant dense<0.000000e+00> : vector<2x128xf32>
    %454 = tpu.matmul %434, %7, %cst_74 {dimension_numbers = #tpu.dot_dimension_numbers<[1], [0], [0], [1], [0, 0, 1, 1], [], []>} : vector<2x32xf32>, vector<32x128xf32>, vector<2x128xf32> -> vector<2x128xf32>
    %455 = arith.addf %453, %454 : vector<2x128xf32>
    %456 = arith.addf %455, %15 : vector<2x128xf32>
    %457 = arith.mulf %456, %28 : vector<2x128xf32>
    %458 = math.tanh %457 : vector<2x128xf32>
    %459 = arith.mulf %458, %28 : vector<2x128xf32>
    %460 = arith.addf %459, %31 : vector<2x128xf32>
    %461 = vector.extract_strided_slice %460 {offsets = [0, 0], sizes = [2, 32], strides = [1, 1]} : vector<2x128xf32> to vector<2x32xf32>
    %462 = vector.extract_strided_slice %460 {offsets = [0, 32], sizes = [2, 32], strides = [1, 1]} : vector<2x128xf32> to vector<2x32xf32>
    %463 = vector.extract_strided_slice %460 {offsets = [0, 64], sizes = [2, 32], strides = [1, 1]} : vector<2x128xf32> to vector<2x32xf32>
    %464 = vector.extract_strided_slice %460 {offsets = [0, 96], sizes = [2, 32], strides = [1, 1]} : vector<2x128xf32> to vector<2x32xf32>
    %465 = arith.mulf %462, %432 : vector<2x32xf32>
    %466 = arith.mulf %461, %463 : vector<2x32xf32>
    %467 = arith.addf %465, %466 : vector<2x32xf32>
    %468 = math.tanh %467 : vector<2x32xf32>
    %469 = arith.mulf %464, %468 : vector<2x32xf32>
    %470 = tpu.concatenate %452, %469 in 0 : vector<2x32xf32>, vector<2x32xf32> -> vector<4x32xf32>
    %cst_75 = arith.constant dense<0.000000e+00> : vector<4x16xf32>
    %471 = tpu.matmul %470, %16, %cst_75 {dimension_numbers = #tpu.dot_dimension_numbers<[1], [0], [0], [1], [0, 0, 1, 1], [], []>} : vector<4x32xf32>, vector<32x16xf32>, vector<4x16xf32> -> vector<4x16xf32>
    %472 = arith.addf %471, %19 : vector<4x16xf32>
    %473 = vector.extract_strided_slice %472 {offsets = [0, 0], sizes = [2, 16], strides = [1, 1]} : vector<4x16xf32> to vector<2x16xf32>
    %cst_76 = arith.constant dense<0.000000e+00> : vector<2x128xf32>
    %474 = tpu.matmul %473, %4, %cst_76 {dimension_numbers = #tpu.dot_dimension_numbers<[1], [0], [0], [1], [0, 0, 1, 1], [], []>} : vector<2x16xf32>, vector<16x128xf32>, vector<2x128xf32> -> vector<2x128xf32>
    %cst_77 = arith.constant dense<0.000000e+00> : vector<2x128xf32>
    %475 = tpu.matmul %452, %6, %cst_77 {dimension_numbers = #tpu.dot_dimension_numbers<[1], [0], [0], [1], [0, 0, 1, 1], [], []>} : vector<2x32xf32>, vector<32x128xf32>, vector<2x128xf32> -> vector<2x128xf32>
    %476 = arith.addf %474, %475 : vector<2x128xf32>
    %477 = arith.addf %476, %11 : vector<2x128xf32>
    %478 = arith.mulf %477, %28 : vector<2x128xf32>
    %479 = math.tanh %478 : vector<2x128xf32>
    %480 = arith.mulf %479, %28 : vector<2x128xf32>
    %481 = arith.addf %480, %31 : vector<2x128xf32>
    %482 = vector.extract_strided_slice %481 {offsets = [0, 0], sizes = [2, 32], strides = [1, 1]} : vector<2x128xf32> to vector<2x32xf32>
    %483 = vector.extract_strided_slice %481 {offsets = [0, 32], sizes = [2, 32], strides = [1, 1]} : vector<2x128xf32> to vector<2x32xf32>
    %484 = vector.extract_strided_slice %481 {offsets = [0, 64], sizes = [2, 32], strides = [1, 1]} : vector<2x128xf32> to vector<2x32xf32>
    %485 = vector.extract_strided_slice %481 {offsets = [0, 96], sizes = [2, 32], strides = [1, 1]} : vector<2x128xf32> to vector<2x32xf32>
    %486 = arith.mulf %483, %450 : vector<2x32xf32>
    %487 = arith.mulf %482, %484 : vector<2x32xf32>
    %488 = arith.addf %486, %487 : vector<2x32xf32>
    %489 = math.tanh %488 : vector<2x32xf32>
    %490 = arith.mulf %485, %489 : vector<2x32xf32>
    %cst_78 = arith.constant dense<0.000000e+00> : vector<2x128xf32>
    %491 = tpu.matmul %490, %5, %cst_78 {dimension_numbers = #tpu.dot_dimension_numbers<[1], [0], [0], [1], [0, 0, 1, 1], [], []>} : vector<2x32xf32>, vector<32x128xf32>, vector<2x128xf32> -> vector<2x128xf32>
    %cst_79 = arith.constant dense<0.000000e+00> : vector<2x128xf32>
    %492 = tpu.matmul %469, %7, %cst_79 {dimension_numbers = #tpu.dot_dimension_numbers<[1], [0], [0], [1], [0, 0, 1, 1], [], []>} : vector<2x32xf32>, vector<32x128xf32>, vector<2x128xf32> -> vector<2x128xf32>
    %493 = arith.addf %491, %492 : vector<2x128xf32>
    %494 = arith.addf %493, %15 : vector<2x128xf32>
    %495 = arith.mulf %494, %28 : vector<2x128xf32>
    %496 = math.tanh %495 : vector<2x128xf32>
    %497 = arith.mulf %496, %28 : vector<2x128xf32>
    %498 = arith.addf %497, %31 : vector<2x128xf32>
    %499 = vector.extract_strided_slice %498 {offsets = [0, 0], sizes = [2, 32], strides = [1, 1]} : vector<2x128xf32> to vector<2x32xf32>
    %500 = vector.extract_strided_slice %498 {offsets = [0, 32], sizes = [2, 32], strides = [1, 1]} : vector<2x128xf32> to vector<2x32xf32>
    %501 = vector.extract_strided_slice %498 {offsets = [0, 64], sizes = [2, 32], strides = [1, 1]} : vector<2x128xf32> to vector<2x32xf32>
    %502 = vector.extract_strided_slice %498 {offsets = [0, 96], sizes = [2, 32], strides = [1, 1]} : vector<2x128xf32> to vector<2x32xf32>
    %503 = arith.mulf %500, %467 : vector<2x32xf32>
    %504 = arith.mulf %499, %501 : vector<2x32xf32>
    %505 = arith.addf %503, %504 : vector<2x32xf32>
    %506 = math.tanh %505 : vector<2x32xf32>
    %507 = arith.mulf %502, %506 : vector<2x32xf32>
    %508 = vector.extract_strided_slice %472 {offsets = [2, 0], sizes = [2, 16], strides = [1, 1]} : vector<4x16xf32> to vector<2x16xf32>
    %cst_80 = arith.constant dense<0.000000e+00> : vector<2x128xf32>
    %509 = tpu.matmul %508, %4, %cst_80 {dimension_numbers = #tpu.dot_dimension_numbers<[1], [0], [0], [1], [0, 0, 1, 1], [], []>} : vector<2x16xf32>, vector<16x128xf32>, vector<2x128xf32> -> vector<2x128xf32>
    %cst_81 = arith.constant dense<0.000000e+00> : vector<2x128xf32>
    %510 = tpu.matmul %490, %6, %cst_81 {dimension_numbers = #tpu.dot_dimension_numbers<[1], [0], [0], [1], [0, 0, 1, 1], [], []>} : vector<2x32xf32>, vector<32x128xf32>, vector<2x128xf32> -> vector<2x128xf32>
    %511 = arith.addf %509, %510 : vector<2x128xf32>
    %512 = arith.addf %511, %11 : vector<2x128xf32>
    %513 = arith.mulf %512, %28 : vector<2x128xf32>
    %514 = math.tanh %513 : vector<2x128xf32>
    %515 = arith.mulf %514, %28 : vector<2x128xf32>
    %516 = arith.addf %515, %31 : vector<2x128xf32>
    %517 = vector.extract_strided_slice %516 {offsets = [0, 0], sizes = [2, 32], strides = [1, 1]} : vector<2x128xf32> to vector<2x32xf32>
    %518 = vector.extract_strided_slice %516 {offsets = [0, 32], sizes = [2, 32], strides = [1, 1]} : vector<2x128xf32> to vector<2x32xf32>
    %519 = vector.extract_strided_slice %516 {offsets = [0, 64], sizes = [2, 32], strides = [1, 1]} : vector<2x128xf32> to vector<2x32xf32>
    %520 = vector.extract_strided_slice %516 {offsets = [0, 96], sizes = [2, 32], strides = [1, 1]} : vector<2x128xf32> to vector<2x32xf32>
    %521 = arith.mulf %518, %488 : vector<2x32xf32>
    %522 = arith.mulf %517, %519 : vector<2x32xf32>
    %523 = arith.addf %521, %522 : vector<2x32xf32>
    %524 = math.tanh %523 : vector<2x32xf32>
    %525 = arith.mulf %520, %524 : vector<2x32xf32>
    %cst_82 = arith.constant dense<0.000000e+00> : vector<2x128xf32>
    %526 = tpu.matmul %525, %5, %cst_82 {dimension_numbers = #tpu.dot_dimension_numbers<[1], [0], [0], [1], [0, 0, 1, 1], [], []>} : vector<2x32xf32>, vector<32x128xf32>, vector<2x128xf32> -> vector<2x128xf32>
    %cst_83 = arith.constant dense<0.000000e+00> : vector<2x128xf32>
    %527 = tpu.matmul %507, %7, %cst_83 {dimension_numbers = #tpu.dot_dimension_numbers<[1], [0], [0], [1], [0, 0, 1, 1], [], []>} : vector<2x32xf32>, vector<32x128xf32>, vector<2x128xf32> -> vector<2x128xf32>
    %528 = arith.addf %526, %527 : vector<2x128xf32>
    %529 = arith.addf %528, %15 : vector<2x128xf32>
    %530 = arith.mulf %529, %28 : vector<2x128xf32>
    %531 = math.tanh %530 : vector<2x128xf32>
    %532 = arith.mulf %531, %28 : vector<2x128xf32>
    %533 = arith.addf %532, %31 : vector<2x128xf32>
    %534 = vector.extract_strided_slice %533 {offsets = [0, 0], sizes = [2, 32], strides = [1, 1]} : vector<2x128xf32> to vector<2x32xf32>
    %535 = vector.extract_strided_slice %533 {offsets = [0, 32], sizes = [2, 32], strides = [1, 1]} : vector<2x128xf32> to vector<2x32xf32>
    %536 = vector.extract_strided_slice %533 {offsets = [0, 64], sizes = [2, 32], strides = [1, 1]} : vector<2x128xf32> to vector<2x32xf32>
    %537 = vector.extract_strided_slice %533 {offsets = [0, 96], sizes = [2, 32], strides = [1, 1]} : vector<2x128xf32> to vector<2x32xf32>
    %538 = arith.mulf %535, %505 : vector<2x32xf32>
    %539 = arith.mulf %534, %536 : vector<2x32xf32>
    %540 = arith.addf %538, %539 : vector<2x32xf32>
    %541 = math.tanh %540 : vector<2x32xf32>
    %542 = arith.mulf %537, %541 : vector<2x32xf32>
    %543 = vector.shape_cast %379 : vector<2x32xf32> to vector<1x2x32xf32>
    %544 = vector.shape_cast %396 : vector<2x32xf32> to vector<1x2x32xf32>
    %545 = vector.shape_cast %452 : vector<2x32xf32> to vector<1x2x32xf32>
    %546 = vector.shape_cast %469 : vector<2x32xf32> to vector<1x2x32xf32>
    %547 = vector.shape_cast %525 : vector<2x32xf32> to vector<1x2x32xf32>
    %548 = vector.shape_cast %542 : vector<2x32xf32> to vector<1x2x32xf32>
    %549 = tpu.concatenate %543, %544, %545, %546, %547, %548 in 0 : vector<1x2x32xf32>, vector<1x2x32xf32>, vector<1x2x32xf32>, vector<1x2x32xf32>, vector<1x2x32xf32>, vector<1x2x32xf32> -> vector<6x2x32xf32>
    %c0_84 = arith.constant 0 : index
    %c0_85 = arith.constant 0 : index
    %c0_86 = arith.constant 0 : index
    %550 = vector.load %arg8[%c0_84, %c0_85, %c0_86] : memref<6x2x32xf32, #tpu.memory_space<vmem>>, vector<6x2x32xf32>
    tpu.vector_store %arg8[%c0_84, %c0_85, %c0_86], %549 {strides = array<i32>} : memref<6x2x32xf32, #tpu.memory_space<vmem>>, vector<6x2x32xf32>,
    return
  }
  func.func @transform_0(%arg0: i32) -> (i32, i32, i32) {
    %c0_i32 = arith.constant 0 : i32
    %c0_i32_0 = arith.constant 0 : i32
    %c0_i32_1 = arith.constant 0 : i32
    %c0_i32_2 = arith.constant 0 : i32
    return %c0_i32, %c0_i32_0, %c0_i32_1 : i32, i32, i32
  }
  func.func @transform_1(%arg0: i32) -> (i32, i32, i32) {
    %c0_i32 = arith.constant 0 : i32
    %c0_i32_0 = arith.constant 0 : i32
    %c0_i32_1 = arith.constant 0 : i32
    %c0_i32_2 = arith.constant 0 : i32
    return %c0_i32, %c0_i32_0, %c0_i32_1 : i32, i32, i32
  }
  func.func @transform_2(%arg0: i32) -> (i32, i32, i32) {
    %c0_i32 = arith.constant 0 : i32
    %c0_i32_0 = arith.constant 0 : i32
    %c0_i32_1 = arith.constant 0 : i32
    %c0_i32_2 = arith.constant 0 : i32
    return %c0_i32, %c0_i32_0, %c0_i32_1 : i32, i32, i32
  }
  func.func @transform_3(%arg0: i32) -> (i32, i32, i32) {
    %c0_i32 = arith.constant 0 : i32
    %c0_i32_0 = arith.constant 0 : i32
    %c0_i32_1 = arith.constant 0 : i32
    %c0_i32_2 = arith.constant 0 : i32
    return %c0_i32, %c0_i32_0, %c0_i32_1 : i32, i32, i32
  }
  func.func @transform_4(%arg0: i32) -> (i32, i32, i32) {
    %c0_i32 = arith.constant 0 : i32
    %c0_i32_0 = arith.constant 0 : i32
    %c0_i32_1 = arith.constant 0 : i32
    %c0_i32_2 = arith.constant 0 : i32
    return %c0_i32, %c0_i32_0, %c0_i32_1 : i32, i32, i32
  }
  func.func @transform_5(%arg0: i32) -> (i32, i32) {
    %c0_i32 = arith.constant 0 : i32
    %c0_i32_0 = arith.constant 0 : i32
    %c0_i32_1 = arith.constant 0 : i32
    return %c0_i32, %c0_i32_0 : i32, i32
  }
  func.func @transform_6(%arg0: i32) -> (i32, i32) {
    %c0_i32 = arith.constant 0 : i32
    %c0_i32_0 = arith.constant 0 : i32
    %c0_i32_1 = arith.constant 0 : i32
    return %c0_i32, %c0_i32_0 : i32, i32
  }
  func.func @transform_7(%arg0: i32) -> (i32, i32, i32) {
    %c0_i32 = arith.constant 0 : i32
    %c0_i32_0 = arith.constant 0 : i32
    %c0_i32_1 = arith.constant 0 : i32
    %c0_i32_2 = arith.constant 0 : i32
    return %c0_i32, %c0_i32_0, %c0_i32_1 : i32, i32, i32
  }
}

</mosaic_0001>

<llo_original>
// kernel: lstm_predictor_forward.1
$region0: #{lstm_predictor_forward.1}
  #allocation0 [shape = 'u32[]', space=smem, size = 0x4, offset = 0x4, fixed_abs, tag = 'smem constant byte address 0x4 - core index']
  #allocation1 [shape = 'u32[144,128]{1,0:T(1,128)}', space=vmem, size = 0x12000, scoped, tag = 'internal scratch']
  %s0 = inlined_call_operand.vmem [shape: f32[8,2,16], index: 0, kind: input, shape index: {}]
  %s1 = inlined_call_operand.vmem [shape: f32[2,2,32], index: 1, kind: input, shape index: {}]
  %s2 = inlined_call_operand.vmem [shape: f32[2,2,32], index: 2, kind: input, shape index: {}]
  %s3 = inlined_call_operand.hbm [shape: f32[2,64,128], index: 3, kind: input, shape index: {}]
  %s4 = inlined_call_operand.vmem [shape: f32[2,1,128], index: 4, kind: input, shape index: {}]
  %s5 = inlined_call_operand.vmem [shape: f32[32,16], index: 5, kind: input, shape index: {}]
  %s6 = inlined_call_operand.vmem [shape: f32[1,16], index: 6, kind: input, shape index: {}]
  %s7 = inlined_call_operand.hbm [shape: f32[6,2,32], index: 7, kind: output, shape index: {}]
  %s8 = sld [smem:[#allocation0]]
  $region42: #{lstm_predictor_forward.1} parent=0
    _
  %s10 = ssub.s32 1, %s8
  %s11 = scalar_select 0, %s10, %s8
  $region1: #{lstm_predictor_forward.1} parent=0
    #allocation2 [shape = 'u8[65536]{0}', space=vmem, size = 0x10000, scoped, tag = 'input window, operand 3, single buffered']
    #allocation3 [shape = 's32[1]{0}', space=sflag, size = 0x4, scoped, tag = 'scoped memory for lstm_predictor_forward.1']
    #allocation4 [shape = 's32[1]{0}', space=sflag, size = 0x4, scoped, tag = 'scoped memory for lstm_predictor_forward.1']
    #allocation5 [shape = 'u8[6144]{0}', space=vmem, size = 0x1800, scoped, tag = 'output window, operand 0, single buffered']
    %12 = vsyncpa [#allocation3], 0
    %13 = vsyncpa [#allocation4], 0
    // Predicated region
    $region2: #{lstm_predictor_forward.1} parent=1 // pred_check
      _
    $region3: #{lstm_predictor_forward.1} parent=1 // pred_check_branch
      %15 = sbr.rel (0) target = $region5
    $region4: #{lstm_predictor_forward.1} parent=1 // pred_region
      _
    $region5: #{lstm_predictor_forward.1} parent=1 // pred_fallthru
      _
    // Predicated region
    $region6: #{lstm_predictor_forward.1} parent=1 // pred_check
      _
    $region7: #{lstm_predictor_forward.1} parent=1 // pred_check_branch
      %17 = sbr.rel (0) target = $region9
    $region8: #{lstm_predictor_forward.1} parent=1 // pred_region
      _
    $region9: #{lstm_predictor_forward.1} parent=1 // pred_fallthru
      _
    // Predicated region
    $region10: #{lstm_predictor_forward.1} parent=1 // pred_check
      _
    $region11: #{lstm_predictor_forward.1} parent=1 // pred_check_branch
      %19 = sbr.rel (0) target = $region13
    $region12: #{lstm_predictor_forward.1} parent=1 // pred_region
      _
    $region13: #{lstm_predictor_forward.1} parent=1 // pred_fallthru
      _
    // Predicated region
    $region14: #{lstm_predictor_forward.1} parent=1 // pred_check
      _
    $region15: #{lstm_predictor_forward.1} parent=1 // pred_check_branch
      %21 = sbr.rel (0) target = $region17
    $region16: #{lstm_predictor_forward.1} parent=1 // pred_region
      %s23 = ssub.s32 2048, 2048
      %24 = vsyncadd [#allocation3], %s23
      %s25 = sshll.u32 [#allocation2], 4
      %s26 = int_to_ptr.vmem [resolvable:$true] %s25
      %31 = dma.hbm_to_vmem [thread:$0]  %s3, 2048, %s26, [#allocation3], 128, 128, 8
    $region17: #{lstm_predictor_forward.1} parent=1 // pred_fallthru
      _
    // Predicated region
    $region18: #{lstm_predictor_forward.1} parent=1 // pred_check
      _
    $region19: #{lstm_predictor_forward.1} parent=1 // pred_check_branch
      %33 = sbr.rel (0) target = $region21
    $region20: #{lstm_predictor_forward.1} parent=1 // pred_region
      _
    $region21: #{lstm_predictor_forward.1} parent=1 // pred_fallthru
      _
    // Predicated region
    $region22: #{lstm_predictor_forward.1} parent=1 // pred_check
      _
    $region23: #{lstm_predictor_forward.1} parent=1 // pred_check_branch
      %35 = sbr.rel (0) target = $region25
    $region24: #{lstm_predictor_forward.1} parent=1 // pred_region
      _
    $region25: #{lstm_predictor_forward.1} parent=1 // pred_fallthru
      _
    // Predicated region
    $region26: #{lstm_predictor_forward.1} parent=1 // pred_check
      _
    $region27: #{lstm_predictor_forward.1} parent=1 // pred_check_branch
      %37 = sbr.rel (0) target = $region29
    $region28: #{lstm_predictor_forward.1} parent=1 // pred_region
      _
    $region29: #{lstm_predictor_forward.1} parent=1 // pred_fallthru
      _
    // Predicated region
    $region30: #{lstm_predictor_forward.1} parent=1 // pred_check
      _
    $region31: #{lstm_predictor_forward.1} parent=1 // pred_check_branch
      %39 = sbr.rel (0) target = $region33
    $region32: #{lstm_predictor_forward.1} parent=1 // pred_region
      %40 = dma.done [#allocation3], 2048
    $region33: #{lstm_predictor_forward.1} parent=1 // pred_fallthru
      _
    %v41 = vld [vmem:[#allocation2] sm:$0xff]
    %v42 = vld [vmem:[#allocation2 + $0x8] sm:$0xff]
    %v43 = vld [vmem:[#allocation2 + $0x20] sm:$0xff]
    %v44 = vld [vmem:[#allocation2 + $0x28] sm:$0xff]
    %v45 = vld [vmem:[#allocation2 + $0x30] sm:$0xff]
    %v46 = vld [vmem:[#allocation2 + $0x38] sm:$0xff]
    %s47 = scalar_lea.vmem [#allocation2], 64
    %v48 = vld [vmem:[%s47] sm:$0xff]
    %v49 = vld [vmem:[%s47 + $0x8] sm:$0xff]
    %v50 = vld [vmem:[%s47 + $0x10] sm:$0xff]
    %v51 = vld [vmem:[%s47 + $0x18] sm:$0xff]
    %v52 = vld [vmem:[%s47 + $0x20] sm:$0xff]
    %v53 = vld [vmem:[%s47 + $0x28] sm:$0xff]
    %v54 = vld [vmem:[%s47 + $0x30] sm:$0xff]
    %v55 = vld [vmem:[%s47 + $0x38] sm:$0xff]
    %v56 = vld [vmem:[%s4] sm:$0x1]
    %v58 = vlaneseq
    %v59 = vshrl.u32 %v58, 7
    %v60 = vsub.s32 0, %v59
    %v61 = vrot.slane %v56, %v60
    %s63 = scalar_lea.vmem %s4, 1
    %v64 = vld [vmem:[%s63] sm:$0x1]
    %v66 = vlaneseq
    %v67 = vshrl.u32 %v66, 7
    %v68 = vsub.s32 0, %v67
    %v69 = vrot.slane %v64, %v68
    %v71 = vld [vmem:[%s5] sm:$0xff]
    %v72 = vld [vmem:[%s5 + $0x8] sm:$0xff]
    %v73 = vld [vmem:[%s5 + $0x10] sm:$0xff]
    %v74 = vld [vmem:[%s5 + $0x18] sm:$0xff]
    %v75 = vld [vmem:[%s6] sm:$0x1]
    %v77 = vlaneseq
    %v78 = vshrl.u32 %v77, 7
    %v79 = vsub.s32 0, %v78
    %v80 = vrot.slane %v75, %v79
    %v82 = vlaneseq
    %v83 = vand.u32 %v82, 127
    %vm84 = vcmp.ge.s32.totalorder %v83, 64
    %vm85 = vcmp.lt.s32.totalorder %v83, 96
    %vm86 = vmand %vm84, %vm85
    %v87 = vsel %vm86, 1.0, 0.5
    %v88 = vsel %vm86, 0.0, 0.5
    %v89 = vld [vmem:[%s1] sm:$0x3]
    %s90 = scalar_lea.vmem %s1, 2
    %v91 = vld [vmem:[%s90] sm:$0x3]
    %v92 = vld [vmem:[%s2] sm:$0x3]
    %s93 = scalar_lea.vmem %s2, 2
    %v94 = vld [vmem:[%s93] sm:$0x3]
    %v95 = vld [vmem:[%s0] sm:$0x3]
    %v96 = vld [vmem:[%s0 + $0x2] sm:$0x3]
    %v97 = vld [vmem:[%s0 + $0x4] sm:$0x3]
    %v98 = vld [vmem:[%s0 + $0x6] sm:$0x3]
    %v99 = vld [vmem:[%s0 + $0x8] sm:$0x3]
    %v100 = vld [vmem:[%s0 + $0xa] sm:$0x3]
    %v101 = vld [vmem:[%s0 + $0xc] sm:$0x3]
    %v102 = vld [vmem:[%s0 + $0xe] sm:$0x3]
    %v111 = vcombine.low %v95, %v96
    %v112 = vcombine.low %v97, %v98
    %v114 = vunpack.c.l.s4 1983009808
    %v115 = vunpack.c.0.s8 %v114
    %v116 = vlaneseq
    %v117 = vshrl.u32 %v116, 7
    %v118 = vsub.s32 %v115, %v117
    %v119 = vrot.slane %v111, %v118
    %v121 = vunpack.c.l.s4 1983009808
    %v122 = vunpack.c.0.s8 %v121
    %v123 = vlaneseq
    %v124 = vshrl.u32 %v123, 7
    %v125 = vsub.s32 %v122, %v124
    %v126 = vrot.slane %v112, %v125
    %v127 = vcombine.low %v119, %v126
    %v128 = vcombine.low %v99, %v100
    %v129 = vcombine.low %v101, %v102
    %v131 = vunpack.c.l.s4 1983009808
    %v132 = vunpack.c.0.s8 %v131
    %v133 = vlaneseq
    %v134 = vshrl.u32 %v133, 7
    %v135 = vsub.s32 %v132, %v134
    %v136 = vrot.slane %v128, %v135
    %v138 = vunpack.c.l.s4 1983009808
    %v139 = vunpack.c.0.s8 %v138
    %v140 = vlaneseq
    %v141 = vshrl.u32 %v140, 7
    %v142 = vsub.s32 %v139, %v141
    %v143 = vrot.slane %v129, %v142
    %v144 = vcombine.low %v136, %v143
    %vm145 = vcmask 130048
    %v146 = vsel %vm145, %v127, 0
    %v148 = vsel %vm145, %v144, 0
    %150 = vmatprep.subr.mxu0 0.0
    %151 = vmatpush1.msra.mxu0 %v41
    %152 = vmatprep.subr.mxu0 0.0
    %153 = vmatpush1.msra.mxu0 %v42
    %154 = vmatprep.subr.mxu0 0.0
    %155 = vmatpush1.msra.mxu0 0.0
    %156 = vmatprep.subr.mxu0 0.0
    %157 = vmatpush1.msra.mxu0 0.0
    %158 = vmatprep.subr.mxu0 0.0
    %159 = vmatpush1.msra.mxu0 0.0
    %160 = vmatprep.subr.mxu0 0.0
    %161 = vmatpush1.msra.mxu0 0.0
    %162 = vmatprep.subr.mxu0 0.0
    %163 = vmatpush1.msra.mxu0 0.0
    %164 = vmatprep.subr.mxu0 0.0
    %165 = vmatpush1.msra.mxu0 0.0
    %166 = vmatprep.subr.mxu0 0.0
    %167 = vmatpush1.msra.mxu0 0.0
    %168 = vmatprep.subr.mxu0 0.0
    %169 = vmatpush1.msra.mxu0 0.0
    %170 = vmatprep.subr.mxu0 0.0
    %171 = vmatpush1.msra.mxu0 0.0
    %172 = vmatprep.subr.mxu0 0.0
    %173 = vmatpush1.msra.mxu0 0.0
    %174 = vmatprep.subr.mxu0 0.0
    %175 = vmatpush1.msra.mxu0 0.0
    %176 = vmatprep.subr.mxu0 0.0
    %177 = vmatpush1.msra.mxu0 0.0
    %178 = vmatprep.subr.mxu0 0.0
    %179 = vmatpush1.msra.mxu0 0.0
    %180 = vmatprep.subr.mxu0 0.0
    %181 = vmatpush1.msra.mxu0 0.0
    %182 = vmatprep.subr.mxu0 0.0
    %183 = vmatpush1.msra.mxu0 0.0
    %184 = vmatprep.subr.mxu0 0.0
    %185 = vmatpush1.msra.mxu0 0.0
    %186 = vmatprep.subr.mxu0 0.0
    %187 = vmatpush1.msra.mxu0 0.0
    %188 = vmatprep.subr.mxu0 0.0
    %189 = vmatpush1.msra.mxu0 0.0
    %190 = vmatprep.subr.mxu0 0.0
    %191 = vmatpush1.msra.mxu0 0.0
    %192 = vmatprep.subr.mxu0 0.0
    %193 = vmatpush1.msra.mxu0 0.0
    %194 = vmatprep.subr.mxu0 0.0
    %195 = vmatpush1.msra.mxu0 0.0
    %196 = vmatprep.subr.mxu0 0.0
    %197 = vmatpush1.msra.mxu0 0.0
    %198 = vmatprep.subr.mxu0 0.0
    %199 = vmatpush1.msra.mxu0 0.0
    %200 = vmatprep.subr.mxu0 0.0
    %201 = vmatpush1.msra.mxu0 0.0
    %202 = vmatprep.subr.mxu0 0.0
    %203 = vmatpush1.msra.mxu0 0.0
    %204 = vmatprep.subr.mxu0 0.0
    %205 = vmatpush1.msra.mxu0 0.0
    %206 = vmatprep.subr.mxu0 0.0
    %207 = vmatpush1.msra.mxu0 0.0
    %208 = vmatprep.subr.mxu0 0.0
    %209 = vmatpush1.msra.mxu0 0.0
    %210 = vmatprep.subr.mxu0 0.0
    %211 = vmatpush1.msra.mxu0 0.0
    %212 = vmatprep.subr.mxu0 0.0
    %213 = vmatpush1.msra.mxu0 0.0
    %214 = vmatprep.mubr.f32.mxu0 0.0
    %215 = vmatmul.mubr.f32.gmra.mrb[0].mxu0 %v146
    %v216 = vpop.f32.mrb[0].mxu0
    %v217 = vadd.f32 0.0, %v216
    %v218 = vpop.f32.mrb[0].mxu0
    %219 = vmatprep.mubr.f32.mxu0 0.0
    %220 = vmatmul.mubr.f32.gmra.mrb[0].mxu0 %v148
    %v221 = vpop.f32.mrb[0].mxu0
    %v222 = vadd.f32 0.0, %v221
    %v223 = vpop.f32.mrb[0].mxu0
    %224 = vdwg.mxu0
    %v227 = vcombine.high %v217, %v217
    %v229 = vunpack.c.l.s4 1983009808
    %v230 = vunpack.c.0.s8 %v229
    %v231 = vlaneseq
    %v232 = vshrl.u32 %v231, 7
    %v233 = vsub.s32 %v230, %v232
    %v234 = vrot.slane %v217, %v233
    %v236 = vunpack.c.l.s4 1983009808
    %v237 = vunpack.c.0.s8 %v236
    %v238 = vlaneseq
    %v239 = vshrl.u32 %v238, 7
    %v240 = vsub.s32 %v237, %v239
    %v241 = vrot.slane %v227, %v240
    %v242 = vcombine.high %v234, %v234
    %v243 = vcombine.high %v241, %v241
    %v244 = vcombine.high %v222, %v222
    %v246 = vunpack.c.l.s4 1983009808
    %v247 = vunpack.c.0.s8 %v246
    %v248 = vlaneseq
    %v249 = vshrl.u32 %v248, 7
    %v250 = vsub.s32 %v247, %v249
    %v251 = vrot.slane %v222, %v250
    %v253 = vunpack.c.l.s4 1983009808
    %v254 = vunpack.c.0.s8 %v253
    %v255 = vlaneseq
    %v256 = vshrl.u32 %v255, 7
    %v257 = vsub.s32 %v254, %v256
    %v258 = vrot.slane %v244, %v257
    %v259 = vcombine.high %v251, %v251
    %v260 = vcombine.high %v258, %v258
    %vm269 = vcmask 261120
    %v271 = vsel %vm269, %v89, 0
    %273 = vmatprep.subr.mxu0 0.0
    %274 = vmatpush1.msra.mxu0 %v43
    %275 = vmatprep.subr.mxu0 0.0
    %276 = vmatpush1.msra.mxu0 %v44
    %277 = vmatprep.subr.mxu0 0.0
    %278 = vmatpush1.msra.mxu0 %v45
    %279 = vmatprep.subr.mxu0 0.0
    %280 = vmatpush1.msra.mxu0 %v46
    %281 = vmatprep.subr.mxu0 0.0
    %282 = vmatpush1.msra.mxu0 0.0
    %283 = vmatprep.subr.mxu0 0.0
    %284 = vmatpush1.msra.mxu0 0.0
    %285 = vmatprep.subr.mxu0 0.0
    %286 = vmatpush1.msra.mxu0 0.0
    %287 = vmatprep.subr.mxu0 0.0
    %288 = vmatpush1.msra.mxu0 0.0
    %289 = vmatprep.subr.mxu0 0.0
    %290 = vmatpush1.msra.mxu0 0.0
    %291 = vmatprep.subr.mxu0 0.0
    %292 = vmatpush1.msra.mxu0 0.0
    %293 = vmatprep.subr.mxu0 0.0
    %294 = vmatpush1.msra.mxu0 0.0
    %295 = vmatprep.subr.mxu0 0.0
    %296 = vmatpush1.msra.mxu0 0.0
    %297 = vmatprep.subr.mxu0 0.0
    %298 = vmatpush1.msra.mxu0 0.0
    %299 = vmatprep.subr.mxu0 0.0
    %300 = vmatpush1.msra.mxu0 0.0
    %301 = vmatprep.subr.mxu0 0.0
    %302 = vmatpush1.msra.mxu0 0.0
    %303 = vmatprep.subr.mxu0 0.0
    %304 = vmatpush1.msra.mxu0 0.0
    %305 = vmatprep.subr.mxu0 0.0
    %306 = vmatpush1.msra.mxu0 0.0
    %307 = vmatprep.subr.mxu0 0.0
    %308 = vmatpush1.msra.mxu0 0.0
    %309 = vmatprep.subr.mxu0 0.0
    %310 = vmatpush1.msra.mxu0 0.0
    %311 = vmatprep.subr.mxu0 0.0
    %312 = vmatpush1.msra.mxu0 0.0
    %313 = vmatprep.subr.mxu0 0.0
    %314 = vmatpush1.msra.mxu0 0.0
    %315 = vmatprep.subr.mxu0 0.0
    %316 = vmatpush1.msra.mxu0 0.0
    %317 = vmatprep.subr.mxu0 0.0
    %318 = vmatpush1.msra.mxu0 0.0
    %319 = vmatprep.subr.mxu0 0.0
    %320 = vmatpush1.msra.mxu0 0.0
    %321 = vmatprep.subr.mxu0 0.0
    %322 = vmatpush1.msra.mxu0 0.0
    %323 = vmatprep.subr.mxu0 0.0
    %324 = vmatpush1.msra.mxu0 0.0
    %325 = vmatprep.subr.mxu0 0.0
    %326 = vmatpush1.msra.mxu0 0.0
    %327 = vmatprep.subr.mxu0 0.0
    %328 = vmatpush1.msra.mxu0 0.0
    %329 = vmatprep.subr.mxu0 0.0
    %330 = vmatpush1.msra.mxu0 0.0
    %331 = vmatprep.subr.mxu0 0.0
    %332 = vmatpush1.msra.mxu0 0.0
    %333 = vmatprep.subr.mxu0 0.0
    %334 = vmatpush1.msra.mxu0 0.0
    %335 = vmatprep.subr.mxu0 0.0
    %336 = vmatpush1.msra.mxu0 0.0
    %337 = vmatprep.mubr.f32.mxu0 0.0
    %338 = vmatmul.mubr.f32.gmra.mrb[0].mxu0 %v271
    %v339 = vpop.f32.mrb[0].mxu0
    %v340 = vadd.f32 0.0, %v339
    %v341 = vpop.f32.mrb[0].mxu0
    %342 = vdwg.mxu0
    %v343 = vadd.f32 %v234, %v340
    %v344 = vadd.f32 %v343, %v61
    %v345 = vmul.f32 %v344, %v87
    %v346 = vtanh.pop %v345
    %v347 = vmul.f32 %v346, %v87
    %v348 = vadd.f32 %v347, %v88
    %v351 = vunpack.c.l.s4 1983009808
    %v352 = vunpack.c.0.s8 %v351
    %v353 = vlaneseq
    %v354 = vshrl.u32 %v353, 7
    %v355 = vsub.s32 %v352, %v354
    %v356 = vrot.slane %v92, %v355
    %357 = vrot.lane.b32.xlu0 %v356, 32
    %v358 = vpop.permute.xlu0 %357
    %v360 = vmul.f32 %v348, %v358
    %362 = vrot.lane.b32.xlu0 %v348, 64
    %v363 = vpop.permute.xlu0 %362
    %v365 = vmul.f32 %v348, %v363
    %367 = vrot.lane.b32.xlu0 %v365, 32
    %v368 = vpop.permute.xlu0 %367
    %v370 = vadd.f32 %v360, %v368
    %v371 = vtanh.pop %v370
    %373 = vrot.lane.b32.xlu0 %v371, 64
    %v374 = vpop.permute.xlu0 %373
    %v376 = vmul.f32 %v348, %v374
    %v378 = vsel %vm269, %v91, 0
    %380 = vmatprep.subr.mxu0 0.0
    %381 = vmatpush1.msra.mxu0 %v52
    %382 = vmatprep.subr.mxu0 0.0
    %383 = vmatpush1.msra.mxu0 %v53
    %384 = vmatprep.subr.mxu0 0.0
    %385 = vmatpush1.msra.mxu0 %v54
    %386 = vmatprep.subr.mxu0 0.0
    %387 = vmatpush1.msra.mxu0 %v55
    %388 = vmatprep.subr.mxu0 0.0
    %389 = vmatpush1.msra.mxu0 0.0
    %390 = vmatprep.subr.mxu0 0.0
    %391 = vmatpush1.msra.mxu0 0.0
    %392 = vmatprep.subr.mxu0 0.0
    %393 = vmatpush1.msra.mxu0 0.0
    %394 = vmatprep.subr.mxu0 0.0
    %395 = vmatpush1.msra.mxu0 0.0
    %396 = vmatprep.subr.mxu0 0.0
    %397 = vmatpush1.msra.mxu0 0.0
    %398 = vmatprep.subr.mxu0 0.0
    %399 = vmatpush1.msra.mxu0 0.0
    %400 = vmatprep.subr.mxu0 0.0
    %401 = vmatpush1.msra.mxu0 0.0
    %402 = vmatprep.subr.mxu0 0.0
    %403 = vmatpush1.msra.mxu0 0.0
    %404 = vmatprep.subr.mxu0 0.0
    %405 = vmatpush1.msra.mxu0 0.0
    %406 = vmatprep.subr.mxu0 0.0
    %407 = vmatpush1.msra.mxu0 0.0
    %408 = vmatprep.subr.mxu0 0.0
    %409 = vmatpush1.msra.mxu0 0.0
    %410 = vmatprep.subr.mxu0 0.0
    %411 = vmatpush1.msra.mxu0 0.0
    %412 = vmatprep.subr.mxu0 0.0
    %413 = vmatpush1.msra.mxu0 0.0
    %414 = vmatprep.subr.mxu0 0.0
    %415 = vmatpush1.msra.mxu0 0.0
    %416 = vmatprep.subr.mxu0 0.0
    %417 = vmatpush1.msra.mxu0 0.0
    %418 = vmatprep.subr.mxu0 0.0
    %419 = vmatpush1.msra.mxu0 0.0
    %420 = vmatprep.subr.mxu0 0.0
    %421 = vmatpush1.msra.mxu0 0.0
    %422 = vmatprep.subr.mxu0 0.0
    %423 = vmatpush1.msra.mxu0 0.0
    %424 = vmatprep.subr.mxu0 0.0
    %425 = vmatpush1.msra.mxu0 0.0
    %426 = vmatprep.subr.mxu0 0.0
    %427 = vmatpush1.msra.mxu0 0.0
    %428 = vmatprep.subr.mxu0 0.0
    %429 = vmatpush1.msra.mxu0 0.0
    %430 = vmatprep.subr.mxu0 0.0
    %431 = vmatpush1.msra.mxu0 0.0
    %432 = vmatprep.subr.mxu0 0.0
    %433 = vmatpush1.msra.mxu0 0.0
    %434 = vmatprep.subr.mxu0 0.0
    %435 = vmatpush1.msra.mxu0 0.0
    %436 = vmatprep.subr.mxu0 0.0
    %437 = vmatpush1.msra.mxu0 0.0
    %438 = vmatprep.subr.mxu0 0.0
    %439 = vmatpush1.msra.mxu0 0.0
    %440 = vmatprep.subr.mxu0 0.0
    %441 = vmatpush1.msra.mxu0 0.0
    %442 = vmatprep.subr.mxu0 0.0
    %443 = vmatpush1.msra.mxu0 0.0
    %444 = vmatprep.mubr.f32.mxu0 0.0
    %445 = vmatmul.mubr.f32.gmra.mrb[0].mxu0 %v378
    %v446 = vpop.f32.mrb[0].mxu0
    %v447 = vadd.f32 0.0, %v446
    %v448 = vpop.f32.mrb[0].mxu0
    %449 = vdwg.mxu0
    %v452 = vunpack.c.l.s4 1983009808
    %v453 = vunpack.c.0.s8 %v452
    %v454 = vlaneseq
    %v455 = vshrl.u32 %v454, 7
    %v456 = vsub.s32 %v453, %v455
    %v457 = vrot.slane %v376, %v456
    %458 = vrot.lane.b32.xlu0 %v457, 32
    %v459 = vpop.permute.xlu0 %458
    %v460 = vsel %vm269, %v459, 0
    %462 = vmatprep.subr.mxu0 0.0
    %463 = vmatpush1.msra.mxu0 %v48
    %464 = vmatprep.subr.mxu0 0.0
    %465 = vmatpush1.msra.mxu0 %v49
    %466 = vmatprep.subr.mxu0 0.0
    %467 = vmatpush1.msra.mxu0 %v50
    %468 = vmatprep.subr.mxu0 0.0
    %469 = vmatpush1.msra.mxu0 %v51
    %470 = vmatprep.subr.mxu0 0.0
    %471 = vmatpush1.msra.mxu0 0.0
    %472 = vmatprep.subr.mxu0 0.0
    %473 = vmatpush1.msra.mxu0 0.0
    %474 = vmatprep.subr.mxu0 0.0
    %475 = vmatpush1.msra.mxu0 0.0
    %476 = vmatprep.subr.mxu0 0.0
    %477 = vmatpush1.msra.mxu0 0.0
    %478 = vmatprep.subr.mxu0 0.0
    %479 = vmatpush1.msra.mxu0 0.0
    %480 = vmatprep.subr.mxu0 0.0
    %481 = vmatpush1.msra.mxu0 0.0
    %482 = vmatprep.subr.mxu0 0.0
    %483 = vmatpush1.msra.mxu0 0.0
    %484 = vmatprep.subr.mxu0 0.0
    %485 = vmatpush1.msra.mxu0 0.0
    %486 = vmatprep.subr.mxu0 0.0
    %487 = vmatpush1.msra.mxu0 0.0
    %488 = vmatprep.subr.mxu0 0.0
    %489 = vmatpush1.msra.mxu0 0.0
    %490 = vmatprep.subr.mxu0 0.0
    %491 = vmatpush1.msra.mxu0 0.0
    %492 = vmatprep.subr.mxu0 0.0
    %493 = vmatpush1.msra.mxu0 0.0
    %494 = vmatprep.subr.mxu0 0.0
    %495 = vmatpush1.msra.mxu0 0.0
    %496 = vmatprep.subr.mxu0 0.0
    %497 = vmatpush1.msra.mxu0 0.0
    %498 = vmatprep.subr.mxu0 0.0
    %499 = vmatpush1.msra.mxu0 0.0
    %500 = vmatprep.subr.mxu0 0.0
    %501 = vmatpush1.msra.mxu0 0.0
    %502 = vmatprep.subr.mxu0 0.0
    %503 = vmatpush1.msra.mxu0 0.0
    %504 = vmatprep.subr.mxu0 0.0
    %505 = vmatpush1.msra.mxu0 0.0
    %506 = vmatprep.subr.mxu0 0.0
    %507 = vmatpush1.msra.mxu0 0.0
    %508 = vmatprep.subr.mxu0 0.0
    %509 = vmatpush1.msra.mxu0 0.0
    %510 = vmatprep.subr.mxu0 0.0
    %511 = vmatpush1.msra.mxu0 0.0
    %512 = vmatprep.subr.mxu0 0.0
    %513 = vmatpush1.msra.mxu0 0.0
    %514 = vmatprep.subr.mxu0 0.0
    %515 = vmatpush1.msra.mxu0 0.0
    %516 = vmatprep.subr.mxu0 0.0
    %517 = vmatpush1.msra.mxu0 0.0
    %518 = vmatprep.subr.mxu0 0.0
    %519 = vmatpush1.msra.mxu0 0.0
    %520 = vmatprep.subr.mxu0 0.0
    %521 = vmatpush1.msra.mxu0 0.0
    %522 = vmatprep.subr.mxu0 0.0
    %523 = vmatpush1.msra.mxu0 0.0
    %524 = vmatprep.subr.mxu0 0.0
    %525 = vmatpush1.msra.mxu0 0.0
    %526 = vmatprep.mubr.f32.mxu0 0.0
    %527 = vmatmul.mubr.f32.gmra.mrb[0].mxu0 %v460
    %v528 = vpop.f32.mrb[0].mxu0
    %v529 = vadd.f32 %v447, %v528
    %v530 = vpop.f32.mrb[0].mxu0
    %531 = vdwg.mxu0
    %v532 = vadd.f32 %v529, %v69
    %v533 = vmul.f32 %v532, %v87
    %v534 = vtanh.pop %v533
    %v535 = vmul.f32 %v534, %v87
    %v536 = vadd.f32 %v535, %v88
    %538 = vrot.lane.b32.xlu0 %v94, 32
    %v539 = vpop.permute.xlu0 %538
    %v541 = vmul.f32 %v536, %v539
    %543 = vrot.lane.b32.xlu0 %v536, 64
    %v544 = vpop.permute.xlu0 %543
    %v546 = vmul.f32 %v536, %v544
    %548 = vrot.lane.b32.xlu0 %v546, 32
    %v549 = vpop.permute.xlu0 %548
    %v551 = vadd.f32 %v541, %v549
    %v552 = vtanh.pop %v551
    %554 = vrot.lane.b32.xlu0 %v552, 64
    %v555 = vpop.permute.xlu0 %554
    %v557 = vmul.f32 %v536, %v555
    %558 = vmatprep.subr.mxu0 0.0
    %559 = vmatpush1.msra.mxu0 %v43
    %560 = vmatprep.subr.mxu0 0.0
    %561 = vmatpush1.msra.mxu0 %v44
    %562 = vmatprep.subr.mxu0 0.0
    %563 = vmatpush1.msra.mxu0 %v45
    %564 = vmatprep.subr.mxu0 0.0
    %565 = vmatpush1.msra.mxu0 %v46
    %566 = vmatprep.subr.mxu0 0.0
    %567 = vmatpush1.msra.mxu0 0.0
    %568 = vmatprep.subr.mxu0 0.0
    %569 = vmatpush1.msra.mxu0 0.0
    %570 = vmatprep.subr.mxu0 0.0
    %571 = vmatpush1.msra.mxu0 0.0
    %572 = vmatprep.subr.mxu0 0.0
    %573 = vmatpush1.msra.mxu0 0.0
    %574 = vmatprep.subr.mxu0 0.0
    %575 = vmatpush1.msra.mxu0 0.0
    %576 = vmatprep.subr.mxu0 0.0
    %577 = vmatpush1.msra.mxu0 0.0
    %578 = vmatprep.subr.mxu0 0.0
    %579 = vmatpush1.msra.mxu0 0.0
    %580 = vmatprep.subr.mxu0 0.0
    %581 = vmatpush1.msra.mxu0 0.0
    %582 = vmatprep.subr.mxu0 0.0
    %583 = vmatpush1.msra.mxu0 0.0
    %584 = vmatprep.subr.mxu0 0.0
    %585 = vmatpush1.msra.mxu0 0.0
    %586 = vmatprep.subr.mxu0 0.0
    %587 = vmatpush1.msra.mxu0 0.0
    %588 = vmatprep.subr.mxu0 0.0
    %589 = vmatpush1.msra.mxu0 0.0
    %590 = vmatprep.subr.mxu0 0.0
    %591 = vmatpush1.msra.mxu0 0.0
    %592 = vmatprep.subr.mxu0 0.0
    %593 = vmatpush1.msra.mxu0 0.0
    %594 = vmatprep.subr.mxu0 0.0
    %595 = vmatpush1.msra.mxu0 0.0
    %596 = vmatprep.subr.mxu0 0.0
    %597 = vmatpush1.msra.mxu0 0.0
    %598 = vmatprep.subr.mxu0 0.0
    %599 = vmatpush1.msra.mxu0 0.0
    %600 = vmatprep.subr.mxu0 0.0
    %601 = vmatpush1.msra.mxu0 0.0
    %602 = vmatprep.subr.mxu0 0.0
    %603 = vmatpush1.msra.mxu0 0.0
    %604 = vmatprep.subr.mxu0 0.0
    %605 = vmatpush1.msra.mxu0 0.0
    %606 = vmatprep.subr.mxu0 0.0
    %607 = vmatpush1.msra.mxu0 0.0
    %608 = vmatprep.subr.mxu0 0.0
    %609 = vmatpush1.msra.mxu0 0.0
    %610 = vmatprep.subr.mxu0 0.0
    %611 = vmatpush1.msra.mxu0 0.0
    %612 = vmatprep.subr.mxu0 0.0
    %613 = vmatpush1.msra.mxu0 0.0
    %614 = vmatprep.subr.mxu0 0.0
    %615 = vmatpush1.msra.mxu0 0.0
    %616 = vmatprep.subr.mxu0 0.0
    %617 = vmatpush1.msra.mxu0 0.0
    %618 = vmatprep.subr.mxu0 0.0
    %619 = vmatpush1.msra.mxu0 0.0
    %620 = vmatprep.subr.mxu0 0.0
    %621 = vmatpush1.msra.mxu0 0.0
    %622 = vmatprep.mubr.f32.mxu0 0.0
    %623 = vmatmul.mubr.f32.gmra.mrb[0].mxu0 %v460
    %v624 = vpop.f32.mrb[0].mxu0
    %v625 = vadd.f32 0.0, %v624
    %v626 = vpop.f32.mrb[0].mxu0
    %627 = vdwg.mxu0
    %v628 = vadd.f32 %v242, %v625
    %v629 = vadd.f32 %v628, %v61
    %v630 = vmul.f32 %v629, %v87
    %v631 = vtanh.pop %v630
    %v632 = vmul.f32 %v631, %v87
    %v633 = vadd.f32 %v632, %v88
    %v634 = vmul.f32 %v633, %v370
    %636 = vrot.lane.b32.xlu0 %v633, 64
    %v637 = vpop.permute.xlu0 %636
    %v639 = vmul.f32 %v633, %v637
    %641 = vrot.lane.b32.xlu0 %v639, 32
    %v642 = vpop.permute.xlu0 %641
    %v644 = vadd.f32 %v634, %v642
    %v645 = vtanh.pop %v644
    %647 = vrot.lane.b32.xlu0 %v645, 64
    %v648 = vpop.permute.xlu0 %647
    %v650 = vmul.f32 %v633, %v648
    %652 = vrot.lane.b32.xlu0 %v557, 32
    %v653 = vpop.permute.xlu0 %652
    %v654 = vsel %vm269, %v653, 0
    %656 = vmatprep.subr.mxu0 0.0
    %657 = vmatpush1.msra.mxu0 %v52
    %658 = vmatprep.subr.mxu0 0.0
    %659 = vmatpush1.msra.mxu0 %v53
    %660 = vmatprep.subr.mxu0 0.0
    %661 = vmatpush1.msra.mxu0 %v54
    %662 = vmatprep.subr.mxu0 0.0
    %663 = vmatpush1.msra.mxu0 %v55
    %664 = vmatprep.subr.mxu0 0.0
    %665 = vmatpush1.msra.mxu0 0.0
    %666 = vmatprep.subr.mxu0 0.0
    %667 = vmatpush1.msra.mxu0 0.0
    %668 = vmatprep.subr.mxu0 0.0
    %669 = vmatpush1.msra.mxu0 0.0
    %670 = vmatprep.subr.mxu0 0.0
    %671 = vmatpush1.msra.mxu0 0.0
    %672 = vmatprep.subr.mxu0 0.0
    %673 = vmatpush1.msra.mxu0 0.0
    %674 = vmatprep.subr.mxu0 0.0
    %675 = vmatpush1.msra.mxu0 0.0
    %676 = vmatprep.subr.mxu0 0.0
    %677 = vmatpush1.msra.mxu0 0.0
    %678 = vmatprep.subr.mxu0 0.0
    %679 = vmatpush1.msra.mxu0 0.0
    %680 = vmatprep.subr.mxu0 0.0
    %681 = vmatpush1.msra.mxu0 0.0
    %682 = vmatprep.subr.mxu0 0.0
    %683 = vmatpush1.msra.mxu0 0.0
    %684 = vmatprep.subr.mxu0 0.0
    %685 = vmatpush1.msra.mxu0 0.0
    %686 = vmatprep.subr.mxu0 0.0
    %687 = vmatpush1.msra.mxu0 0.0
    %688 = vmatprep.subr.mxu0 0.0
    %689 = vmatpush1.msra.mxu0 0.0
    %690 = vmatprep.subr.mxu0 0.0
    %691 = vmatpush1.msra.mxu0 0.0
    %692 = vmatprep.subr.mxu0 0.0
    %693 = vmatpush1.msra.mxu0 0.0
    %694 = vmatprep.subr.mxu0 0.0
    %695 = vmatpush1.msra.mxu0 0.0
    %696 = vmatprep.subr.mxu0 0.0
    %697 = vmatpush1.msra.mxu0 0.0
    %698 = vmatprep.subr.mxu0 0.0
    %699 = vmatpush1.msra.mxu0 0.0
    %700 = vmatprep.subr.mxu0 0.0
    %701 = vmatpush1.msra.mxu0 0.0
    %702 = vmatprep.subr.mxu0 0.0
    %703 = vmatpush1.msra.mxu0 0.0
    %704 = vmatprep.subr.mxu0 0.0
    %705 = vmatpush1.msra.mxu0 0.0
    %706 = vmatprep.subr.mxu0 0.0
    %707 = vmatpush1.msra.mxu0 0.0
    %708 = vmatprep.subr.mxu0 0.0
    %709 = vmatpush1.msra.mxu0 0.0
    %710 = vmatprep.subr.mxu0 0.0
    %711 = vmatpush1.msra.mxu0 0.0
    %712 = vmatprep.subr.mxu0 0.0
    %713 = vmatpush1.msra.mxu0 0.0
    %714 = vmatprep.subr.mxu0 0.0
    %715 = vmatpush1.msra.mxu0 0.0
    %716 = vmatprep.subr.mxu0 0.0
    %717 = vmatpush1.msra.mxu0 0.0
    %718 = vmatprep.subr.mxu0 0.0
    %719 = vmatpush1.msra.mxu0 0.0
    %720 = vmatprep.mubr.f32.mxu0 0.0
    %721 = vmatmul.mubr.f32.gmra.mrb[0].mxu0 %v654
    %v722 = vpop.f32.mrb[0].mxu0
    %v723 = vadd.f32 0.0, %v722
    %v724 = vpop.f32.mrb[0].mxu0
    %725 = vdwg.mxu0
    %v728 = vunpack.c.l.s4 1983009808
    %v729 = vunpack.c.0.s8 %v728
    %v730 = vlaneseq
    %v731 = vshrl.u32 %v730, 7
    %v732 = vsub.s32 %v729, %v731
    %v733 = vrot.slane %v650, %v732
    %734 = vrot.lane.b32.xlu0 %v733, 32
    %v735 = vpop.permute.xlu0 %734
    %v736 = vsel %vm269, %v735, 0
    %738 = vmatprep.subr.mxu0 0.0
    %739 = vmatpush1.msra.mxu0 %v48
    %740 = vmatprep.subr.mxu0 0.0
    %741 = vmatpush1.msra.mxu0 %v49
    %742 = vmatprep.subr.mxu0 0.0
    %743 = vmatpush1.msra.mxu0 %v50
    %744 = vmatprep.subr.mxu0 0.0
    %745 = vmatpush1.msra.mxu0 %v51
    %746 = vmatprep.subr.mxu0 0.0
    %747 = vmatpush1.msra.mxu0 0.0
    %748 = vmatprep.subr.mxu0 0.0
    %749 = vmatpush1.msra.mxu0 0.0
    %750 = vmatprep.subr.mxu0 0.0
    %751 = vmatpush1.msra.mxu0 0.0
    %752 = vmatprep.subr.mxu0 0.0
    %753 = vmatpush1.msra.mxu0 0.0
    %754 = vmatprep.subr.mxu0 0.0
    %755 = vmatpush1.msra.mxu0 0.0
    %756 = vmatprep.subr.mxu0 0.0
    %757 = vmatpush1.msra.mxu0 0.0
    %758 = vmatprep.subr.mxu0 0.0
    %759 = vmatpush1.msra.mxu0 0.0
    %760 = vmatprep.subr.mxu0 0.0
    %761 = vmatpush1.msra.mxu0 0.0
    %762 = vmatprep.subr.mxu0 0.0
    %763 = vmatpush1.msra.mxu0 0.0
    %764 = vmatprep.subr.mxu0 0.0
    %765 = vmatpush1.msra.mxu0 0.0
    %766 = vmatprep.subr.mxu0 0.0
    %767 = vmatpush1.msra.mxu0 0.0
    %768 = vmatprep.subr.mxu0 0.0
    %769 = vmatpush1.msra.mxu0 0.0
    %770 = vmatprep.subr.mxu0 0.0
    %771 = vmatpush1.msra.mxu0 0.0
    %772 = vmatprep.subr.mxu0 0.0
    %773 = vmatpush1.msra.mxu0 0.0
    %774 = vmatprep.subr.mxu0 0.0
    %775 = vmatpush1.msra.mxu0 0.0
    %776 = vmatprep.subr.mxu0 0.0
    %777 = vmatpush1.msra.mxu0 0.0
    %778 = vmatprep.subr.mxu0 0.0
    %779 = vmatpush1.msra.mxu0 0.0
    %780 = vmatprep.subr.mxu0 0.0
    %781 = vmatpush1.msra.mxu0 0.0
    %782 = vmatprep.subr.mxu0 0.0
    %783 = vmatpush1.msra.mxu0 0.0
    %784 = vmatprep.subr.mxu0 0.0
    %785 = vmatpush1.msra.mxu0 0.0
    %786 = vmatprep.subr.mxu0 0.0
    %787 = vmatpush1.msra.mxu0 0.0
    %788 = vmatprep.subr.mxu0 0.0
    %789 = vmatpush1.msra.mxu0 0.0
    %790 = vmatprep.subr.mxu0 0.0
    %791 = vmatpush1.msra.mxu0 0.0
    %792 = vmatprep.subr.mxu0 0.0
    %793 = vmatpush1.msra.mxu0 0.0
    %794 = vmatprep.subr.mxu0 0.0
    %795 = vmatpush1.msra.mxu0 0.0
    %796 = vmatprep.subr.mxu0 0.0
    %797 = vmatpush1.msra.mxu0 0.0
    %798 = vmatprep.subr.mxu0 0.0
    %799 = vmatpush1.msra.mxu0 0.0
    %800 = vmatprep.subr.mxu0 0.0
    %801 = vmatpush1.msra.mxu0 0.0
    %802 = vmatprep.mubr.f32.mxu0 0.0
    %803 = vmatmul.mubr.f32.gmra.mrb[0].mxu0 %v736
    %v804 = vpop.f32.mrb[0].mxu0
    %v805 = vadd.f32 %v723, %v804
    %v806 = vpop.f32.mrb[0].mxu0
    %807 = vdwg.mxu0
    %v808 = vadd.f32 %v805, %v69
    %v809 = vmul.f32 %v808, %v87
    %v810 = vtanh.pop %v809
    %v811 = vmul.f32 %v810, %v87
    %v812 = vadd.f32 %v811, %v88
    %v813 = vmul.f32 %v812, %v551
    %815 = vrot.lane.b32.xlu0 %v812, 64
    %v816 = vpop.permute.xlu0 %815
    %v818 = vmul.f32 %v812, %v816
    %820 = vrot.lane.b32.xlu0 %v818, 32
    %v821 = vpop.permute.xlu0 %820
    %v823 = vadd.f32 %v813, %v821
    %v824 = vtanh.pop %v823
    %826 = vrot.lane.b32.xlu0 %v824, 64
    %v827 = vpop.permute.xlu0 %826
    %v829 = vmul.f32 %v812, %v827
    %830 = vmatprep.subr.mxu0 0.0
    %831 = vmatpush1.msra.mxu0 %v43
    %832 = vmatprep.subr.mxu0 0.0
    %833 = vmatpush1.msra.mxu0 %v44
    %834 = vmatprep.subr.mxu0 0.0
    %835 = vmatpush1.msra.mxu0 %v45
    %836 = vmatprep.subr.mxu0 0.0
    %837 = vmatpush1.msra.mxu0 %v46
    %838 = vmatprep.subr.mxu0 0.0
    %839 = vmatpush1.msra.mxu0 0.0
    %840 = vmatprep.subr.mxu0 0.0
    %841 = vmatpush1.msra.mxu0 0.0
    %842 = vmatprep.subr.mxu0 0.0
    %843 = vmatpush1.msra.mxu0 0.0
    %844 = vmatprep.subr.mxu0 0.0
    %845 = vmatpush1.msra.mxu0 0.0
    %846 = vmatprep.subr.mxu0 0.0
    %847 = vmatpush1.msra.mxu0 0.0
    %848 = vmatprep.subr.mxu0 0.0
    %849 = vmatpush1.msra.mxu0 0.0
    %850 = vmatprep.subr.mxu0 0.0
    %851 = vmatpush1.msra.mxu0 0.0
    %852 = vmatprep.subr.mxu0 0.0
    %853 = vmatpush1.msra.mxu0 0.0
    %854 = vmatprep.subr.mxu0 0.0
    %855 = vmatpush1.msra.mxu0 0.0
    %856 = vmatprep.subr.mxu0 0.0
    %857 = vmatpush1.msra.mxu0 0.0
    %858 = vmatprep.subr.mxu0 0.0
    %859 = vmatpush1.msra.mxu0 0.0
    %860 = vmatprep.subr.mxu0 0.0
    %861 = vmatpush1.msra.mxu0 0.0
    %862 = vmatprep.subr.mxu0 0.0
    %863 = vmatpush1.msra.mxu0 0.0
    %864 = vmatprep.subr.mxu0 0.0
    %865 = vmatpush1.msra.mxu0 0.0
    %866 = vmatprep.subr.mxu0 0.0
    %867 = vmatpush1.msra.mxu0 0.0
    %868 = vmatprep.subr.mxu0 0.0
    %869 = vmatpush1.msra.mxu0 0.0
    %870 = vmatprep.subr.mxu0 0.0
    %871 = vmatpush1.msra.mxu0 0.0
    %872 = vmatprep.subr.mxu0 0.0
    %873 = vmatpush1.msra.mxu0 0.0
    %874 = vmatprep.subr.mxu0 0.0
    %875 = vmatpush1.msra.mxu0 0.0
    %876 = vmatprep.subr.mxu0 0.0
    %877 = vmatpush1.msra.mxu0 0.0
    %878 = vmatprep.subr.mxu0 0.0
    %879 = vmatpush1.msra.mxu0 0.0
    %880 = vmatprep.subr.mxu0 0.0
    %881 = vmatpush1.msra.mxu0 0.0
    %882 = vmatprep.subr.mxu0 0.0
    %883 = vmatpush1.msra.mxu0 0.0
    %884 = vmatprep.subr.mxu0 0.0
    %885 = vmatpush1.msra.mxu0 0.0
    %886 = vmatprep.subr.mxu0 0.0
    %887 = vmatpush1.msra.mxu0 0.0
    %888 = vmatprep.subr.mxu0 0.0
    %889 = vmatpush1.msra.mxu0 0.0
    %890 = vmatprep.subr.mxu0 0.0
    %891 = vmatpush1.msra.mxu0 0.0
    %892 = vmatprep.subr.mxu0 0.0
    %893 = vmatpush1.msra.mxu0 0.0
    %894 = vmatprep.mubr.f32.mxu0 0.0
    %895 = vmatmul.mubr.f32.gmra.mrb[0].mxu0 %v736
    %v896 = vpop.f32.mrb[0].mxu0
    %v897 = vadd.f32 0.0, %v896
    %v898 = vpop.f32.mrb[0].mxu0
    %899 = vdwg.mxu0
    %v900 = vadd.f32 %v241, %v897
    %v901 = vadd.f32 %v900, %v61
    %v902 = vmul.f32 %v901, %v87
    %v903 = vtanh.pop %v902
    %v904 = vmul.f32 %v903, %v87
    %v905 = vadd.f32 %v904, %v88
    %v906 = vmul.f32 %v905, %v644
    %908 = vrot.lane.b32.xlu0 %v905, 64
    %v909 = vpop.permute.xlu0 %908
    %v911 = vmul.f32 %v905, %v909
    %913 = vrot.lane.b32.xlu0 %v911, 32
    %v914 = vpop.permute.xlu0 %913
    %v916 = vadd.f32 %v906, %v914
    %v917 = vtanh.pop %v916
    %919 = vrot.lane.b32.xlu0 %v917, 64
    %v920 = vpop.permute.xlu0 %919
    %v922 = vmul.f32 %v905, %v920
    %924 = vrot.lane.b32.xlu0 %v829, 32
    %v925 = vpop.permute.xlu0 %924
    %v926 = vsel %vm269, %v925, 0
    %928 = vmatprep.subr.mxu0 0.0
    %929 = vmatpush1.msra.mxu0 %v52
    %930 = vmatprep.subr.mxu0 0.0
    %931 = vmatpush1.msra.mxu0 %v53
    %932 = vmatprep.subr.mxu0 0.0
    %933 = vmatpush1.msra.mxu0 %v54
    %934 = vmatprep.subr.mxu0 0.0
    %935 = vmatpush1.msra.mxu0 %v55
    %936 = vmatprep.subr.mxu0 0.0
    %937 = vmatpush1.msra.mxu0 0.0
    %938 = vmatprep.subr.mxu0 0.0
    %939 = vmatpush1.msra.mxu0 0.0
    %940 = vmatprep.subr.mxu0 0.0
    %941 = vmatpush1.msra.mxu0 0.0
    %942 = vmatprep.subr.mxu0 0.0
    %943 = vmatpush1.msra.mxu0 0.0
    %944 = vmatprep.subr.mxu0 0.0
    %945 = vmatpush1.msra.mxu0 0.0
    %946 = vmatprep.subr.mxu0 0.0
    %947 = vmatpush1.msra.mxu0 0.0
    %948 = vmatprep.subr.mxu0 0.0
    %949 = vmatpush1.msra.mxu0 0.0
    %950 = vmatprep.subr.mxu0 0.0
    %951 = vmatpush1.msra.mxu0 0.0
    %952 = vmatprep.subr.mxu0 0.0
    %953 = vmatpush1.msra.mxu0 0.0
    %954 = vmatprep.subr.mxu0 0.0
    %955 = vmatpush1.msra.mxu0 0.0
    %956 = vmatprep.subr.mxu0 0.0
    %957 = vmatpush1.msra.mxu0 0.0
    %958 = vmatprep.subr.mxu0 0.0
    %959 = vmatpush1.msra.mxu0 0.0
    %960 = vmatprep.subr.mxu0 0.0
    %961 = vmatpush1.msra.mxu0 0.0
    %962 = vmatprep.subr.mxu0 0.0
    %963 = vmatpush1.msra.mxu0 0.0
    %964 = vmatprep.subr.mxu0 0.0
    %965 = vmatpush1.msra.mxu0 0.0
    %966 = vmatprep.subr.mxu0 0.0
    %967 = vmatpush1.msra.mxu0 0.0
    %968 = vmatprep.subr.mxu0 0.0
    %969 = vmatpush1.msra.mxu0 0.0
    %970 = vmatprep.subr.mxu0 0.0
    %971 = vmatpush1.msra.mxu0 0.0
    %972 = vmatprep.subr.mxu0 0.0
    %973 = vmatpush1.msra.mxu0 0.0
    %974 = vmatprep.subr.mxu0 0.0
    %975 = vmatpush1.msra.mxu0 0.0
    %976 = vmatprep.subr.mxu0 0.0
    %977 = vmatpush1.msra.mxu0 0.0
    %978 = vmatprep.subr.mxu0 0.0
    %979 = vmatpush1.msra.mxu0 0.0
    %980 = vmatprep.subr.mxu0 0.0
    %981 = vmatpush1.msra.mxu0 0.0
    %982 = vmatprep.subr.mxu0 0.0
    %983 = vmatpush1.msra.mxu0 0.0
    %984 = vmatprep.subr.mxu0 0.0
    %985 = vmatpush1.msra.mxu0 0.0
    %986 = vmatprep.subr.mxu0 0.0
    %987 = vmatpush1.msra.mxu0 0.0
    %988 = vmatprep.subr.mxu0 0.0
    %989 = vmatpush1.msra.mxu0 0.0
    %990 = vmatprep.subr.mxu0 0.0
    %991 = vmatpush1.msra.mxu0 0.0
    %992 = vmatprep.mubr.f32.mxu0 0.0
    %993 = vmatmul.mubr.f32.gmra.mrb[0].mxu0 %v926
    %v994 = vpop.f32.mrb[0].mxu0
    %v995 = vadd.f32 0.0, %v994
    %v996 = vpop.f32.mrb[0].mxu0
    %997 = vdwg.mxu0
    %v1000 = vunpack.c.l.s4 1983009808
    %v1001 = vunpack.c.0.s8 %v1000
    %v1002 = vlaneseq
    %v1003 = vshrl.u32 %v1002, 7
    %v1004 = vsub.s32 %v1001, %v1003
    %v1005 = vrot.slane %v922, %v1004
    %1006 = vrot.lane.b32.xlu0 %v1005, 32
    %v1007 = vpop.permute.xlu0 %1006
    %v1008 = vsel %vm269, %v1007, 0
    %1010 = vmatprep.subr.mxu0 0.0
    %1011 = vmatpush1.msra.mxu0 %v48
    %1012 = vmatprep.subr.mxu0 0.0
    %1013 = vmatpush1.msra.mxu0 %v49
    %1014 = vmatprep.subr.mxu0 0.0
    %1015 = vmatpush1.msra.mxu0 %v50
    %1016 = vmatprep.subr.mxu0 0.0
    %1017 = vmatpush1.msra.mxu0 %v51
    %1018 = vmatprep.subr.mxu0 0.0
    %1019 = vmatpush1.msra.mxu0 0.0
    %1020 = vmatprep.subr.mxu0 0.0
    %1021 = vmatpush1.msra.mxu0 0.0
    %1022 = vmatprep.subr.mxu0 0.0
    %1023 = vmatpush1.msra.mxu0 0.0
    %1024 = vmatprep.subr.mxu0 0.0
    %1025 = vmatpush1.msra.mxu0 0.0
    %1026 = vmatprep.subr.mxu0 0.0
    %1027 = vmatpush1.msra.mxu0 0.0
    %1028 = vmatprep.subr.mxu0 0.0
    %1029 = vmatpush1.msra.mxu0 0.0
    %1030 = vmatprep.subr.mxu0 0.0
    %1031 = vmatpush1.msra.mxu0 0.0
    %1032 = vmatprep.subr.mxu0 0.0
    %1033 = vmatpush1.msra.mxu0 0.0
    %1034 = vmatprep.subr.mxu0 0.0
    %1035 = vmatpush1.msra.mxu0 0.0
    %1036 = vmatprep.subr.mxu0 0.0
    %1037 = vmatpush1.msra.mxu0 0.0
    %1038 = vmatprep.subr.mxu0 0.0
    %1039 = vmatpush1.msra.mxu0 0.0
    %1040 = vmatprep.subr.mxu0 0.0
    %1041 = vmatpush1.msra.mxu0 0.0
    %1042 = vmatprep.subr.mxu0 0.0
    %1043 = vmatpush1.msra.mxu0 0.0
    %1044 = vmatprep.subr.mxu0 0.0
    %1045 = vmatpush1.msra.mxu0 0.0
    %1046 = vmatprep.subr.mxu0 0.0
    %1047 = vmatpush1.msra.mxu0 0.0
    %1048 = vmatprep.subr.mxu0 0.0
    %1049 = vmatpush1.msra.mxu0 0.0
    %1050 = vmatprep.subr.mxu0 0.0
    %1051 = vmatpush1.msra.mxu0 0.0
    %1052 = vmatprep.subr.mxu0 0.0
    %1053 = vmatpush1.msra.mxu0 0.0
    %1054 = vmatprep.subr.mxu0 0.0
    %1055 = vmatpush1.msra.mxu0 0.0
    %1056 = vmatprep.subr.mxu0 0.0
    %1057 = vmatpush1.msra.mxu0 0.0
    %1058 = vmatprep.subr.mxu0 0.0
    %1059 = vmatpush1.msra.mxu0 0.0
    %1060 = vmatprep.subr.mxu0 0.0
    %1061 = vmatpush1.msra.mxu0 0.0
    %1062 = vmatprep.subr.mxu0 0.0
    %1063 = vmatpush1.msra.mxu0 0.0
    %1064 = vmatprep.subr.mxu0 0.0
    %1065 = vmatpush1.msra.mxu0 0.0
    %1066 = vmatprep.subr.mxu0 0.0
    %1067 = vmatpush1.msra.mxu0 0.0
    %1068 = vmatprep.subr.mxu0 0.0
    %1069 = vmatpush1.msra.mxu0 0.0
    %1070 = vmatprep.subr.mxu0 0.0
    %1071 = vmatpush1.msra.mxu0 0.0
    %1072 = vmatprep.subr.mxu0 0.0
    %1073 = vmatpush1.msra.mxu0 0.0
    %1074 = vmatprep.mubr.f32.mxu0 0.0
    %1075 = vmatmul.mubr.f32.gmra.mrb[0].mxu0 %v1008
    %v1076 = vpop.f32.mrb[0].mxu0
    %v1077 = vadd.f32 %v995, %v1076
    %v1078 = vpop.f32.mrb[0].mxu0
    %1079 = vdwg.mxu0
    %v1080 = vadd.f32 %v1077, %v69
    %v1081 = vmul.f32 %v1080, %v87
    %v1082 = vtanh.pop %v1081
    %v1083 = vmul.f32 %v1082, %v87
    %v1084 = vadd.f32 %v1083, %v88
    %v1085 = vmul.f32 %v1084, %v823
    %1087 = vrot.lane.b32.xlu0 %v1084, 64
    %v1088 = vpop.permute.xlu0 %1087
    %v1090 = vmul.f32 %v1084, %v1088
    %1092 = vrot.lane.b32.xlu0 %v1090, 32
    %v1093 = vpop.permute.xlu0 %1092
    %v1095 = vadd.f32 %v1085, %v1093
    %v1096 = vtanh.pop %v1095
    %1098 = vrot.lane.b32.xlu0 %v1096, 64
    %v1099 = vpop.permute.xlu0 %1098
    %v1101 = vmul.f32 %v1084, %v1099
    %1102 = vmatprep.subr.mxu0 0.0
    %1103 = vmatpush1.msra.mxu0 %v43
    %1104 = vmatprep.subr.mxu0 0.0
    %1105 = vmatpush1.msra.mxu0 %v44
    %1106 = vmatprep.subr.mxu0 0.0
    %1107 = vmatpush1.msra.mxu0 %v45
    %1108 = vmatprep.subr.mxu0 0.0
    %1109 = vmatpush1.msra.mxu0 %v46
    %1110 = vmatprep.subr.mxu0 0.0
    %1111 = vmatpush1.msra.mxu0 0.0
    %1112 = vmatprep.subr.mxu0 0.0
    %1113 = vmatpush1.msra.mxu0 0.0
    %1114 = vmatprep.subr.mxu0 0.0
    %1115 = vmatpush1.msra.mxu0 0.0
    %1116 = vmatprep.subr.mxu0 0.0
    %1117 = vmatpush1.msra.mxu0 0.0
    %1118 = vmatprep.subr.mxu0 0.0
    %1119 = vmatpush1.msra.mxu0 0.0
    %1120 = vmatprep.subr.mxu0 0.0
    %1121 = vmatpush1.msra.mxu0 0.0
    %1122 = vmatprep.subr.mxu0 0.0
    %1123 = vmatpush1.msra.mxu0 0.0
    %1124 = vmatprep.subr.mxu0 0.0
    %1125 = vmatpush1.msra.mxu0 0.0
    %1126 = vmatprep.subr.mxu0 0.0
    %1127 = vmatpush1.msra.mxu0 0.0
    %1128 = vmatprep.subr.mxu0 0.0
    %1129 = vmatpush1.msra.mxu0 0.0
    %1130 = vmatprep.subr.mxu0 0.0
    %1131 = vmatpush1.msra.mxu0 0.0
    %1132 = vmatprep.subr.mxu0 0.0
    %1133 = vmatpush1.msra.mxu0 0.0
    %1134 = vmatprep.subr.mxu0 0.0
    %1135 = vmatpush1.msra.mxu0 0.0
    %1136 = vmatprep.subr.mxu0 0.0
    %1137 = vmatpush1.msra.mxu0 0.0
    %1138 = vmatprep.subr.mxu0 0.0
    %1139 = vmatpush1.msra.mxu0 0.0
    %1140 = vmatprep.subr.mxu0 0.0
    %1141 = vmatpush1.msra.mxu0 0.0
    %1142 = vmatprep.subr.mxu0 0.0
    %1143 = vmatpush1.msra.mxu0 0.0
    %1144 = vmatprep.subr.mxu0 0.0
    %1145 = vmatpush1.msra.mxu0 0.0
    %1146 = vmatprep.subr.mxu0 0.0
    %1147 = vmatpush1.msra.mxu0 0.0
    %1148 = vmatprep.subr.mxu0 0.0
    %1149 = vmatpush1.msra.mxu0 0.0
    %1150 = vmatprep.subr.mxu0 0.0
    %1151 = vmatpush1.msra.mxu0 0.0
    %1152 = vmatprep.subr.mxu0 0.0
    %1153 = vmatpush1.msra.mxu0 0.0
    %1154 = vmatprep.subr.mxu0 0.0
    %1155 = vmatpush1.msra.mxu0 0.0
    %1156 = vmatprep.subr.mxu0 0.0
    %1157 = vmatpush1.msra.mxu0 0.0
    %1158 = vmatprep.subr.mxu0 0.0
    %1159 = vmatpush1.msra.mxu0 0.0
    %1160 = vmatprep.subr.mxu0 0.0
    %1161 = vmatpush1.msra.mxu0 0.0
    %1162 = vmatprep.subr.mxu0 0.0
    %1163 = vmatpush1.msra.mxu0 0.0
    %1164 = vmatprep.subr.mxu0 0.0
    %1165 = vmatpush1.msra.mxu0 0.0
    %1166 = vmatprep.mubr.f32.mxu0 0.0
    %1167 = vmatmul.mubr.f32.gmra.mrb[0].mxu0 %v1008
    %v1168 = vpop.f32.mrb[0].mxu0
    %v1169 = vadd.f32 0.0, %v1168
    %v1170 = vpop.f32.mrb[0].mxu0
    %1171 = vdwg.mxu0
    %v1172 = vadd.f32 %v243, %v1169
    %v1173 = vadd.f32 %v1172, %v61
    %v1174 = vmul.f32 %v1173, %v87
    %v1175 = vtanh.pop %v1174
    %v1176 = vmul.f32 %v1175, %v87
    %v1177 = vadd.f32 %v1176, %v88
    %v1178 = vmul.f32 %v1177, %v916
    %1180 = vrot.lane.b32.xlu0 %v1177, 64
    %v1181 = vpop.permute.xlu0 %1180
    %v1183 = vmul.f32 %v1177, %v1181
    %1185 = vrot.lane.b32.xlu0 %v1183, 32
    %v1186 = vpop.permute.xlu0 %1185
    %v1188 = vadd.f32 %v1178, %v1186
    %v1189 = vtanh.pop %v1188
    %1191 = vrot.lane.b32.xlu0 %v1189, 64
    %v1192 = vpop.permute.xlu0 %1191
    %v1194 = vmul.f32 %v1177, %v1192
    %1196 = vrot.lane.b32.xlu0 %v1101, 32
    %v1197 = vpop.permute.xlu0 %1196
    %v1198 = vsel %vm269, %v1197, 0
    %1200 = vmatprep.subr.mxu0 0.0
    %1201 = vmatpush1.msra.mxu0 %v52
    %1202 = vmatprep.subr.mxu0 0.0
    %1203 = vmatpush1.msra.mxu0 %v53
    %1204 = vmatprep.subr.mxu0 0.0
    %1205 = vmatpush1.msra.mxu0 %v54
    %1206 = vmatprep.subr.mxu0 0.0
    %1207 = vmatpush1.msra.mxu0 %v55
    %1208 = vmatprep.subr.mxu0 0.0
    %1209 = vmatpush1.msra.mxu0 0.0
    %1210 = vmatprep.subr.mxu0 0.0
    %1211 = vmatpush1.msra.mxu0 0.0
    %1212 = vmatprep.subr.mxu0 0.0
    %1213 = vmatpush1.msra.mxu0 0.0
    %1214 = vmatprep.subr.mxu0 0.0
    %1215 = vmatpush1.msra.mxu0 0.0
    %1216 = vmatprep.subr.mxu0 0.0
    %1217 = vmatpush1.msra.mxu0 0.0
    %1218 = vmatprep.subr.mxu0 0.0
    %1219 = vmatpush1.msra.mxu0 0.0
    %1220 = vmatprep.subr.mxu0 0.0
    %1221 = vmatpush1.msra.mxu0 0.0
    %1222 = vmatprep.subr.mxu0 0.0
    %1223 = vmatpush1.msra.mxu0 0.0
    %1224 = vmatprep.subr.mxu0 0.0
    %1225 = vmatpush1.msra.mxu0 0.0
    %1226 = vmatprep.subr.mxu0 0.0
    %1227 = vmatpush1.msra.mxu0 0.0
    %1228 = vmatprep.subr.mxu0 0.0
    %1229 = vmatpush1.msra.mxu0 0.0
    %1230 = vmatprep.subr.mxu0 0.0
    %1231 = vmatpush1.msra.mxu0 0.0
    %1232 = vmatprep.subr.mxu0 0.0
    %1233 = vmatpush1.msra.mxu0 0.0
    %1234 = vmatprep.subr.mxu0 0.0
    %1235 = vmatpush1.msra.mxu0 0.0
    %1236 = vmatprep.subr.mxu0 0.0
    %1237 = vmatpush1.msra.mxu0 0.0
    %1238 = vmatprep.subr.mxu0 0.0
    %1239 = vmatpush1.msra.mxu0 0.0
    %1240 = vmatprep.subr.mxu0 0.0
    %1241 = vmatpush1.msra.mxu0 0.0
    %1242 = vmatprep.subr.mxu0 0.0
    %1243 = vmatpush1.msra.mxu0 0.0
    %1244 = vmatprep.subr.mxu0 0.0
    %1245 = vmatpush1.msra.mxu0 0.0
    %1246 = vmatprep.subr.mxu0 0.0
    %1247 = vmatpush1.msra.mxu0 0.0
    %1248 = vmatprep.subr.mxu0 0.0
    %1249 = vmatpush1.msra.mxu0 0.0
    %1250 = vmatprep.subr.mxu0 0.0
    %1251 = vmatpush1.msra.mxu0 0.0
    %1252 = vmatprep.subr.mxu0 0.0
    %1253 = vmatpush1.msra.mxu0 0.0
    %1254 = vmatprep.subr.mxu0 0.0
    %1255 = vmatpush1.msra.mxu0 0.0
    %1256 = vmatprep.subr.mxu0 0.0
    %1257 = vmatpush1.msra.mxu0 0.0
    %1258 = vmatprep.subr.mxu0 0.0
    %1259 = vmatpush1.msra.mxu0 0.0
    %1260 = vmatprep.subr.mxu0 0.0
    %1261 = vmatpush1.msra.mxu0 0.0
    %1262 = vmatprep.subr.mxu0 0.0
    %1263 = vmatpush1.msra.mxu0 0.0
    %1264 = vmatprep.mubr.f32.mxu0 0.0
    %1265 = vmatmul.mubr.f32.gmra.mrb[0].mxu0 %v1198
    %v1266 = vpop.f32.mrb[0].mxu0
    %v1267 = vadd.f32 0.0, %v1266
    %v1268 = vpop.f32.mrb[0].mxu0
    %1269 = vdwg.mxu0
    %v1272 = vunpack.c.l.s4 1983009808
    %v1273 = vunpack.c.0.s8 %v1272
    %v1274 = vlaneseq
    %v1275 = vshrl.u32 %v1274, 7
    %v1276 = vsub.s32 %v1273, %v1275
    %v1277 = vrot.slane %v1194, %v1276
    %1278 = vrot.lane.b32.xlu0 %v1277, 32
    %v1279 = vpop.permute.xlu0 %1278
    %v1280 = vsel %vm269, %v1279, 0
    %1282 = vmatprep.subr.mxu0 0.0
    %1283 = vmatpush1.msra.mxu0 %v48
    %1284 = vmatprep.subr.mxu0 0.0
    %1285 = vmatpush1.msra.mxu0 %v49
    %1286 = vmatprep.subr.mxu0 0.0
    %1287 = vmatpush1.msra.mxu0 %v50
    %1288 = vmatprep.subr.mxu0 0.0
    %1289 = vmatpush1.msra.mxu0 %v51
    %1290 = vmatprep.subr.mxu0 0.0
    %1291 = vmatpush1.msra.mxu0 0.0
    %1292 = vmatprep.subr.mxu0 0.0
    %1293 = vmatpush1.msra.mxu0 0.0
    %1294 = vmatprep.subr.mxu0 0.0
    %1295 = vmatpush1.msra.mxu0 0.0
    %1296 = vmatprep.subr.mxu0 0.0
    %1297 = vmatpush1.msra.mxu0 0.0
    %1298 = vmatprep.subr.mxu0 0.0
    %1299 = vmatpush1.msra.mxu0 0.0
    %1300 = vmatprep.subr.mxu0 0.0
    %1301 = vmatpush1.msra.mxu0 0.0
    %1302 = vmatprep.subr.mxu0 0.0
    %1303 = vmatpush1.msra.mxu0 0.0
    %1304 = vmatprep.subr.mxu0 0.0
    %1305 = vmatpush1.msra.mxu0 0.0
    %1306 = vmatprep.subr.mxu0 0.0
    %1307 = vmatpush1.msra.mxu0 0.0
    %1308 = vmatprep.subr.mxu0 0.0
    %1309 = vmatpush1.msra.mxu0 0.0
    %1310 = vmatprep.subr.mxu0 0.0
    %1311 = vmatpush1.msra.mxu0 0.0
    %1312 = vmatprep.subr.mxu0 0.0
    %1313 = vmatpush1.msra.mxu0 0.0
    %1314 = vmatprep.subr.mxu0 0.0
    %1315 = vmatpush1.msra.mxu0 0.0
    %1316 = vmatprep.subr.mxu0 0.0
    %1317 = vmatpush1.msra.mxu0 0.0
    %1318 = vmatprep.subr.mxu0 0.0
    %1319 = vmatpush1.msra.mxu0 0.0
    %1320 = vmatprep.subr.mxu0 0.0
    %1321 = vmatpush1.msra.mxu0 0.0
    %1322 = vmatprep.subr.mxu0 0.0
    %1323 = vmatpush1.msra.mxu0 0.0
    %1324 = vmatprep.subr.mxu0 0.0
    %1325 = vmatpush1.msra.mxu0 0.0
    %1326 = vmatprep.subr.mxu0 0.0
    %1327 = vmatpush1.msra.mxu0 0.0
    %1328 = vmatprep.subr.mxu0 0.0
    %1329 = vmatpush1.msra.mxu0 0.0
    %1330 = vmatprep.subr.mxu0 0.0
    %1331 = vmatpush1.msra.mxu0 0.0
    %1332 = vmatprep.subr.mxu0 0.0
    %1333 = vmatpush1.msra.mxu0 0.0
    %1334 = vmatprep.subr.mxu0 0.0
    %1335 = vmatpush1.msra.mxu0 0.0
    %1336 = vmatprep.subr.mxu0 0.0
    %1337 = vmatpush1.msra.mxu0 0.0
    %1338 = vmatprep.subr.mxu0 0.0
    %1339 = vmatpush1.msra.mxu0 0.0
    %1340 = vmatprep.subr.mxu0 0.0
    %1341 = vmatpush1.msra.mxu0 0.0
    %1342 = vmatprep.subr.mxu0 0.0
    %1343 = vmatpush1.msra.mxu0 0.0
    %1344 = vmatprep.subr.mxu0 0.0
    %1345 = vmatpush1.msra.mxu0 0.0
    %1346 = vmatprep.mubr.f32.mxu0 0.0
    %1347 = vmatmul.mubr.f32.gmra.mrb[0].mxu0 %v1280
    %v1348 = vpop.f32.mrb[0].mxu0
    %v1349 = vadd.f32 %v1267, %v1348
    %v1350 = vpop.f32.mrb[0].mxu0
    %1351 = vdwg.mxu0
    %v1352 = vadd.f32 %v1349, %v69
    %v1353 = vmul.f32 %v1352, %v87
    %v1354 = vtanh.pop %v1353
    %v1355 = vmul.f32 %v1354, %v87
    %v1356 = vadd.f32 %v1355, %v88
    %v1357 = vmul.f32 %v1356, %v1095
    %1359 = vrot.lane.b32.xlu0 %v1356, 64
    %v1360 = vpop.permute.xlu0 %1359
    %v1362 = vmul.f32 %v1356, %v1360
    %1364 = vrot.lane.b32.xlu0 %v1362, 32
    %v1365 = vpop.permute.xlu0 %1364
    %v1367 = vadd.f32 %v1357, %v1365
    %v1368 = vtanh.pop %v1367
    %1370 = vrot.lane.b32.xlu0 %v1368, 64
    %v1371 = vpop.permute.xlu0 %1370
    %v1373 = vmul.f32 %v1356, %v1371
    %1374 = vmatprep.subr.mxu0 0.0
    %1375 = vmatpush1.msra.mxu0 %v43
    %1376 = vmatprep.subr.mxu0 0.0
    %1377 = vmatpush1.msra.mxu0 %v44
    %1378 = vmatprep.subr.mxu0 0.0
    %1379 = vmatpush1.msra.mxu0 %v45
    %1380 = vmatprep.subr.mxu0 0.0
    %1381 = vmatpush1.msra.mxu0 %v46
    %1382 = vmatprep.subr.mxu0 0.0
    %1383 = vmatpush1.msra.mxu0 0.0
    %1384 = vmatprep.subr.mxu0 0.0
    %1385 = vmatpush1.msra.mxu0 0.0
    %1386 = vmatprep.subr.mxu0 0.0
    %1387 = vmatpush1.msra.mxu0 0.0
    %1388 = vmatprep.subr.mxu0 0.0
    %1389 = vmatpush1.msra.mxu0 0.0
    %1390 = vmatprep.subr.mxu0 0.0
    %1391 = vmatpush1.msra.mxu0 0.0
    %1392 = vmatprep.subr.mxu0 0.0
    %1393 = vmatpush1.msra.mxu0 0.0
    %1394 = vmatprep.subr.mxu0 0.0
    %1395 = vmatpush1.msra.mxu0 0.0
    %1396 = vmatprep.subr.mxu0 0.0
    %1397 = vmatpush1.msra.mxu0 0.0
    %1398 = vmatprep.subr.mxu0 0.0
    %1399 = vmatpush1.msra.mxu0 0.0
    %1400 = vmatprep.subr.mxu0 0.0
    %1401 = vmatpush1.msra.mxu0 0.0
    %1402 = vmatprep.subr.mxu0 0.0
    %1403 = vmatpush1.msra.mxu0 0.0
    %1404 = vmatprep.subr.mxu0 0.0
    %1405 = vmatpush1.msra.mxu0 0.0
    %1406 = vmatprep.subr.mxu0 0.0
    %1407 = vmatpush1.msra.mxu0 0.0
    %1408 = vmatprep.subr.mxu0 0.0
    %1409 = vmatpush1.msra.mxu0 0.0
    %1410 = vmatprep.subr.mxu0 0.0
    %1411 = vmatpush1.msra.mxu0 0.0
    %1412 = vmatprep.subr.mxu0 0.0
    %1413 = vmatpush1.msra.mxu0 0.0
    %1414 = vmatprep.subr.mxu0 0.0
    %1415 = vmatpush1.msra.mxu0 0.0
    %1416 = vmatprep.subr.mxu0 0.0
    %1417 = vmatpush1.msra.mxu0 0.0
    %1418 = vmatprep.subr.mxu0 0.0
    %1419 = vmatpush1.msra.mxu0 0.0
    %1420 = vmatprep.subr.mxu0 0.0
    %1421 = vmatpush1.msra.mxu0 0.0
    %1422 = vmatprep.subr.mxu0 0.0
    %1423 = vmatpush1.msra.mxu0 0.0
    %1424 = vmatprep.subr.mxu0 0.0
    %1425 = vmatpush1.msra.mxu0 0.0
    %1426 = vmatprep.subr.mxu0 0.0
    %1427 = vmatpush1.msra.mxu0 0.0
    %1428 = vmatprep.subr.mxu0 0.0
    %1429 = vmatpush1.msra.mxu0 0.0
    %1430 = vmatprep.subr.mxu0 0.0
    %1431 = vmatpush1.msra.mxu0 0.0
    %1432 = vmatprep.subr.mxu0 0.0
    %1433 = vmatpush1.msra.mxu0 0.0
    %1434 = vmatprep.subr.mxu0 0.0
    %1435 = vmatpush1.msra.mxu0 0.0
    %1436 = vmatprep.subr.mxu0 0.0
    %1437 = vmatpush1.msra.mxu0 0.0
    %1438 = vmatprep.mubr.f32.mxu0 0.0
    %1439 = vmatmul.mubr.f32.gmra.mrb[0].mxu0 %v1280
    %v1440 = vpop.f32.mrb[0].mxu0
    %v1441 = vadd.f32 0.0, %v1440
    %v1442 = vpop.f32.mrb[0].mxu0
    %1443 = vdwg.mxu0
    %v1444 = vadd.f32 %v251, %v1441
    %v1445 = vadd.f32 %v1444, %v61
    %v1446 = vmul.f32 %v1445, %v87
    %v1447 = vtanh.pop %v1446
    %v1448 = vmul.f32 %v1447, %v87
    %v1449 = vadd.f32 %v1448, %v88
    %v1450 = vmul.f32 %v1449, %v1188
    %1452 = vrot.lane.b32.xlu0 %v1449, 64
    %v1453 = vpop.permute.xlu0 %1452
    %v1455 = vmul.f32 %v1449, %v1453
    %1457 = vrot.lane.b32.xlu0 %v1455, 32
    %v1458 = vpop.permute.xlu0 %1457
    %v1460 = vadd.f32 %v1450, %v1458
    %v1461 = vtanh.pop %v1460
    %1463 = vrot.lane.b32.xlu0 %v1461, 64
    %v1464 = vpop.permute.xlu0 %1463
    %v1466 = vmul.f32 %v1449, %v1464
    %1468 = vrot.lane.b32.xlu0 %v1373, 32
    %v1469 = vpop.permute.xlu0 %1468
    %v1470 = vsel %vm269, %v1469, 0
    %1472 = vmatprep.subr.mxu0 0.0
    %1473 = vmatpush1.msra.mxu0 %v52
    %1474 = vmatprep.subr.mxu0 0.0
    %1475 = vmatpush1.msra.mxu0 %v53
    %1476 = vmatprep.subr.mxu0 0.0
    %1477 = vmatpush1.msra.mxu0 %v54
    %1478 = vmatprep.subr.mxu0 0.0
    %1479 = vmatpush1.msra.mxu0 %v55
    %1480 = vmatprep.subr.mxu0 0.0
    %1481 = vmatpush1.msra.mxu0 0.0
    %1482 = vmatprep.subr.mxu0 0.0
    %1483 = vmatpush1.msra.mxu0 0.0
    %1484 = vmatprep.subr.mxu0 0.0
    %1485 = vmatpush1.msra.mxu0 0.0
    %1486 = vmatprep.subr.mxu0 0.0
    %1487 = vmatpush1.msra.mxu0 0.0
    %1488 = vmatprep.subr.mxu0 0.0
    %1489 = vmatpush1.msra.mxu0 0.0
    %1490 = vmatprep.subr.mxu0 0.0
    %1491 = vmatpush1.msra.mxu0 0.0
    %1492 = vmatprep.subr.mxu0 0.0
    %1493 = vmatpush1.msra.mxu0 0.0
    %1494 = vmatprep.subr.mxu0 0.0
    %1495 = vmatpush1.msra.mxu0 0.0
    %1496 = vmatprep.subr.mxu0 0.0
    %1497 = vmatpush1.msra.mxu0 0.0
    %1498 = vmatprep.subr.mxu0 0.0
    %1499 = vmatpush1.msra.mxu0 0.0
    %1500 = vmatprep.subr.mxu0 0.0
    %1501 = vmatpush1.msra.mxu0 0.0
    %1502 = vmatprep.subr.mxu0 0.0
    %1503 = vmatpush1.msra.mxu0 0.0
    %1504 = vmatprep.subr.mxu0 0.0
    %1505 = vmatpush1.msra.mxu0 0.0
    %1506 = vmatprep.subr.mxu0 0.0
    %1507 = vmatpush1.msra.mxu0 0.0
    %1508 = vmatprep.subr.mxu0 0.0
    %1509 = vmatpush1.msra.mxu0 0.0
    %1510 = vmatprep.subr.mxu0 0.0
    %1511 = vmatpush1.msra.mxu0 0.0
    %1512 = vmatprep.subr.mxu0 0.0
    %1513 = vmatpush1.msra.mxu0 0.0
    %1514 = vmatprep.subr.mxu0 0.0
    %1515 = vmatpush1.msra.mxu0 0.0
    %1516 = vmatprep.subr.mxu0 0.0
    %1517 = vmatpush1.msra.mxu0 0.0
    %1518 = vmatprep.subr.mxu0 0.0
    %1519 = vmatpush1.msra.mxu0 0.0
    %1520 = vmatprep.subr.mxu0 0.0
    %1521 = vmatpush1.msra.mxu0 0.0
    %1522 = vmatprep.subr.mxu0 0.0
    %1523 = vmatpush1.msra.mxu0 0.0
    %1524 = vmatprep.subr.mxu0 0.0
    %1525 = vmatpush1.msra.mxu0 0.0
    %1526 = vmatprep.subr.mxu0 0.0
    %1527 = vmatpush1.msra.mxu0 0.0
    %1528 = vmatprep.subr.mxu0 0.0
    %1529 = vmatpush1.msra.mxu0 0.0
    %1530 = vmatprep.subr.mxu0 0.0
    %1531 = vmatpush1.msra.mxu0 0.0
    %1532 = vmatprep.subr.mxu0 0.0
    %1533 = vmatpush1.msra.mxu0 0.0
    %1534 = vmatprep.subr.mxu0 0.0
    %1535 = vmatpush1.msra.mxu0 0.0
    %1536 = vmatprep.mubr.f32.mxu0 0.0
    %1537 = vmatmul.mubr.f32.gmra.mrb[0].mxu0 %v1470
    %v1538 = vpop.f32.mrb[0].mxu0
    %v1539 = vadd.f32 0.0, %v1538
    %v1540 = vpop.f32.mrb[0].mxu0
    %1541 = vdwg.mxu0
    %v1544 = vunpack.c.l.s4 1983009808
    %v1545 = vunpack.c.0.s8 %v1544
    %v1546 = vlaneseq
    %v1547 = vshrl.u32 %v1546, 7
    %v1548 = vsub.s32 %v1545, %v1547
    %v1549 = vrot.slane %v1466, %v1548
    %1550 = vrot.lane.b32.xlu0 %v1549, 32
    %v1551 = vpop.permute.xlu0 %1550
    %v1552 = vsel %vm269, %v1551, 0
    %1554 = vmatprep.subr.mxu0 0.0
    %1555 = vmatpush1.msra.mxu0 %v48
    %1556 = vmatprep.subr.mxu0 0.0
    %1557 = vmatpush1.msra.mxu0 %v49
    %1558 = vmatprep.subr.mxu0 0.0
    %1559 = vmatpush1.msra.mxu0 %v50
    %1560 = vmatprep.subr.mxu0 0.0
    %1561 = vmatpush1.msra.mxu0 %v51
    %1562 = vmatprep.subr.mxu0 0.0
    %1563 = vmatpush1.msra.mxu0 0.0
    %1564 = vmatprep.subr.mxu0 0.0
    %1565 = vmatpush1.msra.mxu0 0.0
    %1566 = vmatprep.subr.mxu0 0.0
    %1567 = vmatpush1.msra.mxu0 0.0
    %1568 = vmatprep.subr.mxu0 0.0
    %1569 = vmatpush1.msra.mxu0 0.0
    %1570 = vmatprep.subr.mxu0 0.0
    %1571 = vmatpush1.msra.mxu0 0.0
    %1572 = vmatprep.subr.mxu0 0.0
    %1573 = vmatpush1.msra.mxu0 0.0
    %1574 = vmatprep.subr.mxu0 0.0
    %1575 = vmatpush1.msra.mxu0 0.0
    %1576 = vmatprep.subr.mxu0 0.0
    %1577 = vmatpush1.msra.mxu0 0.0
    %1578 = vmatprep.subr.mxu0 0.0
    %1579 = vmatpush1.msra.mxu0 0.0
    %1580 = vmatprep.subr.mxu0 0.0
    %1581 = vmatpush1.msra.mxu0 0.0
    %1582 = vmatprep.subr.mxu0 0.0
    %1583 = vmatpush1.msra.mxu0 0.0
    %1584 = vmatprep.subr.mxu0 0.0
    %1585 = vmatpush1.msra.mxu0 0.0
    %1586 = vmatprep.subr.mxu0 0.0
    %1587 = vmatpush1.msra.mxu0 0.0
    %1588 = vmatprep.subr.mxu0 0.0
    %1589 = vmatpush1.msra.mxu0 0.0
    %1590 = vmatprep.subr.mxu0 0.0
    %1591 = vmatpush1.msra.mxu0 0.0
    %1592 = vmatprep.subr.mxu0 0.0
    %1593 = vmatpush1.msra.mxu0 0.0
    %1594 = vmatprep.subr.mxu0 0.0
    %1595 = vmatpush1.msra.mxu0 0.0
    %1596 = vmatprep.subr.mxu0 0.0
    %1597 = vmatpush1.msra.mxu0 0.0
    %1598 = vmatprep.subr.mxu0 0.0
    %1599 = vmatpush1.msra.mxu0 0.0
    %1600 = vmatprep.subr.mxu0 0.0
    %1601 = vmatpush1.msra.mxu0 0.0
    %1602 = vmatprep.subr.mxu0 0.0
    %1603 = vmatpush1.msra.mxu0 0.0
    %1604 = vmatprep.subr.mxu0 0.0
    %1605 = vmatpush1.msra.mxu0 0.0
    %1606 = vmatprep.subr.mxu0 0.0
    %1607 = vmatpush1.msra.mxu0 0.0
    %1608 = vmatprep.subr.mxu0 0.0
    %1609 = vmatpush1.msra.mxu0 0.0
    %1610 = vmatprep.subr.mxu0 0.0
    %1611 = vmatpush1.msra.mxu0 0.0
    %1612 = vmatprep.subr.mxu0 0.0
    %1613 = vmatpush1.msra.mxu0 0.0
    %1614 = vmatprep.subr.mxu0 0.0
    %1615 = vmatpush1.msra.mxu0 0.0
    %1616 = vmatprep.subr.mxu0 0.0
    %1617 = vmatpush1.msra.mxu0 0.0
    %1618 = vmatprep.mubr.f32.mxu0 0.0
    %1619 = vmatmul.mubr.f32.gmra.mrb[0].mxu0 %v1552
    %v1620 = vpop.f32.mrb[0].mxu0
    %v1621 = vadd.f32 %v1539, %v1620
    %v1622 = vpop.f32.mrb[0].mxu0
    %1623 = vdwg.mxu0
    %v1624 = vadd.f32 %v1621, %v69
    %v1625 = vmul.f32 %v1624, %v87
    %v1626 = vtanh.pop %v1625
    %v1627 = vmul.f32 %v1626, %v87
    %v1628 = vadd.f32 %v1627, %v88
    %v1629 = vmul.f32 %v1628, %v1367
    %1631 = vrot.lane.b32.xlu0 %v1628, 64
    %v1632 = vpop.permute.xlu0 %1631
    %v1634 = vmul.f32 %v1628, %v1632
    %1636 = vrot.lane.b32.xlu0 %v1634, 32
    %v1637 = vpop.permute.xlu0 %1636
    %v1639 = vadd.f32 %v1629, %v1637
    %v1640 = vtanh.pop %v1639
    %1642 = vrot.lane.b32.xlu0 %v1640, 64
    %v1643 = vpop.permute.xlu0 %1642
    %v1645 = vmul.f32 %v1628, %v1643
    %1646 = vmatprep.subr.mxu0 0.0
    %1647 = vmatpush1.msra.mxu0 %v43
    %1648 = vmatprep.subr.mxu0 0.0
    %1649 = vmatpush1.msra.mxu0 %v44
    %1650 = vmatprep.subr.mxu0 0.0
    %1651 = vmatpush1.msra.mxu0 %v45
    %1652 = vmatprep.subr.mxu0 0.0
    %1653 = vmatpush1.msra.mxu0 %v46
    %1654 = vmatprep.subr.mxu0 0.0
    %1655 = vmatpush1.msra.mxu0 0.0
    %1656 = vmatprep.subr.mxu0 0.0
    %1657 = vmatpush1.msra.mxu0 0.0
    %1658 = vmatprep.subr.mxu0 0.0
    %1659 = vmatpush1.msra.mxu0 0.0
    %1660 = vmatprep.subr.mxu0 0.0
    %1661 = vmatpush1.msra.mxu0 0.0
    %1662 = vmatprep.subr.mxu0 0.0
    %1663 = vmatpush1.msra.mxu0 0.0
    %1664 = vmatprep.subr.mxu0 0.0
    %1665 = vmatpush1.msra.mxu0 0.0
    %1666 = vmatprep.subr.mxu0 0.0
    %1667 = vmatpush1.msra.mxu0 0.0
    %1668 = vmatprep.subr.mxu0 0.0
    %1669 = vmatpush1.msra.mxu0 0.0
    %1670 = vmatprep.subr.mxu0 0.0
    %1671 = vmatpush1.msra.mxu0 0.0
    %1672 = vmatprep.subr.mxu0 0.0
    %1673 = vmatpush1.msra.mxu0 0.0
    %1674 = vmatprep.subr.mxu0 0.0
    %1675 = vmatpush1.msra.mxu0 0.0
    %1676 = vmatprep.subr.mxu0 0.0
    %1677 = vmatpush1.msra.mxu0 0.0
    %1678 = vmatprep.subr.mxu0 0.0
    %1679 = vmatpush1.msra.mxu0 0.0
    %1680 = vmatprep.subr.mxu0 0.0
    %1681 = vmatpush1.msra.mxu0 0.0
    %1682 = vmatprep.subr.mxu0 0.0
    %1683 = vmatpush1.msra.mxu0 0.0
    %1684 = vmatprep.subr.mxu0 0.0
    %1685 = vmatpush1.msra.mxu0 0.0
    %1686 = vmatprep.subr.mxu0 0.0
    %1687 = vmatpush1.msra.mxu0 0.0
    %1688 = vmatprep.subr.mxu0 0.0
    %1689 = vmatpush1.msra.mxu0 0.0
    %1690 = vmatprep.subr.mxu0 0.0
    %1691 = vmatpush1.msra.mxu0 0.0
    %1692 = vmatprep.subr.mxu0 0.0
    %1693 = vmatpush1.msra.mxu0 0.0
    %1694 = vmatprep.subr.mxu0 0.0
    %1695 = vmatpush1.msra.mxu0 0.0
    %1696 = vmatprep.subr.mxu0 0.0
    %1697 = vmatpush1.msra.mxu0 0.0
    %1698 = vmatprep.subr.mxu0 0.0
    %1699 = vmatpush1.msra.mxu0 0.0
    %1700 = vmatprep.subr.mxu0 0.0
    %1701 = vmatpush1.msra.mxu0 0.0
    %1702 = vmatprep.subr.mxu0 0.0
    %1703 = vmatpush1.msra.mxu0 0.0
    %1704 = vmatprep.subr.mxu0 0.0
    %1705 = vmatpush1.msra.mxu0 0.0
    %1706 = vmatprep.subr.mxu0 0.0
    %1707 = vmatpush1.msra.mxu0 0.0
    %1708 = vmatprep.subr.mxu0 0.0
    %1709 = vmatpush1.msra.mxu0 0.0
    %1710 = vmatprep.mubr.f32.mxu0 0.0
    %1711 = vmatmul.mubr.f32.gmra.mrb[0].mxu0 %v1552
    %v1712 = vpop.f32.mrb[0].mxu0
    %v1713 = vadd.f32 0.0, %v1712
    %v1714 = vpop.f32.mrb[0].mxu0
    %1715 = vdwg.mxu0
    %v1716 = vadd.f32 %v259, %v1713
    %v1717 = vadd.f32 %v1716, %v61
    %v1718 = vmul.f32 %v1717, %v87
    %v1719 = vtanh.pop %v1718
    %v1720 = vmul.f32 %v1719, %v87
    %v1721 = vadd.f32 %v1720, %v88
    %v1722 = vmul.f32 %v1721, %v1460
    %1724 = vrot.lane.b32.xlu0 %v1721, 64
    %v1725 = vpop.permute.xlu0 %1724
    %v1727 = vmul.f32 %v1721, %v1725
    %1729 = vrot.lane.b32.xlu0 %v1727, 32
    %v1730 = vpop.permute.xlu0 %1729
    %v1732 = vadd.f32 %v1722, %v1730
    %v1733 = vtanh.pop %v1732
    %1735 = vrot.lane.b32.xlu0 %v1733, 64
    %v1736 = vpop.permute.xlu0 %1735
    %v1738 = vmul.f32 %v1721, %v1736
    %1740 = vrot.lane.b32.xlu0 %v1645, 32
    %v1741 = vpop.permute.xlu0 %1740
    %v1742 = vsel %vm269, %v1741, 0
    %1744 = vmatprep.subr.mxu0 0.0
    %1745 = vmatpush1.msra.mxu0 %v52
    %1746 = vmatprep.subr.mxu0 0.0
    %1747 = vmatpush1.msra.mxu0 %v53
    %1748 = vmatprep.subr.mxu0 0.0
    %1749 = vmatpush1.msra.mxu0 %v54
    %1750 = vmatprep.subr.mxu0 0.0
    %1751 = vmatpush1.msra.mxu0 %v55
    %1752 = vmatprep.subr.mxu0 0.0
    %1753 = vmatpush1.msra.mxu0 0.0
    %1754 = vmatprep.subr.mxu0 0.0
    %1755 = vmatpush1.msra.mxu0 0.0
    %1756 = vmatprep.subr.mxu0 0.0
    %1757 = vmatpush1.msra.mxu0 0.0
    %1758 = vmatprep.subr.mxu0 0.0
    %1759 = vmatpush1.msra.mxu0 0.0
    %1760 = vmatprep.subr.mxu0 0.0
    %1761 = vmatpush1.msra.mxu0 0.0
    %1762 = vmatprep.subr.mxu0 0.0
    %1763 = vmatpush1.msra.mxu0 0.0
    %1764 = vmatprep.subr.mxu0 0.0
    %1765 = vmatpush1.msra.mxu0 0.0
    %1766 = vmatprep.subr.mxu0 0.0
    %1767 = vmatpush1.msra.mxu0 0.0
    %1768 = vmatprep.subr.mxu0 0.0
    %1769 = vmatpush1.msra.mxu0 0.0
    %1770 = vmatprep.subr.mxu0 0.0
    %1771 = vmatpush1.msra.mxu0 0.0
    %1772 = vmatprep.subr.mxu0 0.0
    %1773 = vmatpush1.msra.mxu0 0.0
    %1774 = vmatprep.subr.mxu0 0.0
    %1775 = vmatpush1.msra.mxu0 0.0
    %1776 = vmatprep.subr.mxu0 0.0
    %1777 = vmatpush1.msra.mxu0 0.0
    %1778 = vmatprep.subr.mxu0 0.0
    %1779 = vmatpush1.msra.mxu0 0.0
    %1780 = vmatprep.subr.mxu0 0.0
    %1781 = vmatpush1.msra.mxu0 0.0
    %1782 = vmatprep.subr.mxu0 0.0
    %1783 = vmatpush1.msra.mxu0 0.0
    %1784 = vmatprep.subr.mxu0 0.0
    %1785 = vmatpush1.msra.mxu0 0.0
    %1786 = vmatprep.subr.mxu0 0.0
    %1787 = vmatpush1.msra.mxu0 0.0
    %1788 = vmatprep.subr.mxu0 0.0
    %1789 = vmatpush1.msra.mxu0 0.0
    %1790 = vmatprep.subr.mxu0 0.0
    %1791 = vmatpush1.msra.mxu0 0.0
    %1792 = vmatprep.subr.mxu0 0.0
    %1793 = vmatpush1.msra.mxu0 0.0
    %1794 = vmatprep.subr.mxu0 0.0
    %1795 = vmatpush1.msra.mxu0 0.0
    %1796 = vmatprep.subr.mxu0 0.0
    %1797 = vmatpush1.msra.mxu0 0.0
    %1798 = vmatprep.subr.mxu0 0.0
    %1799 = vmatpush1.msra.mxu0 0.0
    %1800 = vmatprep.subr.mxu0 0.0
    %1801 = vmatpush1.msra.mxu0 0.0
    %1802 = vmatprep.subr.mxu0 0.0
    %1803 = vmatpush1.msra.mxu0 0.0
    %1804 = vmatprep.subr.mxu0 0.0
    %1805 = vmatpush1.msra.mxu0 0.0
    %1806 = vmatprep.subr.mxu0 0.0
    %1807 = vmatpush1.msra.mxu0 0.0
    %1808 = vmatprep.mubr.f32.mxu0 0.0
    %1809 = vmatmul.mubr.f32.gmra.mrb[0].mxu0 %v1742
    %v1810 = vpop.f32.mrb[0].mxu0
    %v1811 = vadd.f32 0.0, %v1810
    %v1812 = vpop.f32.mrb[0].mxu0
    %1813 = vdwg.mxu0
    %v1816 = vunpack.c.l.s4 1983009808
    %v1817 = vunpack.c.0.s8 %v1816
    %v1818 = vlaneseq
    %v1819 = vshrl.u32 %v1818, 7
    %v1820 = vsub.s32 %v1817, %v1819
    %v1821 = vrot.slane %v1738, %v1820
    %1822 = vrot.lane.b32.xlu0 %v1821, 32
    %v1823 = vpop.permute.xlu0 %1822
    %v1824 = vsel %vm269, %v1823, 0
    %1826 = vmatprep.subr.mxu0 0.0
    %1827 = vmatpush1.msra.mxu0 %v48
    %1828 = vmatprep.subr.mxu0 0.0
    %1829 = vmatpush1.msra.mxu0 %v49
    %1830 = vmatprep.subr.mxu0 0.0
    %1831 = vmatpush1.msra.mxu0 %v50
    %1832 = vmatprep.subr.mxu0 0.0
    %1833 = vmatpush1.msra.mxu0 %v51
    %1834 = vmatprep.subr.mxu0 0.0
    %1835 = vmatpush1.msra.mxu0 0.0
    %1836 = vmatprep.subr.mxu0 0.0
    %1837 = vmatpush1.msra.mxu0 0.0
    %1838 = vmatprep.subr.mxu0 0.0
    %1839 = vmatpush1.msra.mxu0 0.0
    %1840 = vmatprep.subr.mxu0 0.0
    %1841 = vmatpush1.msra.mxu0 0.0
    %1842 = vmatprep.subr.mxu0 0.0
    %1843 = vmatpush1.msra.mxu0 0.0
    %1844 = vmatprep.subr.mxu0 0.0
    %1845 = vmatpush1.msra.mxu0 0.0
    %1846 = vmatprep.subr.mxu0 0.0
    %1847 = vmatpush1.msra.mxu0 0.0
    %1848 = vmatprep.subr.mxu0 0.0
    %1849 = vmatpush1.msra.mxu0 0.0
    %1850 = vmatprep.subr.mxu0 0.0
    %1851 = vmatpush1.msra.mxu0 0.0
    %1852 = vmatprep.subr.mxu0 0.0
    %1853 = vmatpush1.msra.mxu0 0.0
    %1854 = vmatprep.subr.mxu0 0.0
    %1855 = vmatpush1.msra.mxu0 0.0
    %1856 = vmatprep.subr.mxu0 0.0
    %1857 = vmatpush1.msra.mxu0 0.0
    %1858 = vmatprep.subr.mxu0 0.0
    %1859 = vmatpush1.msra.mxu0 0.0
    %1860 = vmatprep.subr.mxu0 0.0
    %1861 = vmatpush1.msra.mxu0 0.0
    %1862 = vmatprep.subr.mxu0 0.0
    %1863 = vmatpush1.msra.mxu0 0.0
    %1864 = vmatprep.subr.mxu0 0.0
    %1865 = vmatpush1.msra.mxu0 0.0
    %1866 = vmatprep.subr.mxu0 0.0
    %1867 = vmatpush1.msra.mxu0 0.0
    %1868 = vmatprep.subr.mxu0 0.0
    %1869 = vmatpush1.msra.mxu0 0.0
    %1870 = vmatprep.subr.mxu0 0.0
    %1871 = vmatpush1.msra.mxu0 0.0
    %1872 = vmatprep.subr.mxu0 0.0
    %1873 = vmatpush1.msra.mxu0 0.0
    %1874 = vmatprep.subr.mxu0 0.0
    %1875 = vmatpush1.msra.mxu0 0.0
    %1876 = vmatprep.subr.mxu0 0.0
    %1877 = vmatpush1.msra.mxu0 0.0
    %1878 = vmatprep.subr.mxu0 0.0
    %1879 = vmatpush1.msra.mxu0 0.0
    %1880 = vmatprep.subr.mxu0 0.0
    %1881 = vmatpush1.msra.mxu0 0.0
    %1882 = vmatprep.subr.mxu0 0.0
    %1883 = vmatpush1.msra.mxu0 0.0
    %1884 = vmatprep.subr.mxu0 0.0
    %1885 = vmatpush1.msra.mxu0 0.0
    %1886 = vmatprep.subr.mxu0 0.0
    %1887 = vmatpush1.msra.mxu0 0.0
    %1888 = vmatprep.subr.mxu0 0.0
    %1889 = vmatpush1.msra.mxu0 0.0
    %1890 = vmatprep.mubr.f32.mxu0 0.0
    %1891 = vmatmul.mubr.f32.gmra.mrb[0].mxu0 %v1824
    %v1892 = vpop.f32.mrb[0].mxu0
    %v1893 = vadd.f32 %v1811, %v1892
    %v1894 = vpop.f32.mrb[0].mxu0
    %1895 = vdwg.mxu0
    %v1896 = vadd.f32 %v1893, %v69
    %v1897 = vmul.f32 %v1896, %v87
    %v1898 = vtanh.pop %v1897
    %v1899 = vmul.f32 %v1898, %v87
    %v1900 = vadd.f32 %v1899, %v88
    %v1901 = vmul.f32 %v1900, %v1639
    %1903 = vrot.lane.b32.xlu0 %v1900, 64
    %v1904 = vpop.permute.xlu0 %1903
    %v1906 = vmul.f32 %v1900, %v1904
    %1908 = vrot.lane.b32.xlu0 %v1906, 32
    %v1909 = vpop.permute.xlu0 %1908
    %v1911 = vadd.f32 %v1901, %v1909
    %v1912 = vtanh.pop %v1911
    %1914 = vrot.lane.b32.xlu0 %v1912, 64
    %v1915 = vpop.permute.xlu0 %1914
    %v1917 = vmul.f32 %v1900, %v1915
    %1918 = vmatprep.subr.mxu0 0.0
    %1919 = vmatpush1.msra.mxu0 %v43
    %1920 = vmatprep.subr.mxu0 0.0
    %1921 = vmatpush1.msra.mxu0 %v44
    %1922 = vmatprep.subr.mxu0 0.0
    %1923 = vmatpush1.msra.mxu0 %v45
    %1924 = vmatprep.subr.mxu0 0.0
    %1925 = vmatpush1.msra.mxu0 %v46
    %1926 = vmatprep.subr.mxu0 0.0
    %1927 = vmatpush1.msra.mxu0 0.0
    %1928 = vmatprep.subr.mxu0 0.0
    %1929 = vmatpush1.msra.mxu0 0.0
    %1930 = vmatprep.subr.mxu0 0.0
    %1931 = vmatpush1.msra.mxu0 0.0
    %1932 = vmatprep.subr.mxu0 0.0
    %1933 = vmatpush1.msra.mxu0 0.0
    %1934 = vmatprep.subr.mxu0 0.0
    %1935 = vmatpush1.msra.mxu0 0.0
    %1936 = vmatprep.subr.mxu0 0.0
    %1937 = vmatpush1.msra.mxu0 0.0
    %1938 = vmatprep.subr.mxu0 0.0
    %1939 = vmatpush1.msra.mxu0 0.0
    %1940 = vmatprep.subr.mxu0 0.0
    %1941 = vmatpush1.msra.mxu0 0.0
    %1942 = vmatprep.subr.mxu0 0.0
    %1943 = vmatpush1.msra.mxu0 0.0
    %1944 = vmatprep.subr.mxu0 0.0
    %1945 = vmatpush1.msra.mxu0 0.0
    %1946 = vmatprep.subr.mxu0 0.0
    %1947 = vmatpush1.msra.mxu0 0.0
    %1948 = vmatprep.subr.mxu0 0.0
    %1949 = vmatpush1.msra.mxu0 0.0
    %1950 = vmatprep.subr.mxu0 0.0
    %1951 = vmatpush1.msra.mxu0 0.0
    %1952 = vmatprep.subr.mxu0 0.0
    %1953 = vmatpush1.msra.mxu0 0.0
    %1954 = vmatprep.subr.mxu0 0.0
    %1955 = vmatpush1.msra.mxu0 0.0
    %1956 = vmatprep.subr.mxu0 0.0
    %1957 = vmatpush1.msra.mxu0 0.0
    %1958 = vmatprep.subr.mxu0 0.0
    %1959 = vmatpush1.msra.mxu0 0.0
    %1960 = vmatprep.subr.mxu0 0.0
    %1961 = vmatpush1.msra.mxu0 0.0
    %1962 = vmatprep.subr.mxu0 0.0
    %1963 = vmatpush1.msra.mxu0 0.0
    %1964 = vmatprep.subr.mxu0 0.0
    %1965 = vmatpush1.msra.mxu0 0.0
    %1966 = vmatprep.subr.mxu0 0.0
    %1967 = vmatpush1.msra.mxu0 0.0
    %1968 = vmatprep.subr.mxu0 0.0
    %1969 = vmatpush1.msra.mxu0 0.0
    %1970 = vmatprep.subr.mxu0 0.0
    %1971 = vmatpush1.msra.mxu0 0.0
    %1972 = vmatprep.subr.mxu0 0.0
    %1973 = vmatpush1.msra.mxu0 0.0
    %1974 = vmatprep.subr.mxu0 0.0
    %1975 = vmatpush1.msra.mxu0 0.0
    %1976 = vmatprep.subr.mxu0 0.0
    %1977 = vmatpush1.msra.mxu0 0.0
    %1978 = vmatprep.subr.mxu0 0.0
    %1979 = vmatpush1.msra.mxu0 0.0
    %1980 = vmatprep.subr.mxu0 0.0
    %1981 = vmatpush1.msra.mxu0 0.0
    %1982 = vmatprep.mubr.f32.mxu0 0.0
    %1983 = vmatmul.mubr.f32.gmra.mrb[0].mxu0 %v1824
    %v1984 = vpop.f32.mrb[0].mxu0
    %v1985 = vadd.f32 0.0, %v1984
    %v1986 = vpop.f32.mrb[0].mxu0
    %1987 = vdwg.mxu0
    %v1988 = vadd.f32 %v258, %v1985
    %v1989 = vadd.f32 %v1988, %v61
    %v1990 = vmul.f32 %v1989, %v87
    %v1991 = vtanh.pop %v1990
    %v1992 = vmul.f32 %v1991, %v87
    %v1993 = vadd.f32 %v1992, %v88
    %v1994 = vmul.f32 %v1993, %v1732
    %1996 = vrot.lane.b32.xlu0 %v1993, 64
    %v1997 = vpop.permute.xlu0 %1996
    %v1999 = vmul.f32 %v1993, %v1997
    %2001 = vrot.lane.b32.xlu0 %v1999, 32
    %v2002 = vpop.permute.xlu0 %2001
    %v2004 = vadd.f32 %v1994, %v2002
    %v2005 = vtanh.pop %v2004
    %2007 = vrot.lane.b32.xlu0 %v2005, 64
    %v2008 = vpop.permute.xlu0 %2007
    %v2010 = vmul.f32 %v1993, %v2008
    %2012 = vrot.lane.b32.xlu0 %v1917, 32
    %v2013 = vpop.permute.xlu0 %2012
    %v2014 = vsel %vm269, %v2013, 0
    %2016 = vmatprep.subr.mxu0 0.0
    %2017 = vmatpush1.msra.mxu0 %v52
    %2018 = vmatprep.subr.mxu0 0.0
    %2019 = vmatpush1.msra.mxu0 %v53
    %2020 = vmatprep.subr.mxu0 0.0
    %2021 = vmatpush1.msra.mxu0 %v54
    %2022 = vmatprep.subr.mxu0 0.0
    %2023 = vmatpush1.msra.mxu0 %v55
    %2024 = vmatprep.subr.mxu0 0.0
    %2025 = vmatpush1.msra.mxu0 0.0
    %2026 = vmatprep.subr.mxu0 0.0
    %2027 = vmatpush1.msra.mxu0 0.0
    %2028 = vmatprep.subr.mxu0 0.0
    %2029 = vmatpush1.msra.mxu0 0.0
    %2030 = vmatprep.subr.mxu0 0.0
    %2031 = vmatpush1.msra.mxu0 0.0
    %2032 = vmatprep.subr.mxu0 0.0
    %2033 = vmatpush1.msra.mxu0 0.0
    %2034 = vmatprep.subr.mxu0 0.0
    %2035 = vmatpush1.msra.mxu0 0.0
    %2036 = vmatprep.subr.mxu0 0.0
    %2037 = vmatpush1.msra.mxu0 0.0
    %2038 = vmatprep.subr.mxu0 0.0
    %2039 = vmatpush1.msra.mxu0 0.0
    %2040 = vmatprep.subr.mxu0 0.0
    %2041 = vmatpush1.msra.mxu0 0.0
    %2042 = vmatprep.subr.mxu0 0.0
    %2043 = vmatpush1.msra.mxu0 0.0
    %2044 = vmatprep.subr.mxu0 0.0
    %2045 = vmatpush1.msra.mxu0 0.0
    %2046 = vmatprep.subr.mxu0 0.0
    %2047 = vmatpush1.msra.mxu0 0.0
    %2048 = vmatprep.subr.mxu0 0.0
    %2049 = vmatpush1.msra.mxu0 0.0
    %2050 = vmatprep.subr.mxu0 0.0
    %2051 = vmatpush1.msra.mxu0 0.0
    %2052 = vmatprep.subr.mxu0 0.0
    %2053 = vmatpush1.msra.mxu0 0.0
    %2054 = vmatprep.subr.mxu0 0.0
    %2055 = vmatpush1.msra.mxu0 0.0
    %2056 = vmatprep.subr.mxu0 0.0
    %2057 = vmatpush1.msra.mxu0 0.0
    %2058 = vmatprep.subr.mxu0 0.0
    %2059 = vmatpush1.msra.mxu0 0.0
    %2060 = vmatprep.subr.mxu0 0.0
    %2061 = vmatpush1.msra.mxu0 0.0
    %2062 = vmatprep.subr.mxu0 0.0
    %2063 = vmatpush1.msra.mxu0 0.0
    %2064 = vmatprep.subr.mxu0 0.0
    %2065 = vmatpush1.msra.mxu0 0.0
    %2066 = vmatprep.subr.mxu0 0.0
    %2067 = vmatpush1.msra.mxu0 0.0
    %2068 = vmatprep.subr.mxu0 0.0
    %2069 = vmatpush1.msra.mxu0 0.0
    %2070 = vmatprep.subr.mxu0 0.0
    %2071 = vmatpush1.msra.mxu0 0.0
    %2072 = vmatprep.subr.mxu0 0.0
    %2073 = vmatpush1.msra.mxu0 0.0
    %2074 = vmatprep.subr.mxu0 0.0
    %2075 = vmatpush1.msra.mxu0 0.0
    %2076 = vmatprep.subr.mxu0 0.0
    %2077 = vmatpush1.msra.mxu0 0.0
    %2078 = vmatprep.subr.mxu0 0.0
    %2079 = vmatpush1.msra.mxu0 0.0
    %2080 = vmatprep.mubr.f32.mxu0 0.0
    %2081 = vmatmul.mubr.f32.gmra.mrb[0].mxu0 %v2014
    %v2082 = vpop.f32.mrb[0].mxu0
    %v2083 = vadd.f32 0.0, %v2082
    %v2084 = vpop.f32.mrb[0].mxu0
    %2085 = vdwg.mxu0
    %v2088 = vunpack.c.l.s4 1983009808
    %v2089 = vunpack.c.0.s8 %v2088
    %v2090 = vlaneseq
    %v2091 = vshrl.u32 %v2090, 7
    %v2092 = vsub.s32 %v2089, %v2091
    %v2093 = vrot.slane %v2010, %v2092
    %2094 = vrot.lane.b32.xlu0 %v2093, 32
    %v2095 = vpop.permute.xlu0 %2094
    %v2096 = vsel %vm269, %v2095, 0
    %2098 = vmatprep.subr.mxu0 0.0
    %2099 = vmatpush1.msra.mxu0 %v48
    %2100 = vmatprep.subr.mxu0 0.0
    %2101 = vmatpush1.msra.mxu0 %v49
    %2102 = vmatprep.subr.mxu0 0.0
    %2103 = vmatpush1.msra.mxu0 %v50
    %2104 = vmatprep.subr.mxu0 0.0
    %2105 = vmatpush1.msra.mxu0 %v51
    %2106 = vmatprep.subr.mxu0 0.0
    %2107 = vmatpush1.msra.mxu0 0.0
    %2108 = vmatprep.subr.mxu0 0.0
    %2109 = vmatpush1.msra.mxu0 0.0
    %2110 = vmatprep.subr.mxu0 0.0
    %2111 = vmatpush1.msra.mxu0 0.0
    %2112 = vmatprep.subr.mxu0 0.0
    %2113 = vmatpush1.msra.mxu0 0.0
    %2114 = vmatprep.subr.mxu0 0.0
    %2115 = vmatpush1.msra.mxu0 0.0
    %2116 = vmatprep.subr.mxu0 0.0
    %2117 = vmatpush1.msra.mxu0 0.0
    %2118 = vmatprep.subr.mxu0 0.0
    %2119 = vmatpush1.msra.mxu0 0.0
    %2120 = vmatprep.subr.mxu0 0.0
    %2121 = vmatpush1.msra.mxu0 0.0
    %2122 = vmatprep.subr.mxu0 0.0
    %2123 = vmatpush1.msra.mxu0 0.0
    %2124 = vmatprep.subr.mxu0 0.0
    %2125 = vmatpush1.msra.mxu0 0.0
    %2126 = vmatprep.subr.mxu0 0.0
    %2127 = vmatpush1.msra.mxu0 0.0
    %2128 = vmatprep.subr.mxu0 0.0
    %2129 = vmatpush1.msra.mxu0 0.0
    %2130 = vmatprep.subr.mxu0 0.0
    %2131 = vmatpush1.msra.mxu0 0.0
    %2132 = vmatprep.subr.mxu0 0.0
    %2133 = vmatpush1.msra.mxu0 0.0
    %2134 = vmatprep.subr.mxu0 0.0
    %2135 = vmatpush1.msra.mxu0 0.0
    %2136 = vmatprep.subr.mxu0 0.0
    %2137 = vmatpush1.msra.mxu0 0.0
    %2138 = vmatprep.subr.mxu0 0.0
    %2139 = vmatpush1.msra.mxu0 0.0
    %2140 = vmatprep.subr.mxu0 0.0
    %2141 = vmatpush1.msra.mxu0 0.0
    %2142 = vmatprep.subr.mxu0 0.0
    %2143 = vmatpush1.msra.mxu0 0.0
    %2144 = vmatprep.subr.mxu0 0.0
    %2145 = vmatpush1.msra.mxu0 0.0
    %2146 = vmatprep.subr.mxu0 0.0
    %2147 = vmatpush1.msra.mxu0 0.0
    %2148 = vmatprep.subr.mxu0 0.0
    %2149 = vmatpush1.msra.mxu0 0.0
    %2150 = vmatprep.subr.mxu0 0.0
    %2151 = vmatpush1.msra.mxu0 0.0
    %2152 = vmatprep.subr.mxu0 0.0
    %2153 = vmatpush1.msra.mxu0 0.0
    %2154 = vmatprep.subr.mxu0 0.0
    %2155 = vmatpush1.msra.mxu0 0.0
    %2156 = vmatprep.subr.mxu0 0.0
    %2157 = vmatpush1.msra.mxu0 0.0
    %2158 = vmatprep.subr.mxu0 0.0
    %2159 = vmatpush1.msra.mxu0 0.0
    %2160 = vmatprep.subr.mxu0 0.0
    %2161 = vmatpush1.msra.mxu0 0.0
    %2162 = vmatprep.mubr.f32.mxu0 0.0
    %2163 = vmatmul.mubr.f32.gmra.mrb[0].mxu0 %v2096
    %v2164 = vpop.f32.mrb[0].mxu0
    %v2165 = vadd.f32 %v2083, %v2164
    %v2166 = vpop.f32.mrb[0].mxu0
    %2167 = vdwg.mxu0
    %v2168 = vadd.f32 %v2165, %v69
    %v2169 = vmul.f32 %v2168, %v87
    %v2170 = vtanh.pop %v2169
    %v2171 = vmul.f32 %v2170, %v87
    %v2172 = vadd.f32 %v2171, %v88
    %v2173 = vmul.f32 %v2172, %v1911
    %2175 = vrot.lane.b32.xlu0 %v2172, 64
    %v2176 = vpop.permute.xlu0 %2175
    %v2178 = vmul.f32 %v2172, %v2176
    %2180 = vrot.lane.b32.xlu0 %v2178, 32
    %v2181 = vpop.permute.xlu0 %2180
    %v2183 = vadd.f32 %v2173, %v2181
    %v2184 = vtanh.pop %v2183
    %2186 = vrot.lane.b32.xlu0 %v2184, 64
    %v2187 = vpop.permute.xlu0 %2186
    %v2189 = vmul.f32 %v2172, %v2187
    %2190 = vmatprep.subr.mxu0 0.0
    %2191 = vmatpush1.msra.mxu0 %v43
    %2192 = vmatprep.subr.mxu0 0.0
    %2193 = vmatpush1.msra.mxu0 %v44
    %2194 = vmatprep.subr.mxu0 0.0
    %2195 = vmatpush1.msra.mxu0 %v45
    %2196 = vmatprep.subr.mxu0 0.0
    %2197 = vmatpush1.msra.mxu0 %v46
    %2198 = vmatprep.subr.mxu0 0.0
    %2199 = vmatpush1.msra.mxu0 0.0
    %2200 = vmatprep.subr.mxu0 0.0
    %2201 = vmatpush1.msra.mxu0 0.0
    %2202 = vmatprep.subr.mxu0 0.0
    %2203 = vmatpush1.msra.mxu0 0.0
    %2204 = vmatprep.subr.mxu0 0.0
    %2205 = vmatpush1.msra.mxu0 0.0
    %2206 = vmatprep.subr.mxu0 0.0
    %2207 = vmatpush1.msra.mxu0 0.0
    %2208 = vmatprep.subr.mxu0 0.0
    %2209 = vmatpush1.msra.mxu0 0.0
    %2210 = vmatprep.subr.mxu0 0.0
    %2211 = vmatpush1.msra.mxu0 0.0
    %2212 = vmatprep.subr.mxu0 0.0
    %2213 = vmatpush1.msra.mxu0 0.0
    %2214 = vmatprep.subr.mxu0 0.0
    %2215 = vmatpush1.msra.mxu0 0.0
    %2216 = vmatprep.subr.mxu0 0.0
    %2217 = vmatpush1.msra.mxu0 0.0
    %2218 = vmatprep.subr.mxu0 0.0
    %2219 = vmatpush1.msra.mxu0 0.0
    %2220 = vmatprep.subr.mxu0 0.0
    %2221 = vmatpush1.msra.mxu0 0.0
    %2222 = vmatprep.subr.mxu0 0.0
    %2223 = vmatpush1.msra.mxu0 0.0
    %2224 = vmatprep.subr.mxu0 0.0
    %2225 = vmatpush1.msra.mxu0 0.0
    %2226 = vmatprep.subr.mxu0 0.0
    %2227 = vmatpush1.msra.mxu0 0.0
    %2228 = vmatprep.subr.mxu0 0.0
    %2229 = vmatpush1.msra.mxu0 0.0
    %2230 = vmatprep.subr.mxu0 0.0
    %2231 = vmatpush1.msra.mxu0 0.0
    %2232 = vmatprep.subr.mxu0 0.0
    %2233 = vmatpush1.msra.mxu0 0.0
    %2234 = vmatprep.subr.mxu0 0.0
    %2235 = vmatpush1.msra.mxu0 0.0
    %2236 = vmatprep.subr.mxu0 0.0
    %2237 = vmatpush1.msra.mxu0 0.0
    %2238 = vmatprep.subr.mxu0 0.0
    %2239 = vmatpush1.msra.mxu0 0.0
    %2240 = vmatprep.subr.mxu0 0.0
    %2241 = vmatpush1.msra.mxu0 0.0
    %2242 = vmatprep.subr.mxu0 0.0
    %2243 = vmatpush1.msra.mxu0 0.0
    %2244 = vmatprep.subr.mxu0 0.0
    %2245 = vmatpush1.msra.mxu0 0.0
    %2246 = vmatprep.subr.mxu0 0.0
    %2247 = vmatpush1.msra.mxu0 0.0
    %2248 = vmatprep.subr.mxu0 0.0
    %2249 = vmatpush1.msra.mxu0 0.0
    %2250 = vmatprep.subr.mxu0 0.0
    %2251 = vmatpush1.msra.mxu0 0.0
    %2252 = vmatprep.subr.mxu0 0.0
    %2253 = vmatpush1.msra.mxu0 0.0
    %2254 = vmatprep.mubr.f32.mxu0 0.0
    %2255 = vmatmul.mubr.f32.gmra.mrb[0].mxu0 %v2096
    %v2256 = vpop.f32.mrb[0].mxu0
    %v2257 = vadd.f32 0.0, %v2256
    %v2258 = vpop.f32.mrb[0].mxu0
    %2259 = vdwg.mxu0
    %v2260 = vadd.f32 %v260, %v2257
    %v2261 = vadd.f32 %v2260, %v61
    %v2262 = vmul.f32 %v2261, %v87
    %v2263 = vtanh.pop %v2262
    %v2264 = vmul.f32 %v2263, %v87
    %v2265 = vadd.f32 %v2264, %v88
    %v2266 = vmul.f32 %v2265, %v2004
    %2268 = vrot.lane.b32.xlu0 %v2265, 64
    %v2269 = vpop.permute.xlu0 %2268
    %v2271 = vmul.f32 %v2265, %v2269
    %2273 = vrot.lane.b32.xlu0 %v2271, 32
    %v2274 = vpop.permute.xlu0 %2273
    %v2276 = vadd.f32 %v2266, %v2274
    %v2277 = vtanh.pop %v2276
    %2279 = vrot.lane.b32.xlu0 %v2277, 64
    %v2280 = vpop.permute.xlu0 %2279
    %v2282 = vmul.f32 %v2265, %v2280
    %2284 = vrot.lane.b32.xlu0 %v2189, 32
    %v2285 = vpop.permute.xlu0 %2284
    %v2286 = vsel %vm269, %v2285, 0
    %2288 = vmatprep.subr.mxu0 0.0
    %2289 = vmatpush1.msra.mxu0 %v52
    %2290 = vmatprep.subr.mxu0 0.0
    %2291 = vmatpush1.msra.mxu0 %v53
    %2292 = vmatprep.subr.mxu0 0.0
    %2293 = vmatpush1.msra.mxu0 %v54
    %2294 = vmatprep.subr.mxu0 0.0
    %2295 = vmatpush1.msra.mxu0 %v55
    %2296 = vmatprep.subr.mxu0 0.0
    %2297 = vmatpush1.msra.mxu0 0.0
    %2298 = vmatprep.subr.mxu0 0.0
    %2299 = vmatpush1.msra.mxu0 0.0
    %2300 = vmatprep.subr.mxu0 0.0
    %2301 = vmatpush1.msra.mxu0 0.0
    %2302 = vmatprep.subr.mxu0 0.0
    %2303 = vmatpush1.msra.mxu0 0.0
    %2304 = vmatprep.subr.mxu0 0.0
    %2305 = vmatpush1.msra.mxu0 0.0
    %2306 = vmatprep.subr.mxu0 0.0
    %2307 = vmatpush1.msra.mxu0 0.0
    %2308 = vmatprep.subr.mxu0 0.0
    %2309 = vmatpush1.msra.mxu0 0.0
    %2310 = vmatprep.subr.mxu0 0.0
    %2311 = vmatpush1.msra.mxu0 0.0
    %2312 = vmatprep.subr.mxu0 0.0
    %2313 = vmatpush1.msra.mxu0 0.0
    %2314 = vmatprep.subr.mxu0 0.0
    %2315 = vmatpush1.msra.mxu0 0.0
    %2316 = vmatprep.subr.mxu0 0.0
    %2317 = vmatpush1.msra.mxu0 0.0
    %2318 = vmatprep.subr.mxu0 0.0
    %2319 = vmatpush1.msra.mxu0 0.0
    %2320 = vmatprep.subr.mxu0 0.0
    %2321 = vmatpush1.msra.mxu0 0.0
    %2322 = vmatprep.subr.mxu0 0.0
    %2323 = vmatpush1.msra.mxu0 0.0
    %2324 = vmatprep.subr.mxu0 0.0
    %2325 = vmatpush1.msra.mxu0 0.0
    %2326 = vmatprep.subr.mxu0 0.0
    %2327 = vmatpush1.msra.mxu0 0.0
    %2328 = vmatprep.subr.mxu0 0.0
    %2329 = vmatpush1.msra.mxu0 0.0
    %2330 = vmatprep.subr.mxu0 0.0
    %2331 = vmatpush1.msra.mxu0 0.0
    %2332 = vmatprep.subr.mxu0 0.0
    %2333 = vmatpush1.msra.mxu0 0.0
    %2334 = vmatprep.subr.mxu0 0.0
    %2335 = vmatpush1.msra.mxu0 0.0
    %2336 = vmatprep.subr.mxu0 0.0
    %2337 = vmatpush1.msra.mxu0 0.0
    %2338 = vmatprep.subr.mxu0 0.0
    %2339 = vmatpush1.msra.mxu0 0.0
    %2340 = vmatprep.subr.mxu0 0.0
    %2341 = vmatpush1.msra.mxu0 0.0
    %2342 = vmatprep.subr.mxu0 0.0
    %2343 = vmatpush1.msra.mxu0 0.0
    %2344 = vmatprep.subr.mxu0 0.0
    %2345 = vmatpush1.msra.mxu0 0.0
    %2346 = vmatprep.subr.mxu0 0.0
    %2347 = vmatpush1.msra.mxu0 0.0
    %2348 = vmatprep.subr.mxu0 0.0
    %2349 = vmatpush1.msra.mxu0 0.0
    %2350 = vmatprep.subr.mxu0 0.0
    %2351 = vmatpush1.msra.mxu0 0.0
    %2352 = vmatprep.mubr.f32.mxu0 0.0
    %2353 = vmatmul.mubr.f32.gmra.mrb[0].mxu0 %v2286
    %v2354 = vpop.f32.mrb[0].mxu0
    %v2355 = vadd.f32 0.0, %v2354
    %v2356 = vpop.f32.mrb[0].mxu0
    %2357 = vdwg.mxu0
    %v2360 = vunpack.c.l.s4 1983009808
    %v2361 = vunpack.c.0.s8 %v2360
    %v2362 = vlaneseq
    %v2363 = vshrl.u32 %v2362, 7
    %v2364 = vsub.s32 %v2361, %v2363
    %v2365 = vrot.slane %v2282, %v2364
    %2366 = vrot.lane.b32.xlu0 %v2365, 32
    %v2367 = vpop.permute.xlu0 %2366
    %v2368 = vsel %vm269, %v2367, 0
    %2370 = vmatprep.subr.mxu0 0.0
    %2371 = vmatpush1.msra.mxu0 %v48
    %2372 = vmatprep.subr.mxu0 0.0
    %2373 = vmatpush1.msra.mxu0 %v49
    %2374 = vmatprep.subr.mxu0 0.0
    %2375 = vmatpush1.msra.mxu0 %v50
    %2376 = vmatprep.subr.mxu0 0.0
    %2377 = vmatpush1.msra.mxu0 %v51
    %2378 = vmatprep.subr.mxu0 0.0
    %2379 = vmatpush1.msra.mxu0 0.0
    %2380 = vmatprep.subr.mxu0 0.0
    %2381 = vmatpush1.msra.mxu0 0.0
    %2382 = vmatprep.subr.mxu0 0.0
    %2383 = vmatpush1.msra.mxu0 0.0
    %2384 = vmatprep.subr.mxu0 0.0
    %2385 = vmatpush1.msra.mxu0 0.0
    %2386 = vmatprep.subr.mxu0 0.0
    %2387 = vmatpush1.msra.mxu0 0.0
    %2388 = vmatprep.subr.mxu0 0.0
    %2389 = vmatpush1.msra.mxu0 0.0
    %2390 = vmatprep.subr.mxu0 0.0
    %2391 = vmatpush1.msra.mxu0 0.0
    %2392 = vmatprep.subr.mxu0 0.0
    %2393 = vmatpush1.msra.mxu0 0.0
    %2394 = vmatprep.subr.mxu0 0.0
    %2395 = vmatpush1.msra.mxu0 0.0
    %2396 = vmatprep.subr.mxu0 0.0
    %2397 = vmatpush1.msra.mxu0 0.0
    %2398 = vmatprep.subr.mxu0 0.0
    %2399 = vmatpush1.msra.mxu0 0.0
    %2400 = vmatprep.subr.mxu0 0.0
    %2401 = vmatpush1.msra.mxu0 0.0
    %2402 = vmatprep.subr.mxu0 0.0
    %2403 = vmatpush1.msra.mxu0 0.0
    %2404 = vmatprep.subr.mxu0 0.0
    %2405 = vmatpush1.msra.mxu0 0.0
    %2406 = vmatprep.subr.mxu0 0.0
    %2407 = vmatpush1.msra.mxu0 0.0
    %2408 = vmatprep.subr.mxu0 0.0
    %2409 = vmatpush1.msra.mxu0 0.0
    %2410 = vmatprep.subr.mxu0 0.0
    %2411 = vmatpush1.msra.mxu0 0.0
    %2412 = vmatprep.subr.mxu0 0.0
    %2413 = vmatpush1.msra.mxu0 0.0
    %2414 = vmatprep.subr.mxu0 0.0
    %2415 = vmatpush1.msra.mxu0 0.0
    %2416 = vmatprep.subr.mxu0 0.0
    %2417 = vmatpush1.msra.mxu0 0.0
    %2418 = vmatprep.subr.mxu0 0.0
    %2419 = vmatpush1.msra.mxu0 0.0
    %2420 = vmatprep.subr.mxu0 0.0
    %2421 = vmatpush1.msra.mxu0 0.0
    %2422 = vmatprep.subr.mxu0 0.0
    %2423 = vmatpush1.msra.mxu0 0.0
    %2424 = vmatprep.subr.mxu0 0.0
    %2425 = vmatpush1.msra.mxu0 0.0
    %2426 = vmatprep.subr.mxu0 0.0
    %2427 = vmatpush1.msra.mxu0 0.0
    %2428 = vmatprep.subr.mxu0 0.0
    %2429 = vmatpush1.msra.mxu0 0.0
    %2430 = vmatprep.subr.mxu0 0.0
    %2431 = vmatpush1.msra.mxu0 0.0
    %2432 = vmatprep.subr.mxu0 0.0
    %2433 = vmatpush1.msra.mxu0 0.0
    %2434 = vmatprep.mubr.f32.mxu0 0.0
    %2435 = vmatmul.mubr.f32.gmra.mrb[0].mxu0 %v2368
    %v2436 = vpop.f32.mrb[0].mxu0
    %v2437 = vadd.f32 %v2355, %v2436
    %v2438 = vpop.f32.mrb[0].mxu0
    %2439 = vdwg.mxu0
    %v2440 = vadd.f32 %v2437, %v69
    %v2441 = vmul.f32 %v2440, %v87
    %v2442 = vtanh.pop %v2441
    %v2443 = vmul.f32 %v2442, %v87
    %v2444 = vadd.f32 %v2443, %v88
    %v2445 = vmul.f32 %v2444, %v2183
    %2447 = vrot.lane.b32.xlu0 %v2444, 64
    %v2448 = vpop.permute.xlu0 %2447
    %v2450 = vmul.f32 %v2444, %v2448
    %2452 = vrot.lane.b32.xlu0 %v2450, 32
    %v2453 = vpop.permute.xlu0 %2452
    %v2455 = vadd.f32 %v2445, %v2453
    %v2456 = vtanh.pop %v2455
    %2458 = vrot.lane.b32.xlu0 %v2456, 64
    %v2459 = vpop.permute.xlu0 %2458
    %v2461 = vmul.f32 %v2444, %v2459
    %v2463 = vrot.slane %v2461, 6
    %vm2465 = vcmask 1041408
    %v2466 = vsel %vm2465, %v2282, %v2463
    %2468 = vrot.lane.b32.xlu0 %v2466, 32
    %v2469 = vpop.permute.xlu0 %2468
    %v2470 = vsel %vm269, %v2469, 0
    %2472 = vmatprep.subr.mxu0 0.0
    %2473 = vmatpush1.msra.mxu0 %v71
    %2474 = vmatprep.subr.mxu0 0.0
    %2475 = vmatpush1.msra.mxu0 %v72
    %2476 = vmatprep.subr.mxu0 0.0
    %2477 = vmatpush1.msra.mxu0 %v73
    %2478 = vmatprep.subr.mxu0 0.0
    %2479 = vmatpush1.msra.mxu0 %v74
    %2480 = vmatprep.subr.mxu0 0.0
    %2481 = vmatpush1.msra.mxu0 0.0
    %2482 = vmatprep.subr.mxu0 0.0
    %2483 = vmatpush1.msra.mxu0 0.0
    %2484 = vmatprep.subr.mxu0 0.0
    %2485 = vmatpush1.msra.mxu0 0.0
    %2486 = vmatprep.subr.mxu0 0.0
    %2487 = vmatpush1.msra.mxu0 0.0
    %2488 = vmatprep.subr.mxu0 0.0
    %2489 = vmatpush1.msra.mxu0 0.0
    %2490 = vmatprep.subr.mxu0 0.0
    %2491 = vmatpush1.msra.mxu0 0.0
    %2492 = vmatprep.subr.mxu0 0.0
    %2493 = vmatpush1.msra.mxu0 0.0
    %2494 = vmatprep.subr.mxu0 0.0
    %2495 = vmatpush1.msra.mxu0 0.0
    %2496 = vmatprep.subr.mxu0 0.0
    %2497 = vmatpush1.msra.mxu0 0.0
    %2498 = vmatprep.subr.mxu0 0.0
    %2499 = vmatpush1.msra.mxu0 0.0
    %2500 = vmatprep.subr.mxu0 0.0
    %2501 = vmatpush1.msra.mxu0 0.0
    %2502 = vmatprep.subr.mxu0 0.0
    %2503 = vmatpush1.msra.mxu0 0.0
    %2504 = vmatprep.subr.mxu0 0.0
    %2505 = vmatpush1.msra.mxu0 0.0
    %2506 = vmatprep.subr.mxu0 0.0
    %2507 = vmatpush1.msra.mxu0 0.0
    %2508 = vmatprep.subr.mxu0 0.0
    %2509 = vmatpush1.msra.mxu0 0.0
    %2510 = vmatprep.subr.mxu0 0.0
    %2511 = vmatpush1.msra.mxu0 0.0
    %2512 = vmatprep.subr.mxu0 0.0
    %2513 = vmatpush1.msra.mxu0 0.0
    %2514 = vmatprep.subr.mxu0 0.0
    %2515 = vmatpush1.msra.mxu0 0.0
    %2516 = vmatprep.subr.mxu0 0.0
    %2517 = vmatpush1.msra.mxu0 0.0
    %2518 = vmatprep.subr.mxu0 0.0
    %2519 = vmatpush1.msra.mxu0 0.0
    %2520 = vmatprep.subr.mxu0 0.0
    %2521 = vmatpush1.msra.mxu0 0.0
    %2522 = vmatprep.subr.mxu0 0.0
    %2523 = vmatpush1.msra.mxu0 0.0
    %2524 = vmatprep.subr.mxu0 0.0
    %2525 = vmatpush1.msra.mxu0 0.0
    %2526 = vmatprep.subr.mxu0 0.0
    %2527 = vmatpush1.msra.mxu0 0.0
    %2528 = vmatprep.subr.mxu0 0.0
    %2529 = vmatpush1.msra.mxu0 0.0
    %2530 = vmatprep.subr.mxu0 0.0
    %2531 = vmatpush1.msra.mxu0 0.0
    %2532 = vmatprep.subr.mxu0 0.0
    %2533 = vmatpush1.msra.mxu0 0.0
    %2534 = vmatprep.subr.mxu0 0.0
    %2535 = vmatpush1.msra.mxu0 0.0
    %2536 = vmatprep.mubr.f32.mxu0 0.0
    %2537 = vmatmul.mubr.f32.gmra.mrb[0].mxu0 %v2470
    %v2538 = vpop.f32.mrb[0].mxu0
    %v2539 = vadd.f32 %v80, %v2538
    %v2540 = vpop.f32.mrb[0].mxu0
    %2541 = vdwg.mxu0
    %2542 = vmatprep.subr.mxu0 0.0
    %2543 = vmatpush1.msra.mxu0 %v43
    %2544 = vmatprep.subr.mxu0 0.0
    %2545 = vmatpush1.msra.mxu0 %v44
    %2546 = vmatprep.subr.mxu0 0.0
    %2547 = vmatpush1.msra.mxu0 %v45
    %2548 = vmatprep.subr.mxu0 0.0
    %2549 = vmatpush1.msra.mxu0 %v46
    %2550 = vmatprep.subr.mxu0 0.0
    %2551 = vmatpush1.msra.mxu0 0.0
    %2552 = vmatprep.subr.mxu0 0.0
    %2553 = vmatpush1.msra.mxu0 0.0
    %2554 = vmatprep.subr.mxu0 0.0
    %2555 = vmatpush1.msra.mxu0 0.0
    %2556 = vmatprep.subr.mxu0 0.0
    %2557 = vmatpush1.msra.mxu0 0.0
    %2558 = vmatprep.subr.mxu0 0.0
    %2559 = vmatpush1.msra.mxu0 0.0
    %2560 = vmatprep.subr.mxu0 0.0
    %2561 = vmatpush1.msra.mxu0 0.0
    %2562 = vmatprep.subr.mxu0 0.0
    %2563 = vmatpush1.msra.mxu0 0.0
    %2564 = vmatprep.subr.mxu0 0.0
    %2565 = vmatpush1.msra.mxu0 0.0
    %2566 = vmatprep.subr.mxu0 0.0
    %2567 = vmatpush1.msra.mxu0 0.0
    %2568 = vmatprep.subr.mxu0 0.0
    %2569 = vmatpush1.msra.mxu0 0.0
    %2570 = vmatprep.subr.mxu0 0.0
    %2571 = vmatpush1.msra.mxu0 0.0
    %2572 = vmatprep.subr.mxu0 0.0
    %2573 = vmatpush1.msra.mxu0 0.0
    %2574 = vmatprep.subr.mxu0 0.0
    %2575 = vmatpush1.msra.mxu0 0.0
    %2576 = vmatprep.subr.mxu0 0.0
    %2577 = vmatpush1.msra.mxu0 0.0
    %2578 = vmatprep.subr.mxu0 0.0
    %2579 = vmatpush1.msra.mxu0 0.0
    %2580 = vmatprep.subr.mxu0 0.0
    %2581 = vmatpush1.msra.mxu0 0.0
    %2582 = vmatprep.subr.mxu0 0.0
    %2583 = vmatpush1.msra.mxu0 0.0
    %2584 = vmatprep.subr.mxu0 0.0
    %2585 = vmatpush1.msra.mxu0 0.0
    %2586 = vmatprep.subr.mxu0 0.0
    %2587 = vmatpush1.msra.mxu0 0.0
    %2588 = vmatprep.subr.mxu0 0.0
    %2589 = vmatpush1.msra.mxu0 0.0
    %2590 = vmatprep.subr.mxu0 0.0
    %2591 = vmatpush1.msra.mxu0 0.0
    %2592 = vmatprep.subr.mxu0 0.0
    %2593 = vmatpush1.msra.mxu0 0.0
    %2594 = vmatprep.subr.mxu0 0.0
    %2595 = vmatpush1.msra.mxu0 0.0
    %2596 = vmatprep.subr.mxu0 0.0
    %2597 = vmatpush1.msra.mxu0 0.0
    %2598 = vmatprep.subr.mxu0 0.0
    %2599 = vmatpush1.msra.mxu0 0.0
    %2600 = vmatprep.subr.mxu0 0.0
    %2601 = vmatpush1.msra.mxu0 0.0
    %2602 = vmatprep.subr.mxu0 0.0
    %2603 = vmatpush1.msra.mxu0 0.0
    %2604 = vmatprep.subr.mxu0 0.0
    %2605 = vmatpush1.msra.mxu0 0.0
    %2606 = vmatprep.mubr.f32.mxu0 0.0
    %2607 = vmatmul.mubr.f32.gmra.mrb[0].mxu0 %v2368
    %v2608 = vpop.f32.mrb[0].mxu0
    %v2609 = vadd.f32 0.0, %v2608
    %v2610 = vpop.f32.mrb[0].mxu0
    %2611 = vdwg.mxu0
    %v2613 = vsel %vm145, %v2539, 0
    %2615 = vmatprep.subr.mxu0 0.0
    %2616 = vmatpush1.msra.mxu0 %v41
    %2617 = vmatprep.subr.mxu0 0.0
    %2618 = vmatpush1.msra.mxu0 %v42
    %2619 = vmatprep.subr.mxu0 0.0
    %2620 = vmatpush1.msra.mxu0 0.0
    %2621 = vmatprep.subr.mxu0 0.0
    %2622 = vmatpush1.msra.mxu0 0.0
    %2623 = vmatprep.subr.mxu0 0.0
    %2624 = vmatpush1.msra.mxu0 0.0
    %2625 = vmatprep.subr.mxu0 0.0
    %2626 = vmatpush1.msra.mxu0 0.0
    %2627 = vmatprep.subr.mxu0 0.0
    %2628 = vmatpush1.msra.mxu0 0.0
    %2629 = vmatprep.subr.mxu0 0.0
    %2630 = vmatpush1.msra.mxu0 0.0
    %2631 = vmatprep.subr.mxu0 0.0
    %2632 = vmatpush1.msra.mxu0 0.0
    %2633 = vmatprep.subr.mxu0 0.0
    %2634 = vmatpush1.msra.mxu0 0.0
    %2635 = vmatprep.subr.mxu0 0.0
    %2636 = vmatpush1.msra.mxu0 0.0
    %2637 = vmatprep.subr.mxu0 0.0
    %2638 = vmatpush1.msra.mxu0 0.0
    %2639 = vmatprep.subr.mxu0 0.0
    %2640 = vmatpush1.msra.mxu0 0.0
    %2641 = vmatprep.subr.mxu0 0.0
    %2642 = vmatpush1.msra.mxu0 0.0
    %2643 = vmatprep.subr.mxu0 0.0
    %2644 = vmatpush1.msra.mxu0 0.0
    %2645 = vmatprep.subr.mxu0 0.0
    %2646 = vmatpush1.msra.mxu0 0.0
    %2647 = vmatprep.subr.mxu0 0.0
    %2648 = vmatpush1.msra.mxu0 0.0
    %2649 = vmatprep.subr.mxu0 0.0
    %2650 = vmatpush1.msra.mxu0 0.0
    %2651 = vmatprep.subr.mxu0 0.0
    %2652 = vmatpush1.msra.mxu0 0.0
    %2653 = vmatprep.subr.mxu0 0.0
    %2654 = vmatpush1.msra.mxu0 0.0
    %2655 = vmatprep.subr.mxu0 0.0
    %2656 = vmatpush1.msra.mxu0 0.0
    %2657 = vmatprep.subr.mxu0 0.0
    %2658 = vmatpush1.msra.mxu0 0.0
    %2659 = vmatprep.subr.mxu0 0.0
    %2660 = vmatpush1.msra.mxu0 0.0
    %2661 = vmatprep.subr.mxu0 0.0
    %2662 = vmatpush1.msra.mxu0 0.0
    %2663 = vmatprep.subr.mxu0 0.0
    %2664 = vmatpush1.msra.mxu0 0.0
    %2665 = vmatprep.subr.mxu0 0.0
    %2666 = vmatpush1.msra.mxu0 0.0
    %2667 = vmatprep.subr.mxu0 0.0
    %2668 = vmatpush1.msra.mxu0 0.0
    %2669 = vmatprep.subr.mxu0 0.0
    %2670 = vmatpush1.msra.mxu0 0.0
    %2671 = vmatprep.subr.mxu0 0.0
    %2672 = vmatpush1.msra.mxu0 0.0
    %2673 = vmatprep.subr.mxu0 0.0
    %2674 = vmatpush1.msra.mxu0 0.0
    %2675 = vmatprep.subr.mxu0 0.0
    %2676 = vmatpush1.msra.mxu0 0.0
    %2677 = vmatprep.subr.mxu0 0.0
    %2678 = vmatpush1.msra.mxu0 0.0
    %2679 = vmatprep.mubr.f32.mxu0 0.0
    %2680 = vmatmul.mubr.f32.gmra.mrb[0].mxu0 %v2613
    %v2681 = vpop.f32.mrb[0].mxu0
    %v2682 = vadd.f32 %v2609, %v2681
    %v2683 = vpop.f32.mrb[0].mxu0
    %2684 = vdwg.mxu0
    %v2685 = vadd.f32 %v2682, %v61
    %v2686 = vmul.f32 %v2685, %v87
    %v2687 = vtanh.pop %v2686
    %v2688 = vmul.f32 %v2687, %v87
    %v2689 = vadd.f32 %v2688, %v88
    %v2690 = vmul.f32 %v2689, %v2276
    %2692 = vrot.lane.b32.xlu0 %v2689, 64
    %v2693 = vpop.permute.xlu0 %2692
    %v2695 = vmul.f32 %v2689, %v2693
    %2697 = vrot.lane.b32.xlu0 %v2695, 32
    %v2698 = vpop.permute.xlu0 %2697
    %v2700 = vadd.f32 %v2690, %v2698
    %v2701 = vtanh.pop %v2700
    %2703 = vrot.lane.b32.xlu0 %v2701, 64
    %v2704 = vpop.permute.xlu0 %2703
    %v2706 = vmul.f32 %v2689, %v2704
    %2707 = vrot.lane.b32.xlu0 %v2461, 32
    %v2708 = vpop.permute.xlu0 %2707
    %v2709 = vsel %vm269, %v2708, 0
    %2711 = vmatprep.subr.mxu0 0.0
    %2712 = vmatpush1.msra.mxu0 %v52
    %2713 = vmatprep.subr.mxu0 0.0
    %2714 = vmatpush1.msra.mxu0 %v53
    %2715 = vmatprep.subr.mxu0 0.0
    %2716 = vmatpush1.msra.mxu0 %v54
    %2717 = vmatprep.subr.mxu0 0.0
    %2718 = vmatpush1.msra.mxu0 %v55
    %2719 = vmatprep.subr.mxu0 0.0
    %2720 = vmatpush1.msra.mxu0 0.0
    %2721 = vmatprep.subr.mxu0 0.0
    %2722 = vmatpush1.msra.mxu0 0.0
    %2723 = vmatprep.subr.mxu0 0.0
    %2724 = vmatpush1.msra.mxu0 0.0
    %2725 = vmatprep.subr.mxu0 0.0
    %2726 = vmatpush1.msra.mxu0 0.0
    %2727 = vmatprep.subr.mxu0 0.0
    %2728 = vmatpush1.msra.mxu0 0.0
    %2729 = vmatprep.subr.mxu0 0.0
    %2730 = vmatpush1.msra.mxu0 0.0
    %2731 = vmatprep.subr.mxu0 0.0
    %2732 = vmatpush1.msra.mxu0 0.0
    %2733 = vmatprep.subr.mxu0 0.0
    %2734 = vmatpush1.msra.mxu0 0.0
    %2735 = vmatprep.subr.mxu0 0.0
    %2736 = vmatpush1.msra.mxu0 0.0
    %2737 = vmatprep.subr.mxu0 0.0
    %2738 = vmatpush1.msra.mxu0 0.0
    %2739 = vmatprep.subr.mxu0 0.0
    %2740 = vmatpush1.msra.mxu0 0.0
    %2741 = vmatprep.subr.mxu0 0.0
    %2742 = vmatpush1.msra.mxu0 0.0
    %2743 = vmatprep.subr.mxu0 0.0
    %2744 = vmatpush1.msra.mxu0 0.0
    %2745 = vmatprep.subr.mxu0 0.0
    %2746 = vmatpush1.msra.mxu0 0.0
    %2747 = vmatprep.subr.mxu0 0.0
    %2748 = vmatpush1.msra.mxu0 0.0
    %2749 = vmatprep.subr.mxu0 0.0
    %2750 = vmatpush1.msra.mxu0 0.0
    %2751 = vmatprep.subr.mxu0 0.0
    %2752 = vmatpush1.msra.mxu0 0.0
    %2753 = vmatprep.subr.mxu0 0.0
    %2754 = vmatpush1.msra.mxu0 0.0
    %2755 = vmatprep.subr.mxu0 0.0
    %2756 = vmatpush1.msra.mxu0 0.0
    %2757 = vmatprep.subr.mxu0 0.0
    %2758 = vmatpush1.msra.mxu0 0.0
    %2759 = vmatprep.subr.mxu0 0.0
    %2760 = vmatpush1.msra.mxu0 0.0
    %2761 = vmatprep.subr.mxu0 0.0
    %2762 = vmatpush1.msra.mxu0 0.0
    %2763 = vmatprep.subr.mxu0 0.0
    %2764 = vmatpush1.msra.mxu0 0.0
    %2765 = vmatprep.subr.mxu0 0.0
    %2766 = vmatpush1.msra.mxu0 0.0
    %2767 = vmatprep.subr.mxu0 0.0
    %2768 = vmatpush1.msra.mxu0 0.0
    %2769 = vmatprep.subr.mxu0 0.0
    %2770 = vmatpush1.msra.mxu0 0.0
    %2771 = vmatprep.subr.mxu0 0.0
    %2772 = vmatpush1.msra.mxu0 0.0
    %2773 = vmatprep.subr.mxu0 0.0
    %2774 = vmatpush1.msra.mxu0 0.0
    %2775 = vmatprep.mubr.f32.mxu0 0.0
    %2776 = vmatmul.mubr.f32.gmra.mrb[0].mxu0 %v2709
    %v2777 = vpop.f32.mrb[0].mxu0
    %v2778 = vadd.f32 0.0, %v2777
    %v2779 = vpop.f32.mrb[0].mxu0
    %2780 = vdwg.mxu0
    %2782 = vrot.lane.b32.xlu0 %v2706, 32
    %v2783 = vpop.permute.xlu0 %2782
    %v2784 = vsel %vm269, %v2783, 0
    %2786 = vmatprep.subr.mxu0 0.0
    %2787 = vmatpush1.msra.mxu0 %v48
    %2788 = vmatprep.subr.mxu0 0.0
    %2789 = vmatpush1.msra.mxu0 %v49
    %2790 = vmatprep.subr.mxu0 0.0
    %2791 = vmatpush1.msra.mxu0 %v50
    %2792 = vmatprep.subr.mxu0 0.0
    %2793 = vmatpush1.msra.mxu0 %v51
    %2794 = vmatprep.subr.mxu0 0.0
    %2795 = vmatpush1.msra.mxu0 0.0
    %2796 = vmatprep.subr.mxu0 0.0
    %2797 = vmatpush1.msra.mxu0 0.0
    %2798 = vmatprep.subr.mxu0 0.0
    %2799 = vmatpush1.msra.mxu0 0.0
    %2800 = vmatprep.subr.mxu0 0.0
    %2801 = vmatpush1.msra.mxu0 0.0
    %2802 = vmatprep.subr.mxu0 0.0
    %2803 = vmatpush1.msra.mxu0 0.0
    %2804 = vmatprep.subr.mxu0 0.0
    %2805 = vmatpush1.msra.mxu0 0.0
    %2806 = vmatprep.subr.mxu0 0.0
    %2807 = vmatpush1.msra.mxu0 0.0
    %2808 = vmatprep.subr.mxu0 0.0
    %2809 = vmatpush1.msra.mxu0 0.0
    %2810 = vmatprep.subr.mxu0 0.0
    %2811 = vmatpush1.msra.mxu0 0.0
    %2812 = vmatprep.subr.mxu0 0.0
    %2813 = vmatpush1.msra.mxu0 0.0
    %2814 = vmatprep.subr.mxu0 0.0
    %2815 = vmatpush1.msra.mxu0 0.0
    %2816 = vmatprep.subr.mxu0 0.0
    %2817 = vmatpush1.msra.mxu0 0.0
    %2818 = vmatprep.subr.mxu0 0.0
    %2819 = vmatpush1.msra.mxu0 0.0
    %2820 = vmatprep.subr.mxu0 0.0
    %2821 = vmatpush1.msra.mxu0 0.0
    %2822 = vmatprep.subr.mxu0 0.0
    %2823 = vmatpush1.msra.mxu0 0.0
    %2824 = vmatprep.subr.mxu0 0.0
    %2825 = vmatpush1.msra.mxu0 0.0
    %2826 = vmatprep.subr.mxu0 0.0
    %2827 = vmatpush1.msra.mxu0 0.0
    %2828 = vmatprep.subr.mxu0 0.0
    %2829 = vmatpush1.msra.mxu0 0.0
    %2830 = vmatprep.subr.mxu0 0.0
    %2831 = vmatpush1.msra.mxu0 0.0
    %2832 = vmatprep.subr.mxu0 0.0
    %2833 = vmatpush1.msra.mxu0 0.0
    %2834 = vmatprep.subr.mxu0 0.0
    %2835 = vmatpush1.msra.mxu0 0.0
    %2836 = vmatprep.subr.mxu0 0.0
    %2837 = vmatpush1.msra.mxu0 0.0
    %2838 = vmatprep.subr.mxu0 0.0
    %2839 = vmatpush1.msra.mxu0 0.0
    %2840 = vmatprep.subr.mxu0 0.0
    %2841 = vmatpush1.msra.mxu0 0.0
    %2842 = vmatprep.subr.mxu0 0.0
    %2843 = vmatpush1.msra.mxu0 0.0
    %2844 = vmatprep.subr.mxu0 0.0
    %2845 = vmatpush1.msra.mxu0 0.0
    %2846 = vmatprep.subr.mxu0 0.0
    %2847 = vmatpush1.msra.mxu0 0.0
    %2848 = vmatprep.subr.mxu0 0.0
    %2849 = vmatpush1.msra.mxu0 0.0
    %2850 = vmatprep.mubr.f32.mxu0 0.0
    %2851 = vmatmul.mubr.f32.gmra.mrb[0].mxu0 %v2784
    %v2852 = vpop.f32.mrb[0].mxu0
    %v2853 = vadd.f32 %v2778, %v2852
    %v2854 = vpop.f32.mrb[0].mxu0
    %2855 = vdwg.mxu0
    %v2856 = vadd.f32 %v2853, %v69
    %v2857 = vmul.f32 %v2856, %v87
    %v2858 = vtanh.pop %v2857
    %v2859 = vmul.f32 %v2858, %v87
    %v2860 = vadd.f32 %v2859, %v88
    %v2861 = vmul.f32 %v2860, %v2455
    %2863 = vrot.lane.b32.xlu0 %v2860, 64
    %v2864 = vpop.permute.xlu0 %2863
    %v2866 = vmul.f32 %v2860, %v2864
    %2868 = vrot.lane.b32.xlu0 %v2866, 32
    %v2869 = vpop.permute.xlu0 %2868
    %v2871 = vadd.f32 %v2861, %v2869
    %v2872 = vtanh.pop %v2871
    %2874 = vrot.lane.b32.xlu0 %v2872, 64
    %v2875 = vpop.permute.xlu0 %2874
    %v2877 = vmul.f32 %v2860, %v2875
    %2878 = vmatprep.subr.mxu0 0.0
    %2879 = vmatpush1.msra.mxu0 %v43
    %2880 = vmatprep.subr.mxu0 0.0
    %2881 = vmatpush1.msra.mxu0 %v44
    %2882 = vmatprep.subr.mxu0 0.0
    %2883 = vmatpush1.msra.mxu0 %v45
    %2884 = vmatprep.subr.mxu0 0.0
    %2885 = vmatpush1.msra.mxu0 %v46
    %2886 = vmatprep.subr.mxu0 0.0
    %2887 = vmatpush1.msra.mxu0 0.0
    %2888 = vmatprep.subr.mxu0 0.0
    %2889 = vmatpush1.msra.mxu0 0.0
    %2890 = vmatprep.subr.mxu0 0.0
    %2891 = vmatpush1.msra.mxu0 0.0
    %2892 = vmatprep.subr.mxu0 0.0
    %2893 = vmatpush1.msra.mxu0 0.0
    %2894 = vmatprep.subr.mxu0 0.0
    %2895 = vmatpush1.msra.mxu0 0.0
    %2896 = vmatprep.subr.mxu0 0.0
    %2897 = vmatpush1.msra.mxu0 0.0
    %2898 = vmatprep.subr.mxu0 0.0
    %2899 = vmatpush1.msra.mxu0 0.0
    %2900 = vmatprep.subr.mxu0 0.0
    %2901 = vmatpush1.msra.mxu0 0.0
    %2902 = vmatprep.subr.mxu0 0.0
    %2903 = vmatpush1.msra.mxu0 0.0
    %2904 = vmatprep.subr.mxu0 0.0
    %2905 = vmatpush1.msra.mxu0 0.0
    %2906 = vmatprep.subr.mxu0 0.0
    %2907 = vmatpush1.msra.mxu0 0.0
    %2908 = vmatprep.subr.mxu0 0.0
    %2909 = vmatpush1.msra.mxu0 0.0
    %2910 = vmatprep.subr.mxu0 0.0
    %2911 = vmatpush1.msra.mxu0 0.0
    %2912 = vmatprep.subr.mxu0 0.0
    %2913 = vmatpush1.msra.mxu0 0.0
    %2914 = vmatprep.subr.mxu0 0.0
    %2915 = vmatpush1.msra.mxu0 0.0
    %2916 = vmatprep.subr.mxu0 0.0
    %2917 = vmatpush1.msra.mxu0 0.0
    %2918 = vmatprep.subr.mxu0 0.0
    %2919 = vmatpush1.msra.mxu0 0.0
    %2920 = vmatprep.subr.mxu0 0.0
    %2921 = vmatpush1.msra.mxu0 0.0
    %2922 = vmatprep.subr.mxu0 0.0
    %2923 = vmatpush1.msra.mxu0 0.0
    %2924 = vmatprep.subr.mxu0 0.0
    %2925 = vmatpush1.msra.mxu0 0.0
    %2926 = vmatprep.subr.mxu0 0.0
    %2927 = vmatpush1.msra.mxu0 0.0
    %2928 = vmatprep.subr.mxu0 0.0
    %2929 = vmatpush1.msra.mxu0 0.0
    %2930 = vmatprep.subr.mxu0 0.0
    %2931 = vmatpush1.msra.mxu0 0.0
    %2932 = vmatprep.subr.mxu0 0.0
    %2933 = vmatpush1.msra.mxu0 0.0
    %2934 = vmatprep.subr.mxu0 0.0
    %2935 = vmatpush1.msra.mxu0 0.0
    %2936 = vmatprep.subr.mxu0 0.0
    %2937 = vmatpush1.msra.mxu0 0.0
    %2938 = vmatprep.subr.mxu0 0.0
    %2939 = vmatpush1.msra.mxu0 0.0
    %2940 = vmatprep.subr.mxu0 0.0
    %2941 = vmatpush1.msra.mxu0 0.0
    %2942 = vmatprep.mubr.f32.mxu0 0.0
    %2943 = vmatmul.mubr.f32.gmra.mrb[0].mxu0 %v2784
    %v2944 = vpop.f32.mrb[0].mxu0
    %v2945 = vadd.f32 0.0, %v2944
    %v2946 = vpop.f32.mrb[0].mxu0
    %2947 = vdwg.mxu0
    %v2948 = vrot.slane %v2539, 2
    %v2949 = vsel %vm145, %v2948, 0
    %2951 = vmatprep.subr.mxu0 0.0
    %2952 = vmatpush1.msra.mxu0 %v41
    %2953 = vmatprep.subr.mxu0 0.0
    %2954 = vmatpush1.msra.mxu0 %v42
    %2955 = vmatprep.subr.mxu0 0.0
    %2956 = vmatpush1.msra.mxu0 0.0
    %2957 = vmatprep.subr.mxu0 0.0
    %2958 = vmatpush1.msra.mxu0 0.0
    %2959 = vmatprep.subr.mxu0 0.0
    %2960 = vmatpush1.msra.mxu0 0.0
    %2961 = vmatprep.subr.mxu0 0.0
    %2962 = vmatpush1.msra.mxu0 0.0
    %2963 = vmatprep.subr.mxu0 0.0
    %2964 = vmatpush1.msra.mxu0 0.0
    %2965 = vmatprep.subr.mxu0 0.0
    %2966 = vmatpush1.msra.mxu0 0.0
    %2967 = vmatprep.subr.mxu0 0.0
    %2968 = vmatpush1.msra.mxu0 0.0
    %2969 = vmatprep.subr.mxu0 0.0
    %2970 = vmatpush1.msra.mxu0 0.0
    %2971 = vmatprep.subr.mxu0 0.0
    %2972 = vmatpush1.msra.mxu0 0.0
    %2973 = vmatprep.subr.mxu0 0.0
    %2974 = vmatpush1.msra.mxu0 0.0
    %2975 = vmatprep.subr.mxu0 0.0
    %2976 = vmatpush1.msra.mxu0 0.0
    %2977 = vmatprep.subr.mxu0 0.0
    %2978 = vmatpush1.msra.mxu0 0.0
    %2979 = vmatprep.subr.mxu0 0.0
    %2980 = vmatpush1.msra.mxu0 0.0
    %2981 = vmatprep.subr.mxu0 0.0
    %2982 = vmatpush1.msra.mxu0 0.0
    %2983 = vmatprep.subr.mxu0 0.0
    %2984 = vmatpush1.msra.mxu0 0.0
    %2985 = vmatprep.subr.mxu0 0.0
    %2986 = vmatpush1.msra.mxu0 0.0
    %2987 = vmatprep.subr.mxu0 0.0
    %2988 = vmatpush1.msra.mxu0 0.0
    %2989 = vmatprep.subr.mxu0 0.0
    %2990 = vmatpush1.msra.mxu0 0.0
    %2991 = vmatprep.subr.mxu0 0.0
    %2992 = vmatpush1.msra.mxu0 0.0
    %2993 = vmatprep.subr.mxu0 0.0
    %2994 = vmatpush1.msra.mxu0 0.0
    %2995 = vmatprep.subr.mxu0 0.0
    %2996 = vmatpush1.msra.mxu0 0.0
    %2997 = vmatprep.subr.mxu0 0.0
    %2998 = vmatpush1.msra.mxu0 0.0
    %2999 = vmatprep.subr.mxu0 0.0
    %3000 = vmatpush1.msra.mxu0 0.0
    %3001 = vmatprep.subr.mxu0 0.0
    %3002 = vmatpush1.msra.mxu0 0.0
    %3003 = vmatprep.subr.mxu0 0.0
    %3004 = vmatpush1.msra.mxu0 0.0
    %3005 = vmatprep.subr.mxu0 0.0
    %3006 = vmatpush1.msra.mxu0 0.0
    %3007 = vmatprep.subr.mxu0 0.0
    %3008 = vmatpush1.msra.mxu0 0.0
    %3009 = vmatprep.subr.mxu0 0.0
    %3010 = vmatpush1.msra.mxu0 0.0
    %3011 = vmatprep.subr.mxu0 0.0
    %3012 = vmatpush1.msra.mxu0 0.0
    %3013 = vmatprep.subr.mxu0 0.0
    %3014 = vmatpush1.msra.mxu0 0.0
    %3015 = vmatprep.mubr.f32.mxu0 0.0
    %3016 = vmatmul.mubr.f32.gmra.mrb[0].mxu0 %v2949
    %v3017 = vpop.f32.mrb[0].mxu0
    %v3018 = vadd.f32 %v2945, %v3017
    %v3019 = vpop.f32.mrb[0].mxu0
    %3020 = vdwg.mxu0
    %v3021 = vadd.f32 %v3018, %v61
    %v3022 = vmul.f32 %v3021, %v87
    %v3023 = vtanh.pop %v3022
    %v3024 = vmul.f32 %v3023, %v87
    %v3025 = vadd.f32 %v3024, %v88
    %v3026 = vmul.f32 %v3025, %v2700
    %3028 = vrot.lane.b32.xlu0 %v3025, 64
    %v3029 = vpop.permute.xlu0 %3028
    %v3031 = vmul.f32 %v3025, %v3029
    %3033 = vrot.lane.b32.xlu0 %v3031, 32
    %v3034 = vpop.permute.xlu0 %3033
    %v3036 = vadd.f32 %v3026, %v3034
    %v3037 = vtanh.pop %v3036
    %3039 = vrot.lane.b32.xlu0 %v3037, 64
    %v3040 = vpop.permute.xlu0 %3039
    %v3042 = vmul.f32 %v3025, %v3040
    %3044 = vrot.lane.b32.xlu0 %v2877, 32
    %v3045 = vpop.permute.xlu0 %3044
    %v3046 = vsel %vm269, %v3045, 0
    %3048 = vmatprep.subr.mxu0 0.0
    %3049 = vmatpush1.msra.mxu0 %v52
    %3050 = vmatprep.subr.mxu0 0.0
    %3051 = vmatpush1.msra.mxu0 %v53
    %3052 = vmatprep.subr.mxu0 0.0
    %3053 = vmatpush1.msra.mxu0 %v54
    %3054 = vmatprep.subr.mxu0 0.0
    %3055 = vmatpush1.msra.mxu0 %v55
    %3056 = vmatprep.subr.mxu0 0.0
    %3057 = vmatpush1.msra.mxu0 0.0
    %3058 = vmatprep.subr.mxu0 0.0
    %3059 = vmatpush1.msra.mxu0 0.0
    %3060 = vmatprep.subr.mxu0 0.0
    %3061 = vmatpush1.msra.mxu0 0.0
    %3062 = vmatprep.subr.mxu0 0.0
    %3063 = vmatpush1.msra.mxu0 0.0
    %3064 = vmatprep.subr.mxu0 0.0
    %3065 = vmatpush1.msra.mxu0 0.0
    %3066 = vmatprep.subr.mxu0 0.0
    %3067 = vmatpush1.msra.mxu0 0.0
    %3068 = vmatprep.subr.mxu0 0.0
    %3069 = vmatpush1.msra.mxu0 0.0
    %3070 = vmatprep.subr.mxu0 0.0
    %3071 = vmatpush1.msra.mxu0 0.0
    %3072 = vmatprep.subr.mxu0 0.0
    %3073 = vmatpush1.msra.mxu0 0.0
    %3074 = vmatprep.subr.mxu0 0.0
    %3075 = vmatpush1.msra.mxu0 0.0
    %3076 = vmatprep.subr.mxu0 0.0
    %3077 = vmatpush1.msra.mxu0 0.0
    %3078 = vmatprep.subr.mxu0 0.0
    %3079 = vmatpush1.msra.mxu0 0.0
    %3080 = vmatprep.subr.mxu0 0.0
    %3081 = vmatpush1.msra.mxu0 0.0
    %3082 = vmatprep.subr.mxu0 0.0
    %3083 = vmatpush1.msra.mxu0 0.0
    %3084 = vmatprep.subr.mxu0 0.0
    %3085 = vmatpush1.msra.mxu0 0.0
    %3086 = vmatprep.subr.mxu0 0.0
    %3087 = vmatpush1.msra.mxu0 0.0
    %3088 = vmatprep.subr.mxu0 0.0
    %3089 = vmatpush1.msra.mxu0 0.0
    %3090 = vmatprep.subr.mxu0 0.0
    %3091 = vmatpush1.msra.mxu0 0.0
    %3092 = vmatprep.subr.mxu0 0.0
    %3093 = vmatpush1.msra.mxu0 0.0
    %3094 = vmatprep.subr.mxu0 0.0
    %3095 = vmatpush1.msra.mxu0 0.0
    %3096 = vmatprep.subr.mxu0 0.0
    %3097 = vmatpush1.msra.mxu0 0.0
    %3098 = vmatprep.subr.mxu0 0.0
    %3099 = vmatpush1.msra.mxu0 0.0
    %3100 = vmatprep.subr.mxu0 0.0
    %3101 = vmatpush1.msra.mxu0 0.0
    %3102 = vmatprep.subr.mxu0 0.0
    %3103 = vmatpush1.msra.mxu0 0.0
    %3104 = vmatprep.subr.mxu0 0.0
    %3105 = vmatpush1.msra.mxu0 0.0
    %3106 = vmatprep.subr.mxu0 0.0
    %3107 = vmatpush1.msra.mxu0 0.0
    %3108 = vmatprep.subr.mxu0 0.0
    %3109 = vmatpush1.msra.mxu0 0.0
    %3110 = vmatprep.subr.mxu0 0.0
    %3111 = vmatpush1.msra.mxu0 0.0
    %3112 = vmatprep.mubr.f32.mxu0 0.0
    %3113 = vmatmul.mubr.f32.gmra.mrb[0].mxu0 %v3046
    %v3114 = vpop.f32.mrb[0].mxu0
    %v3115 = vadd.f32 0.0, %v3114
    %v3116 = vpop.f32.mrb[0].mxu0
    %3117 = vdwg.mxu0
    %3119 = vrot.lane.b32.xlu0 %v3042, 32
    %v3120 = vpop.permute.xlu0 %3119
    %v3121 = vsel %vm269, %v3120, 0
    %3123 = vmatprep.subr.mxu0 0.0
    %3124 = vmatpush1.msra.mxu0 %v48
    %3125 = vmatprep.subr.mxu0 0.0
    %3126 = vmatpush1.msra.mxu0 %v49
    %3127 = vmatprep.subr.mxu0 0.0
    %3128 = vmatpush1.msra.mxu0 %v50
    %3129 = vmatprep.subr.mxu0 0.0
    %3130 = vmatpush1.msra.mxu0 %v51
    %3131 = vmatprep.subr.mxu0 0.0
    %3132 = vmatpush1.msra.mxu0 0.0
    %3133 = vmatprep.subr.mxu0 0.0
    %3134 = vmatpush1.msra.mxu0 0.0
    %3135 = vmatprep.subr.mxu0 0.0
    %3136 = vmatpush1.msra.mxu0 0.0
    %3137 = vmatprep.subr.mxu0 0.0
    %3138 = vmatpush1.msra.mxu0 0.0
    %3139 = vmatprep.subr.mxu0 0.0
    %3140 = vmatpush1.msra.mxu0 0.0
    %3141 = vmatprep.subr.mxu0 0.0
    %3142 = vmatpush1.msra.mxu0 0.0
    %3143 = vmatprep.subr.mxu0 0.0
    %3144 = vmatpush1.msra.mxu0 0.0
    %3145 = vmatprep.subr.mxu0 0.0
    %3146 = vmatpush1.msra.mxu0 0.0
    %3147 = vmatprep.subr.mxu0 0.0
    %3148 = vmatpush1.msra.mxu0 0.0
    %3149 = vmatprep.subr.mxu0 0.0
    %3150 = vmatpush1.msra.mxu0 0.0
    %3151 = vmatprep.subr.mxu0 0.0
    %3152 = vmatpush1.msra.mxu0 0.0
    %3153 = vmatprep.subr.mxu0 0.0
    %3154 = vmatpush1.msra.mxu0 0.0
    %3155 = vmatprep.subr.mxu0 0.0
    %3156 = vmatpush1.msra.mxu0 0.0
    %3157 = vmatprep.subr.mxu0 0.0
    %3158 = vmatpush1.msra.mxu0 0.0
    %3159 = vmatprep.subr.mxu0 0.0
    %3160 = vmatpush1.msra.mxu0 0.0
    %3161 = vmatprep.subr.mxu0 0.0
    %3162 = vmatpush1.msra.mxu0 0.0
    %3163 = vmatprep.subr.mxu0 0.0
    %3164 = vmatpush1.msra.mxu0 0.0
    %3165 = vmatprep.subr.mxu0 0.0
    %3166 = vmatpush1.msra.mxu0 0.0
    %3167 = vmatprep.subr.mxu0 0.0
    %3168 = vmatpush1.msra.mxu0 0.0
    %3169 = vmatprep.subr.mxu0 0.0
    %3170 = vmatpush1.msra.mxu0 0.0
    %3171 = vmatprep.subr.mxu0 0.0
    %3172 = vmatpush1.msra.mxu0 0.0
    %3173 = vmatprep.subr.mxu0 0.0
    %3174 = vmatpush1.msra.mxu0 0.0
    %3175 = vmatprep.subr.mxu0 0.0
    %3176 = vmatpush1.msra.mxu0 0.0
    %3177 = vmatprep.subr.mxu0 0.0
    %3178 = vmatpush1.msra.mxu0 0.0
    %3179 = vmatprep.subr.mxu0 0.0
    %3180 = vmatpush1.msra.mxu0 0.0
    %3181 = vmatprep.subr.mxu0 0.0
    %3182 = vmatpush1.msra.mxu0 0.0
    %3183 = vmatprep.subr.mxu0 0.0
    %3184 = vmatpush1.msra.mxu0 0.0
    %3185 = vmatprep.subr.mxu0 0.0
    %3186 = vmatpush1.msra.mxu0 0.0
    %3187 = vmatprep.mubr.f32.mxu0 0.0
    %3188 = vmatmul.mubr.f32.gmra.mrb[0].mxu0 %v3121
    %v3189 = vpop.f32.mrb[0].mxu0
    %v3190 = vadd.f32 %v3115, %v3189
    %v3191 = vpop.f32.mrb[0].mxu0
    %3192 = vdwg.mxu0
    %v3193 = vadd.f32 %v3190, %v69
    %v3194 = vmul.f32 %v3193, %v87
    %v3195 = vtanh.pop %v3194
    %v3196 = vmul.f32 %v3195, %v87
    %v3197 = vadd.f32 %v3196, %v88
    %v3198 = vmul.f32 %v3197, %v2871
    %3200 = vrot.lane.b32.xlu0 %v3197, 64
    %v3201 = vpop.permute.xlu0 %3200
    %v3203 = vmul.f32 %v3197, %v3201
    %3205 = vrot.lane.b32.xlu0 %v3203, 32
    %v3206 = vpop.permute.xlu0 %3205
    %v3208 = vadd.f32 %v3198, %v3206
    %v3209 = vtanh.pop %v3208
    %3211 = vrot.lane.b32.xlu0 %v3209, 64
    %v3212 = vpop.permute.xlu0 %3211
    %v3214 = vmul.f32 %v3197, %v3212
    %v3216 = vrot.slane %v3214, 6
    %v3218 = vsel %vm2465, %v3042, %v3216
    %3220 = vrot.lane.b32.xlu0 %v3218, 32
    %v3221 = vpop.permute.xlu0 %3220
    %v3222 = vsel %vm269, %v3221, 0
    %3224 = vmatprep.subr.mxu0 0.0
    %3225 = vmatpush1.msra.mxu0 %v71
    %3226 = vmatprep.subr.mxu0 0.0
    %3227 = vmatpush1.msra.mxu0 %v72
    %3228 = vmatprep.subr.mxu0 0.0
    %3229 = vmatpush1.msra.mxu0 %v73
    %3230 = vmatprep.subr.mxu0 0.0
    %3231 = vmatpush1.msra.mxu0 %v74
    %3232 = vmatprep.subr.mxu0 0.0
    %3233 = vmatpush1.msra.mxu0 0.0
    %3234 = vmatprep.subr.mxu0 0.0
    %3235 = vmatpush1.msra.mxu0 0.0
    %3236 = vmatprep.subr.mxu0 0.0
    %3237 = vmatpush1.msra.mxu0 0.0
    %3238 = vmatprep.subr.mxu0 0.0
    %3239 = vmatpush1.msra.mxu0 0.0
    %3240 = vmatprep.subr.mxu0 0.0
    %3241 = vmatpush1.msra.mxu0 0.0
    %3242 = vmatprep.subr.mxu0 0.0
    %3243 = vmatpush1.msra.mxu0 0.0
    %3244 = vmatprep.subr.mxu0 0.0
    %3245 = vmatpush1.msra.mxu0 0.0
    %3246 = vmatprep.subr.mxu0 0.0
    %3247 = vmatpush1.msra.mxu0 0.0
    %3248 = vmatprep.subr.mxu0 0.0
    %3249 = vmatpush1.msra.mxu0 0.0
    %3250 = vmatprep.subr.mxu0 0.0
    %3251 = vmatpush1.msra.mxu0 0.0
    %3252 = vmatprep.subr.mxu0 0.0
    %3253 = vmatpush1.msra.mxu0 0.0
    %3254 = vmatprep.subr.mxu0 0.0
    %3255 = vmatpush1.msra.mxu0 0.0
    %3256 = vmatprep.subr.mxu0 0.0
    %3257 = vmatpush1.msra.mxu0 0.0
    %3258 = vmatprep.subr.mxu0 0.0
    %3259 = vmatpush1.msra.mxu0 0.0
    %3260 = vmatprep.subr.mxu0 0.0
    %3261 = vmatpush1.msra.mxu0 0.0
    %3262 = vmatprep.subr.mxu0 0.0
    %3263 = vmatpush1.msra.mxu0 0.0
    %3264 = vmatprep.subr.mxu0 0.0
    %3265 = vmatpush1.msra.mxu0 0.0
    %3266 = vmatprep.subr.mxu0 0.0
    %3267 = vmatpush1.msra.mxu0 0.0
    %3268 = vmatprep.subr.mxu0 0.0
    %3269 = vmatpush1.msra.mxu0 0.0
    %3270 = vmatprep.subr.mxu0 0.0
    %3271 = vmatpush1.msra.mxu0 0.0
    %3272 = vmatprep.subr.mxu0 0.0
    %3273 = vmatpush1.msra.mxu0 0.0
    %3274 = vmatprep.subr.mxu0 0.0
    %3275 = vmatpush1.msra.mxu0 0.0
    %3276 = vmatprep.subr.mxu0 0.0
    %3277 = vmatpush1.msra.mxu0 0.0
    %3278 = vmatprep.subr.mxu0 0.0
    %3279 = vmatpush1.msra.mxu0 0.0
    %3280 = vmatprep.subr.mxu0 0.0
    %3281 = vmatpush1.msra.mxu0 0.0
    %3282 = vmatprep.subr.mxu0 0.0
    %3283 = vmatpush1.msra.mxu0 0.0
    %3284 = vmatprep.subr.mxu0 0.0
    %3285 = vmatpush1.msra.mxu0 0.0
    %3286 = vmatprep.subr.mxu0 0.0
    %3287 = vmatpush1.msra.mxu0 0.0
    %3288 = vmatprep.mubr.f32.mxu0 0.0
    %3289 = vmatmul.mubr.f32.gmra.mrb[0].mxu0 %v3222
    %v3290 = vpop.f32.mrb[0].mxu0
    %v3291 = vadd.f32 %v80, %v3290
    %v3292 = vpop.f32.mrb[0].mxu0
    %3293 = vdwg.mxu0
    %3294 = vmatprep.subr.mxu0 0.0
    %3295 = vmatpush1.msra.mxu0 %v43
    %3296 = vmatprep.subr.mxu0 0.0
    %3297 = vmatpush1.msra.mxu0 %v44
    %3298 = vmatprep.subr.mxu0 0.0
    %3299 = vmatpush1.msra.mxu0 %v45
    %3300 = vmatprep.subr.mxu0 0.0
    %3301 = vmatpush1.msra.mxu0 %v46
    %3302 = vmatprep.subr.mxu0 0.0
    %3303 = vmatpush1.msra.mxu0 0.0
    %3304 = vmatprep.subr.mxu0 0.0
    %3305 = vmatpush1.msra.mxu0 0.0
    %3306 = vmatprep.subr.mxu0 0.0
    %3307 = vmatpush1.msra.mxu0 0.0
    %3308 = vmatprep.subr.mxu0 0.0
    %3309 = vmatpush1.msra.mxu0 0.0
    %3310 = vmatprep.subr.mxu0 0.0
    %3311 = vmatpush1.msra.mxu0 0.0
    %3312 = vmatprep.subr.mxu0 0.0
    %3313 = vmatpush1.msra.mxu0 0.0
    %3314 = vmatprep.subr.mxu0 0.0
    %3315 = vmatpush1.msra.mxu0 0.0
    %3316 = vmatprep.subr.mxu0 0.0
    %3317 = vmatpush1.msra.mxu0 0.0
    %3318 = vmatprep.subr.mxu0 0.0
    %3319 = vmatpush1.msra.mxu0 0.0
    %3320 = vmatprep.subr.mxu0 0.0
    %3321 = vmatpush1.msra.mxu0 0.0
    %3322 = vmatprep.subr.mxu0 0.0
    %3323 = vmatpush1.msra.mxu0 0.0
    %3324 = vmatprep.subr.mxu0 0.0
    %3325 = vmatpush1.msra.mxu0 0.0
    %3326 = vmatprep.subr.mxu0 0.0
    %3327 = vmatpush1.msra.mxu0 0.0
    %3328 = vmatprep.subr.mxu0 0.0
    %3329 = vmatpush1.msra.mxu0 0.0
    %3330 = vmatprep.subr.mxu0 0.0
    %3331 = vmatpush1.msra.mxu0 0.0
    %3332 = vmatprep.subr.mxu0 0.0
    %3333 = vmatpush1.msra.mxu0 0.0
    %3334 = vmatprep.subr.mxu0 0.0
    %3335 = vmatpush1.msra.mxu0 0.0
    %3336 = vmatprep.subr.mxu0 0.0
    %3337 = vmatpush1.msra.mxu0 0.0
    %3338 = vmatprep.subr.mxu0 0.0
    %3339 = vmatpush1.msra.mxu0 0.0
    %3340 = vmatprep.subr.mxu0 0.0
    %3341 = vmatpush1.msra.mxu0 0.0
    %3342 = vmatprep.subr.mxu0 0.0
    %3343 = vmatpush1.msra.mxu0 0.0
    %3344 = vmatprep.subr.mxu0 0.0
    %3345 = vmatpush1.msra.mxu0 0.0
    %3346 = vmatprep.subr.mxu0 0.0
    %3347 = vmatpush1.msra.mxu0 0.0
    %3348 = vmatprep.subr.mxu0 0.0
    %3349 = vmatpush1.msra.mxu0 0.0
    %3350 = vmatprep.subr.mxu0 0.0
    %3351 = vmatpush1.msra.mxu0 0.0
    %3352 = vmatprep.subr.mxu0 0.0
    %3353 = vmatpush1.msra.mxu0 0.0
    %3354 = vmatprep.subr.mxu0 0.0
    %3355 = vmatpush1.msra.mxu0 0.0
    %3356 = vmatprep.subr.mxu0 0.0
    %3357 = vmatpush1.msra.mxu0 0.0
    %3358 = vmatprep.mubr.f32.mxu0 0.0
    %3359 = vmatmul.mubr.f32.gmra.mrb[0].mxu0 %v3121
    %v3360 = vpop.f32.mrb[0].mxu0
    %v3361 = vadd.f32 0.0, %v3360
    %v3362 = vpop.f32.mrb[0].mxu0
    %3363 = vdwg.mxu0
    %v3365 = vsel %vm145, %v3291, 0
    %3367 = vmatprep.subr.mxu0 0.0
    %3368 = vmatpush1.msra.mxu0 %v41
    %3369 = vmatprep.subr.mxu0 0.0
    %3370 = vmatpush1.msra.mxu0 %v42
    %3371 = vmatprep.subr.mxu0 0.0
    %3372 = vmatpush1.msra.mxu0 0.0
    %3373 = vmatprep.subr.mxu0 0.0
    %3374 = vmatpush1.msra.mxu0 0.0
    %3375 = vmatprep.subr.mxu0 0.0
    %3376 = vmatpush1.msra.mxu0 0.0
    %3377 = vmatprep.subr.mxu0 0.0
    %3378 = vmatpush1.msra.mxu0 0.0
    %3379 = vmatprep.subr.mxu0 0.0
    %3380 = vmatpush1.msra.mxu0 0.0
    %3381 = vmatprep.subr.mxu0 0.0
    %3382 = vmatpush1.msra.mxu0 0.0
    %3383 = vmatprep.subr.mxu0 0.0
    %3384 = vmatpush1.msra.mxu0 0.0
    %3385 = vmatprep.subr.mxu0 0.0
    %3386 = vmatpush1.msra.mxu0 0.0
    %3387 = vmatprep.subr.mxu0 0.0
    %3388 = vmatpush1.msra.mxu0 0.0
    %3389 = vmatprep.subr.mxu0 0.0
    %3390 = vmatpush1.msra.mxu0 0.0
    %3391 = vmatprep.subr.mxu0 0.0
    %3392 = vmatpush1.msra.mxu0 0.0
    %3393 = vmatprep.subr.mxu0 0.0
    %3394 = vmatpush1.msra.mxu0 0.0
    %3395 = vmatprep.subr.mxu0 0.0
    %3396 = vmatpush1.msra.mxu0 0.0
    %3397 = vmatprep.subr.mxu0 0.0
    %3398 = vmatpush1.msra.mxu0 0.0
    %3399 = vmatprep.subr.mxu0 0.0
    %3400 = vmatpush1.msra.mxu0 0.0
    %3401 = vmatprep.subr.mxu0 0.0
    %3402 = vmatpush1.msra.mxu0 0.0
    %3403 = vmatprep.subr.mxu0 0.0
    %3404 = vmatpush1.msra.mxu0 0.0
    %3405 = vmatprep.subr.mxu0 0.0
    %3406 = vmatpush1.msra.mxu0 0.0
    %3407 = vmatprep.subr.mxu0 0.0
    %3408 = vmatpush1.msra.mxu0 0.0
    %3409 = vmatprep.subr.mxu0 0.0
    %3410 = vmatpush1.msra.mxu0 0.0
    %3411 = vmatprep.subr.mxu0 0.0
    %3412 = vmatpush1.msra.mxu0 0.0
    %3413 = vmatprep.subr.mxu0 0.0
    %3414 = vmatpush1.msra.mxu0 0.0
    %3415 = vmatprep.subr.mxu0 0.0
    %3416 = vmatpush1.msra.mxu0 0.0
    %3417 = vmatprep.subr.mxu0 0.0
    %3418 = vmatpush1.msra.mxu0 0.0
    %3419 = vmatprep.subr.mxu0 0.0
    %3420 = vmatpush1.msra.mxu0 0.0
    %3421 = vmatprep.subr.mxu0 0.0
    %3422 = vmatpush1.msra.mxu0 0.0
    %3423 = vmatprep.subr.mxu0 0.0
    %3424 = vmatpush1.msra.mxu0 0.0
    %3425 = vmatprep.subr.mxu0 0.0
    %3426 = vmatpush1.msra.mxu0 0.0
    %3427 = vmatprep.subr.mxu0 0.0
    %3428 = vmatpush1.msra.mxu0 0.0
    %3429 = vmatprep.subr.mxu0 0.0
    %3430 = vmatpush1.msra.mxu0 0.0
    %3431 = vmatprep.mubr.f32.mxu0 0.0
    %3432 = vmatmul.mubr.f32.gmra.mrb[0].mxu0 %v3365
    %v3433 = vpop.f32.mrb[0].mxu0
    %v3434 = vadd.f32 %v3361, %v3433
    %v3435 = vpop.f32.mrb[0].mxu0
    %3436 = vdwg.mxu0
    %v3437 = vadd.f32 %v3434, %v61
    %v3438 = vmul.f32 %v3437, %v87
    %v3439 = vtanh.pop %v3438
    %v3440 = vmul.f32 %v3439, %v87
    %v3441 = vadd.f32 %v3440, %v88
    %v3442 = vmul.f32 %v3441, %v3036
    %3444 = vrot.lane.b32.xlu0 %v3441, 64
    %v3445 = vpop.permute.xlu0 %3444
    %v3447 = vmul.f32 %v3441, %v3445
    %3449 = vrot.lane.b32.xlu0 %v3447, 32
    %v3450 = vpop.permute.xlu0 %3449
    %v3452 = vadd.f32 %v3442, %v3450
    %v3453 = vtanh.pop %v3452
    %3455 = vrot.lane.b32.xlu0 %v3453, 64
    %v3456 = vpop.permute.xlu0 %3455
    %v3458 = vmul.f32 %v3441, %v3456
    %3459 = vrot.lane.b32.xlu0 %v3214, 32
    %v3460 = vpop.permute.xlu0 %3459
    %v3461 = vsel %vm269, %v3460, 0
    %3463 = vmatprep.subr.mxu0 0.0
    %3464 = vmatpush1.msra.mxu0 %v52
    %3465 = vmatprep.subr.mxu0 0.0
    %3466 = vmatpush1.msra.mxu0 %v53
    %3467 = vmatprep.subr.mxu0 0.0
    %3468 = vmatpush1.msra.mxu0 %v54
    %3469 = vmatprep.subr.mxu0 0.0
    %3470 = vmatpush1.msra.mxu0 %v55
    %3471 = vmatprep.subr.mxu0 0.0
    %3472 = vmatpush1.msra.mxu0 0.0
    %3473 = vmatprep.subr.mxu0 0.0
    %3474 = vmatpush1.msra.mxu0 0.0
    %3475 = vmatprep.subr.mxu0 0.0
    %3476 = vmatpush1.msra.mxu0 0.0
    %3477 = vmatprep.subr.mxu0 0.0
    %3478 = vmatpush1.msra.mxu0 0.0
    %3479 = vmatprep.subr.mxu0 0.0
    %3480 = vmatpush1.msra.mxu0 0.0
    %3481 = vmatprep.subr.mxu0 0.0
    %3482 = vmatpush1.msra.mxu0 0.0
    %3483 = vmatprep.subr.mxu0 0.0
    %3484 = vmatpush1.msra.mxu0 0.0
    %3485 = vmatprep.subr.mxu0 0.0
    %3486 = vmatpush1.msra.mxu0 0.0
    %3487 = vmatprep.subr.mxu0 0.0
    %3488 = vmatpush1.msra.mxu0 0.0
    %3489 = vmatprep.subr.mxu0 0.0
    %3490 = vmatpush1.msra.mxu0 0.0
    %3491 = vmatprep.subr.mxu0 0.0
    %3492 = vmatpush1.msra.mxu0 0.0
    %3493 = vmatprep.subr.mxu0 0.0
    %3494 = vmatpush1.msra.mxu0 0.0
    %3495 = vmatprep.subr.mxu0 0.0
    %3496 = vmatpush1.msra.mxu0 0.0
    %3497 = vmatprep.subr.mxu0 0.0
    %3498 = vmatpush1.msra.mxu0 0.0
    %3499 = vmatprep.subr.mxu0 0.0
    %3500 = vmatpush1.msra.mxu0 0.0
    %3501 = vmatprep.subr.mxu0 0.0
    %3502 = vmatpush1.msra.mxu0 0.0
    %3503 = vmatprep.subr.mxu0 0.0
    %3504 = vmatpush1.msra.mxu0 0.0
    %3505 = vmatprep.subr.mxu0 0.0
    %3506 = vmatpush1.msra.mxu0 0.0
    %3507 = vmatprep.subr.mxu0 0.0
    %3508 = vmatpush1.msra.mxu0 0.0
    %3509 = vmatprep.subr.mxu0 0.0
    %3510 = vmatpush1.msra.mxu0 0.0
    %3511 = vmatprep.subr.mxu0 0.0
    %3512 = vmatpush1.msra.mxu0 0.0
    %3513 = vmatprep.subr.mxu0 0.0
    %3514 = vmatpush1.msra.mxu0 0.0
    %3515 = vmatprep.subr.mxu0 0.0
    %3516 = vmatpush1.msra.mxu0 0.0
    %3517 = vmatprep.subr.mxu0 0.0
    %3518 = vmatpush1.msra.mxu0 0.0
    %3519 = vmatprep.subr.mxu0 0.0
    %3520 = vmatpush1.msra.mxu0 0.0
    %3521 = vmatprep.subr.mxu0 0.0
    %3522 = vmatpush1.msra.mxu0 0.0
    %3523 = vmatprep.subr.mxu0 0.0
    %3524 = vmatpush1.msra.mxu0 0.0
    %3525 = vmatprep.subr.mxu0 0.0
    %3526 = vmatpush1.msra.mxu0 0.0
    %3527 = vmatprep.mubr.f32.mxu0 0.0
    %3528 = vmatmul.mubr.f32.gmra.mrb[0].mxu0 %v3461
    %v3529 = vpop.f32.mrb[0].mxu0
    %v3530 = vadd.f32 0.0, %v3529
    %v3531 = vpop.f32.mrb[0].mxu0
    %3532 = vdwg.mxu0
    %3534 = vrot.lane.b32.xlu0 %v3458, 32
    %v3535 = vpop.permute.xlu0 %3534
    %v3536 = vsel %vm269, %v3535, 0
    %3538 = vmatprep.subr.mxu0 0.0
    %3539 = vmatpush1.msra.mxu0 %v48
    %3540 = vmatprep.subr.mxu0 0.0
    %3541 = vmatpush1.msra.mxu0 %v49
    %3542 = vmatprep.subr.mxu0 0.0
    %3543 = vmatpush1.msra.mxu0 %v50
    %3544 = vmatprep.subr.mxu0 0.0
    %3545 = vmatpush1.msra.mxu0 %v51
    %3546 = vmatprep.subr.mxu0 0.0
    %3547 = vmatpush1.msra.mxu0 0.0
    %3548 = vmatprep.subr.mxu0 0.0
    %3549 = vmatpush1.msra.mxu0 0.0
    %3550 = vmatprep.subr.mxu0 0.0
    %3551 = vmatpush1.msra.mxu0 0.0
    %3552 = vmatprep.subr.mxu0 0.0
    %3553 = vmatpush1.msra.mxu0 0.0
    %3554 = vmatprep.subr.mxu0 0.0
    %3555 = vmatpush1.msra.mxu0 0.0
    %3556 = vmatprep.subr.mxu0 0.0
    %3557 = vmatpush1.msra.mxu0 0.0
    %3558 = vmatprep.subr.mxu0 0.0
    %3559 = vmatpush1.msra.mxu0 0.0
    %3560 = vmatprep.subr.mxu0 0.0
    %3561 = vmatpush1.msra.mxu0 0.0
    %3562 = vmatprep.subr.mxu0 0.0
    %3563 = vmatpush1.msra.mxu0 0.0
    %3564 = vmatprep.subr.mxu0 0.0
    %3565 = vmatpush1.msra.mxu0 0.0
    %3566 = vmatprep.subr.mxu0 0.0
    %3567 = vmatpush1.msra.mxu0 0.0
    %3568 = vmatprep.subr.mxu0 0.0
    %3569 = vmatpush1.msra.mxu0 0.0
    %3570 = vmatprep.subr.mxu0 0.0
    %3571 = vmatpush1.msra.mxu0 0.0
    %3572 = vmatprep.subr.mxu0 0.0
    %3573 = vmatpush1.msra.mxu0 0.0
    %3574 = vmatprep.subr.mxu0 0.0
    %3575 = vmatpush1.msra.mxu0 0.0
    %3576 = vmatprep.subr.mxu0 0.0
    %3577 = vmatpush1.msra.mxu0 0.0
    %3578 = vmatprep.subr.mxu0 0.0
    %3579 = vmatpush1.msra.mxu0 0.0
    %3580 = vmatprep.subr.mxu0 0.0
    %3581 = vmatpush1.msra.mxu0 0.0
    %3582 = vmatprep.subr.mxu0 0.0
    %3583 = vmatpush1.msra.mxu0 0.0
    %3584 = vmatprep.subr.mxu0 0.0
    %3585 = vmatpush1.msra.mxu0 0.0
    %3586 = vmatprep.subr.mxu0 0.0
    %3587 = vmatpush1.msra.mxu0 0.0
    %3588 = vmatprep.subr.mxu0 0.0
    %3589 = vmatpush1.msra.mxu0 0.0
    %3590 = vmatprep.subr.mxu0 0.0
    %3591 = vmatpush1.msra.mxu0 0.0
    %3592 = vmatprep.subr.mxu0 0.0
    %3593 = vmatpush1.msra.mxu0 0.0
    %3594 = vmatprep.subr.mxu0 0.0
    %3595 = vmatpush1.msra.mxu0 0.0
    %3596 = vmatprep.subr.mxu0 0.0
    %3597 = vmatpush1.msra.mxu0 0.0
    %3598 = vmatprep.subr.mxu0 0.0
    %3599 = vmatpush1.msra.mxu0 0.0
    %3600 = vmatprep.subr.mxu0 0.0
    %3601 = vmatpush1.msra.mxu0 0.0
    %3602 = vmatprep.mubr.f32.mxu0 0.0
    %3603 = vmatmul.mubr.f32.gmra.mrb[0].mxu0 %v3536
    %v3604 = vpop.f32.mrb[0].mxu0
    %v3605 = vadd.f32 %v3530, %v3604
    %v3606 = vpop.f32.mrb[0].mxu0
    %3607 = vdwg.mxu0
    %v3608 = vadd.f32 %v3605, %v69
    %v3609 = vmul.f32 %v3608, %v87
    %v3610 = vtanh.pop %v3609
    %v3611 = vmul.f32 %v3610, %v87
    %v3612 = vadd.f32 %v3611, %v88
    %v3613 = vmul.f32 %v3612, %v3208
    %3615 = vrot.lane.b32.xlu0 %v3612, 64
    %v3616 = vpop.permute.xlu0 %3615
    %v3618 = vmul.f32 %v3612, %v3616
    %3620 = vrot.lane.b32.xlu0 %v3618, 32
    %v3621 = vpop.permute.xlu0 %3620
    %v3623 = vadd.f32 %v3613, %v3621
    %v3624 = vtanh.pop %v3623
    %3626 = vrot.lane.b32.xlu0 %v3624, 64
    %v3627 = vpop.permute.xlu0 %3626
    %v3629 = vmul.f32 %v3612, %v3627
    %3630 = vmatprep.subr.mxu0 0.0
    %3631 = vmatpush1.msra.mxu0 %v43
    %3632 = vmatprep.subr.mxu0 0.0
    %3633 = vmatpush1.msra.mxu0 %v44
    %3634 = vmatprep.subr.mxu0 0.0
    %3635 = vmatpush1.msra.mxu0 %v45
    %3636 = vmatprep.subr.mxu0 0.0
    %3637 = vmatpush1.msra.mxu0 %v46
    %3638 = vmatprep.subr.mxu0 0.0
    %3639 = vmatpush1.msra.mxu0 0.0
    %3640 = vmatprep.subr.mxu0 0.0
    %3641 = vmatpush1.msra.mxu0 0.0
    %3642 = vmatprep.subr.mxu0 0.0
    %3643 = vmatpush1.msra.mxu0 0.0
    %3644 = vmatprep.subr.mxu0 0.0
    %3645 = vmatpush1.msra.mxu0 0.0
    %3646 = vmatprep.subr.mxu0 0.0
    %3647 = vmatpush1.msra.mxu0 0.0
    %3648 = vmatprep.subr.mxu0 0.0
    %3649 = vmatpush1.msra.mxu0 0.0
    %3650 = vmatprep.subr.mxu0 0.0
    %3651 = vmatpush1.msra.mxu0 0.0
    %3652 = vmatprep.subr.mxu0 0.0
    %3653 = vmatpush1.msra.mxu0 0.0
    %3654 = vmatprep.subr.mxu0 0.0
    %3655 = vmatpush1.msra.mxu0 0.0
    %3656 = vmatprep.subr.mxu0 0.0
    %3657 = vmatpush1.msra.mxu0 0.0
    %3658 = vmatprep.subr.mxu0 0.0
    %3659 = vmatpush1.msra.mxu0 0.0
    %3660 = vmatprep.subr.mxu0 0.0
    %3661 = vmatpush1.msra.mxu0 0.0
    %3662 = vmatprep.subr.mxu0 0.0
    %3663 = vmatpush1.msra.mxu0 0.0
    %3664 = vmatprep.subr.mxu0 0.0
    %3665 = vmatpush1.msra.mxu0 0.0
    %3666 = vmatprep.subr.mxu0 0.0
    %3667 = vmatpush1.msra.mxu0 0.0
    %3668 = vmatprep.subr.mxu0 0.0
    %3669 = vmatpush1.msra.mxu0 0.0
    %3670 = vmatprep.subr.mxu0 0.0
    %3671 = vmatpush1.msra.mxu0 0.0
    %3672 = vmatprep.subr.mxu0 0.0
    %3673 = vmatpush1.msra.mxu0 0.0
    %3674 = vmatprep.subr.mxu0 0.0
    %3675 = vmatpush1.msra.mxu0 0.0
    %3676 = vmatprep.subr.mxu0 0.0
    %3677 = vmatpush1.msra.mxu0 0.0
    %3678 = vmatprep.subr.mxu0 0.0
    %3679 = vmatpush1.msra.mxu0 0.0
    %3680 = vmatprep.subr.mxu0 0.0
    %3681 = vmatpush1.msra.mxu0 0.0
    %3682 = vmatprep.subr.mxu0 0.0
    %3683 = vmatpush1.msra.mxu0 0.0
    %3684 = vmatprep.subr.mxu0 0.0
    %3685 = vmatpush1.msra.mxu0 0.0
    %3686 = vmatprep.subr.mxu0 0.0
    %3687 = vmatpush1.msra.mxu0 0.0
    %3688 = vmatprep.subr.mxu0 0.0
    %3689 = vmatpush1.msra.mxu0 0.0
    %3690 = vmatprep.subr.mxu0 0.0
    %3691 = vmatpush1.msra.mxu0 0.0
    %3692 = vmatprep.subr.mxu0 0.0
    %3693 = vmatpush1.msra.mxu0 0.0
    %3694 = vmatprep.mubr.f32.mxu0 0.0
    %3695 = vmatmul.mubr.f32.gmra.mrb[0].mxu0 %v3536
    %v3696 = vpop.f32.mrb[0].mxu0
    %v3697 = vadd.f32 0.0, %v3696
    %v3698 = vpop.f32.mrb[0].mxu0
    %3699 = vdwg.mxu0
    %v3700 = vrot.slane %v3291, 2
    %v3701 = vsel %vm145, %v3700, 0
    %3703 = vmatprep.subr.mxu0 0.0
    %3704 = vmatpush1.msra.mxu0 %v41
    %3705 = vmatprep.subr.mxu0 0.0
    %3706 = vmatpush1.msra.mxu0 %v42
    %3707 = vmatprep.subr.mxu0 0.0
    %3708 = vmatpush1.msra.mxu0 0.0
    %3709 = vmatprep.subr.mxu0 0.0
    %3710 = vmatpush1.msra.mxu0 0.0
    %3711 = vmatprep.subr.mxu0 0.0
    %3712 = vmatpush1.msra.mxu0 0.0
    %3713 = vmatprep.subr.mxu0 0.0
    %3714 = vmatpush1.msra.mxu0 0.0
    %3715 = vmatprep.subr.mxu0 0.0
    %3716 = vmatpush1.msra.mxu0 0.0
    %3717 = vmatprep.subr.mxu0 0.0
    %3718 = vmatpush1.msra.mxu0 0.0
    %3719 = vmatprep.subr.mxu0 0.0
    %3720 = vmatpush1.msra.mxu0 0.0
    %3721 = vmatprep.subr.mxu0 0.0
    %3722 = vmatpush1.msra.mxu0 0.0
    %3723 = vmatprep.subr.mxu0 0.0
    %3724 = vmatpush1.msra.mxu0 0.0
    %3725 = vmatprep.subr.mxu0 0.0
    %3726 = vmatpush1.msra.mxu0 0.0
    %3727 = vmatprep.subr.mxu0 0.0
    %3728 = vmatpush1.msra.mxu0 0.0
    %3729 = vmatprep.subr.mxu0 0.0
    %3730 = vmatpush1.msra.mxu0 0.0
    %3731 = vmatprep.subr.mxu0 0.0
    %3732 = vmatpush1.msra.mxu0 0.0
    %3733 = vmatprep.subr.mxu0 0.0
    %3734 = vmatpush1.msra.mxu0 0.0
    %3735 = vmatprep.subr.mxu0 0.0
    %3736 = vmatpush1.msra.mxu0 0.0
    %3737 = vmatprep.subr.mxu0 0.0
    %3738 = vmatpush1.msra.mxu0 0.0
    %3739 = vmatprep.subr.mxu0 0.0
    %3740 = vmatpush1.msra.mxu0 0.0
    %3741 = vmatprep.subr.mxu0 0.0
    %3742 = vmatpush1.msra.mxu0 0.0
    %3743 = vmatprep.subr.mxu0 0.0
    %3744 = vmatpush1.msra.mxu0 0.0
    %3745 = vmatprep.subr.mxu0 0.0
    %3746 = vmatpush1.msra.mxu0 0.0
    %3747 = vmatprep.subr.mxu0 0.0
    %3748 = vmatpush1.msra.mxu0 0.0
    %3749 = vmatprep.subr.mxu0 0.0
    %3750 = vmatpush1.msra.mxu0 0.0
    %3751 = vmatprep.subr.mxu0 0.0
    %3752 = vmatpush1.msra.mxu0 0.0
    %3753 = vmatprep.subr.mxu0 0.0
    %3754 = vmatpush1.msra.mxu0 0.0
    %3755 = vmatprep.subr.mxu0 0.0
    %3756 = vmatpush1.msra.mxu0 0.0
    %3757 = vmatprep.subr.mxu0 0.0
    %3758 = vmatpush1.msra.mxu0 0.0
    %3759 = vmatprep.subr.mxu0 0.0
    %3760 = vmatpush1.msra.mxu0 0.0
    %3761 = vmatprep.subr.mxu0 0.0
    %3762 = vmatpush1.msra.mxu0 0.0
    %3763 = vmatprep.subr.mxu0 0.0
    %3764 = vmatpush1.msra.mxu0 0.0
    %3765 = vmatprep.subr.mxu0 0.0
    %3766 = vmatpush1.msra.mxu0 0.0
    %3767 = vmatprep.mubr.f32.mxu0 0.0
    %3768 = vmatmul.mubr.f32.gmra.mrb[0].mxu0 %v3701
    %v3769 = vpop.f32.mrb[0].mxu0
    %v3770 = vadd.f32 %v3697, %v3769
    %v3771 = vpop.f32.mrb[0].mxu0
    %3772 = vdwg.mxu0
    %v3773 = vadd.f32 %v3770, %v61
    %v3774 = vmul.f32 %v3773, %v87
    %v3775 = vtanh.pop %v3774
    %v3776 = vmul.f32 %v3775, %v87
    %v3777 = vadd.f32 %v3776, %v88
    %v3778 = vmul.f32 %v3777, %v3452
    %3780 = vrot.lane.b32.xlu0 %v3777, 64
    %v3781 = vpop.permute.xlu0 %3780
    %v3783 = vmul.f32 %v3777, %v3781
    %3785 = vrot.lane.b32.xlu0 %v3783, 32
    %v3786 = vpop.permute.xlu0 %3785
    %v3788 = vadd.f32 %v3778, %v3786
    %v3789 = vtanh.pop %v3788
    %3791 = vrot.lane.b32.xlu0 %v3789, 64
    %v3792 = vpop.permute.xlu0 %3791
    %v3794 = vmul.f32 %v3777, %v3792
    %3796 = vrot.lane.b32.xlu0 %v3629, 32
    %v3797 = vpop.permute.xlu0 %3796
    %v3798 = vsel %vm269, %v3797, 0
    %3800 = vmatprep.subr.mxu0 0.0
    %3801 = vmatpush1.msra.mxu0 %v52
    %3802 = vmatprep.subr.mxu0 0.0
    %3803 = vmatpush1.msra.mxu0 %v53
    %3804 = vmatprep.subr.mxu0 0.0
    %3805 = vmatpush1.msra.mxu0 %v54
    %3806 = vmatprep.subr.mxu0 0.0
    %3807 = vmatpush1.msra.mxu0 %v55
    %3808 = vmatprep.subr.mxu0 0.0
    %3809 = vmatpush1.msra.mxu0 0.0
    %3810 = vmatprep.subr.mxu0 0.0
    %3811 = vmatpush1.msra.mxu0 0.0
    %3812 = vmatprep.subr.mxu0 0.0
    %3813 = vmatpush1.msra.mxu0 0.0
    %3814 = vmatprep.subr.mxu0 0.0
    %3815 = vmatpush1.msra.mxu0 0.0
    %3816 = vmatprep.subr.mxu0 0.0
    %3817 = vmatpush1.msra.mxu0 0.0
    %3818 = vmatprep.subr.mxu0 0.0
    %3819 = vmatpush1.msra.mxu0 0.0
    %3820 = vmatprep.subr.mxu0 0.0
    %3821 = vmatpush1.msra.mxu0 0.0
    %3822 = vmatprep.subr.mxu0 0.0
    %3823 = vmatpush1.msra.mxu0 0.0
    %3824 = vmatprep.subr.mxu0 0.0
    %3825 = vmatpush1.msra.mxu0 0.0
    %3826 = vmatprep.subr.mxu0 0.0
    %3827 = vmatpush1.msra.mxu0 0.0
    %3828 = vmatprep.subr.mxu0 0.0
    %3829 = vmatpush1.msra.mxu0 0.0
    %3830 = vmatprep.subr.mxu0 0.0
    %3831 = vmatpush1.msra.mxu0 0.0
    %3832 = vmatprep.subr.mxu0 0.0
    %3833 = vmatpush1.msra.mxu0 0.0
    %3834 = vmatprep.subr.mxu0 0.0
    %3835 = vmatpush1.msra.mxu0 0.0
    %3836 = vmatprep.subr.mxu0 0.0
    %3837 = vmatpush1.msra.mxu0 0.0
    %3838 = vmatprep.subr.mxu0 0.0
    %3839 = vmatpush1.msra.mxu0 0.0
    %3840 = vmatprep.subr.mxu0 0.0
    %3841 = vmatpush1.msra.mxu0 0.0
    %3842 = vmatprep.subr.mxu0 0.0
    %3843 = vmatpush1.msra.mxu0 0.0
    %3844 = vmatprep.subr.mxu0 0.0
    %3845 = vmatpush1.msra.mxu0 0.0
    %3846 = vmatprep.subr.mxu0 0.0
    %3847 = vmatpush1.msra.mxu0 0.0
    %3848 = vmatprep.subr.mxu0 0.0
    %3849 = vmatpush1.msra.mxu0 0.0
    %3850 = vmatprep.subr.mxu0 0.0
    %3851 = vmatpush1.msra.mxu0 0.0
    %3852 = vmatprep.subr.mxu0 0.0
    %3853 = vmatpush1.msra.mxu0 0.0
    %3854 = vmatprep.subr.mxu0 0.0
    %3855 = vmatpush1.msra.mxu0 0.0
    %3856 = vmatprep.subr.mxu0 0.0
    %3857 = vmatpush1.msra.mxu0 0.0
    %3858 = vmatprep.subr.mxu0 0.0
    %3859 = vmatpush1.msra.mxu0 0.0
    %3860 = vmatprep.subr.mxu0 0.0
    %3861 = vmatpush1.msra.mxu0 0.0
    %3862 = vmatprep.subr.mxu0 0.0
    %3863 = vmatpush1.msra.mxu0 0.0
    %3864 = vmatprep.mubr.f32.mxu0 0.0
    %3865 = vmatmul.mubr.f32.gmra.mrb[0].mxu0 %v3798
    %v3866 = vpop.f32.mrb[0].mxu0
    %v3867 = vadd.f32 0.0, %v3866
    %v3868 = vpop.f32.mrb[0].mxu0
    %3869 = vdwg.mxu0
    %3871 = vrot.lane.b32.xlu0 %v3794, 32
    %v3872 = vpop.permute.xlu0 %3871
    %v3873 = vsel %vm269, %v3872, 0
    %3875 = vmatprep.subr.mxu0 0.0
    %3876 = vmatpush1.msra.mxu0 %v48
    %3877 = vmatprep.subr.mxu0 0.0
    %3878 = vmatpush1.msra.mxu0 %v49
    %3879 = vmatprep.subr.mxu0 0.0
    %3880 = vmatpush1.msra.mxu0 %v50
    %3881 = vmatprep.subr.mxu0 0.0
    %3882 = vmatpush1.msra.mxu0 %v51
    %3883 = vmatprep.subr.mxu0 0.0
    %3884 = vmatpush1.msra.mxu0 0.0
    %3885 = vmatprep.subr.mxu0 0.0
    %3886 = vmatpush1.msra.mxu0 0.0
    %3887 = vmatprep.subr.mxu0 0.0
    %3888 = vmatpush1.msra.mxu0 0.0
    %3889 = vmatprep.subr.mxu0 0.0
    %3890 = vmatpush1.msra.mxu0 0.0
    %3891 = vmatprep.subr.mxu0 0.0
    %3892 = vmatpush1.msra.mxu0 0.0
    %3893 = vmatprep.subr.mxu0 0.0
    %3894 = vmatpush1.msra.mxu0 0.0
    %3895 = vmatprep.subr.mxu0 0.0
    %3896 = vmatpush1.msra.mxu0 0.0
    %3897 = vmatprep.subr.mxu0 0.0
    %3898 = vmatpush1.msra.mxu0 0.0
    %3899 = vmatprep.subr.mxu0 0.0
    %3900 = vmatpush1.msra.mxu0 0.0
    %3901 = vmatprep.subr.mxu0 0.0
    %3902 = vmatpush1.msra.mxu0 0.0
    %3903 = vmatprep.subr.mxu0 0.0
    %3904 = vmatpush1.msra.mxu0 0.0
    %3905 = vmatprep.subr.mxu0 0.0
    %3906 = vmatpush1.msra.mxu0 0.0
    %3907 = vmatprep.subr.mxu0 0.0
    %3908 = vmatpush1.msra.mxu0 0.0
    %3909 = vmatprep.subr.mxu0 0.0
    %3910 = vmatpush1.msra.mxu0 0.0
    %3911 = vmatprep.subr.mxu0 0.0
    %3912 = vmatpush1.msra.mxu0 0.0
    %3913 = vmatprep.subr.mxu0 0.0
    %3914 = vmatpush1.msra.mxu0 0.0
    %3915 = vmatprep.subr.mxu0 0.0
    %3916 = vmatpush1.msra.mxu0 0.0
    %3917 = vmatprep.subr.mxu0 0.0
    %3918 = vmatpush1.msra.mxu0 0.0
    %3919 = vmatprep.subr.mxu0 0.0
    %3920 = vmatpush1.msra.mxu0 0.0
    %3921 = vmatprep.subr.mxu0 0.0
    %3922 = vmatpush1.msra.mxu0 0.0
    %3923 = vmatprep.subr.mxu0 0.0
    %3924 = vmatpush1.msra.mxu0 0.0
    %3925 = vmatprep.subr.mxu0 0.0
    %3926 = vmatpush1.msra.mxu0 0.0
    %3927 = vmatprep.subr.mxu0 0.0
    %3928 = vmatpush1.msra.mxu0 0.0
    %3929 = vmatprep.subr.mxu0 0.0
    %3930 = vmatpush1.msra.mxu0 0.0
    %3931 = vmatprep.subr.mxu0 0.0
    %3932 = vmatpush1.msra.mxu0 0.0
    %3933 = vmatprep.subr.mxu0 0.0
    %3934 = vmatpush1.msra.mxu0 0.0
    %3935 = vmatprep.subr.mxu0 0.0
    %3936 = vmatpush1.msra.mxu0 0.0
    %3937 = vmatprep.subr.mxu0 0.0
    %3938 = vmatpush1.msra.mxu0 0.0
    %3939 = vmatprep.mubr.f32.mxu0 0.0
    %3940 = vmatmul.mubr.f32.gmra.mrb[0].mxu0 %v3873
    %v3941 = vpop.f32.mrb[0].mxu0
    %v3942 = vadd.f32 %v3867, %v3941
    %v3943 = vpop.f32.mrb[0].mxu0
    %3944 = vdwg.mxu0
    %v3945 = vadd.f32 %v3942, %v69
    %v3946 = vmul.f32 %v3945, %v87
    %v3947 = vtanh.pop %v3946
    %v3948 = vmul.f32 %v3947, %v87
    %v3949 = vadd.f32 %v3948, %v88
    %v3950 = vmul.f32 %v3949, %v3623
    %3952 = vrot.lane.b32.xlu0 %v3949, 64
    %v3953 = vpop.permute.xlu0 %3952
    %v3955 = vmul.f32 %v3949, %v3953
    %3957 = vrot.lane.b32.xlu0 %v3955, 32
    %v3958 = vpop.permute.xlu0 %3957
    %v3960 = vadd.f32 %v3950, %v3958
    %v3961 = vtanh.pop %v3960
    %3963 = vrot.lane.b32.xlu0 %v3961, 64
    %v3964 = vpop.permute.xlu0 %3963
    %v3966 = vmul.f32 %v3949, %v3964
    %v3968 = vrot.slane %v3966, 6
    %v3970 = vsel %vm2465, %v3794, %v3968
    %3972 = vrot.lane.b32.xlu0 %v3970, 32
    %v3973 = vpop.permute.xlu0 %3972
    %v3974 = vsel %vm269, %v3973, 0
    %3976 = vmatprep.subr.mxu0 0.0
    %3977 = vmatpush1.msra.mxu0 %v71
    %3978 = vmatprep.subr.mxu0 0.0
    %3979 = vmatpush1.msra.mxu0 %v72
    %3980 = vmatprep.subr.mxu0 0.0
    %3981 = vmatpush1.msra.mxu0 %v73
    %3982 = vmatprep.subr.mxu0 0.0
    %3983 = vmatpush1.msra.mxu0 %v74
    %3984 = vmatprep.subr.mxu0 0.0
    %3985 = vmatpush1.msra.mxu0 0.0
    %3986 = vmatprep.subr.mxu0 0.0
    %3987 = vmatpush1.msra.mxu0 0.0
    %3988 = vmatprep.subr.mxu0 0.0
    %3989 = vmatpush1.msra.mxu0 0.0
    %3990 = vmatprep.subr.mxu0 0.0
    %3991 = vmatpush1.msra.mxu0 0.0
    %3992 = vmatprep.subr.mxu0 0.0
    %3993 = vmatpush1.msra.mxu0 0.0
    %3994 = vmatprep.subr.mxu0 0.0
    %3995 = vmatpush1.msra.mxu0 0.0
    %3996 = vmatprep.subr.mxu0 0.0
    %3997 = vmatpush1.msra.mxu0 0.0
    %3998 = vmatprep.subr.mxu0 0.0
    %3999 = vmatpush1.msra.mxu0 0.0
    %4000 = vmatprep.subr.mxu0 0.0
    %4001 = vmatpush1.msra.mxu0 0.0
    %4002 = vmatprep.subr.mxu0 0.0
    %4003 = vmatpush1.msra.mxu0 0.0
    %4004 = vmatprep.subr.mxu0 0.0
    %4005 = vmatpush1.msra.mxu0 0.0
    %4006 = vmatprep.subr.mxu0 0.0
    %4007 = vmatpush1.msra.mxu0 0.0
    %4008 = vmatprep.subr.mxu0 0.0
    %4009 = vmatpush1.msra.mxu0 0.0
    %4010 = vmatprep.subr.mxu0 0.0
    %4011 = vmatpush1.msra.mxu0 0.0
    %4012 = vmatprep.subr.mxu0 0.0
    %4013 = vmatpush1.msra.mxu0 0.0
    %4014 = vmatprep.subr.mxu0 0.0
    %4015 = vmatpush1.msra.mxu0 0.0
    %4016 = vmatprep.subr.mxu0 0.0
    %4017 = vmatpush1.msra.mxu0 0.0
    %4018 = vmatprep.subr.mxu0 0.0
    %4019 = vmatpush1.msra.mxu0 0.0
    %4020 = vmatprep.subr.mxu0 0.0
    %4021 = vmatpush1.msra.mxu0 0.0
    %4022 = vmatprep.subr.mxu0 0.0
    %4023 = vmatpush1.msra.mxu0 0.0
    %4024 = vmatprep.subr.mxu0 0.0
    %4025 = vmatpush1.msra.mxu0 0.0
    %4026 = vmatprep.subr.mxu0 0.0
    %4027 = vmatpush1.msra.mxu0 0.0
    %4028 = vmatprep.subr.mxu0 0.0
    %4029 = vmatpush1.msra.mxu0 0.0
    %4030 = vmatprep.subr.mxu0 0.0
    %4031 = vmatpush1.msra.mxu0 0.0
    %4032 = vmatprep.subr.mxu0 0.0
    %4033 = vmatpush1.msra.mxu0 0.0
    %4034 = vmatprep.subr.mxu0 0.0
    %4035 = vmatpush1.msra.mxu0 0.0
    %4036 = vmatprep.subr.mxu0 0.0
    %4037 = vmatpush1.msra.mxu0 0.0
    %4038 = vmatprep.subr.mxu0 0.0
    %4039 = vmatpush1.msra.mxu0 0.0
    %4040 = vmatprep.mubr.f32.mxu0 0.0
    %4041 = vmatmul.mubr.f32.gmra.mrb[0].mxu0 %v3974
    %v4042 = vpop.f32.mrb[0].mxu0
    %v4043 = vadd.f32 %v80, %v4042
    %v4044 = vpop.f32.mrb[0].mxu0
    %4045 = vdwg.mxu0
    %4046 = vmatprep.subr.mxu0 0.0
    %4047 = vmatpush1.msra.mxu0 %v43
    %4048 = vmatprep.subr.mxu0 0.0
    %4049 = vmatpush1.msra.mxu0 %v44
    %4050 = vmatprep.subr.mxu0 0.0
    %4051 = vmatpush1.msra.mxu0 %v45
    %4052 = vmatprep.subr.mxu0 0.0
    %4053 = vmatpush1.msra.mxu0 %v46
    %4054 = vmatprep.subr.mxu0 0.0
    %4055 = vmatpush1.msra.mxu0 0.0
    %4056 = vmatprep.subr.mxu0 0.0
    %4057 = vmatpush1.msra.mxu0 0.0
    %4058 = vmatprep.subr.mxu0 0.0
    %4059 = vmatpush1.msra.mxu0 0.0
    %4060 = vmatprep.subr.mxu0 0.0
    %4061 = vmatpush1.msra.mxu0 0.0
    %4062 = vmatprep.subr.mxu0 0.0
    %4063 = vmatpush1.msra.mxu0 0.0
    %4064 = vmatprep.subr.mxu0 0.0
    %4065 = vmatpush1.msra.mxu0 0.0
    %4066 = vmatprep.subr.mxu0 0.0
    %4067 = vmatpush1.msra.mxu0 0.0
    %4068 = vmatprep.subr.mxu0 0.0
    %4069 = vmatpush1.msra.mxu0 0.0
    %4070 = vmatprep.subr.mxu0 0.0
    %4071 = vmatpush1.msra.mxu0 0.0
    %4072 = vmatprep.subr.mxu0 0.0
    %4073 = vmatpush1.msra.mxu0 0.0
    %4074 = vmatprep.subr.mxu0 0.0
    %4075 = vmatpush1.msra.mxu0 0.0
    %4076 = vmatprep.subr.mxu0 0.0
    %4077 = vmatpush1.msra.mxu0 0.0
    %4078 = vmatprep.subr.mxu0 0.0
    %4079 = vmatpush1.msra.mxu0 0.0
    %4080 = vmatprep.subr.mxu0 0.0
    %4081 = vmatpush1.msra.mxu0 0.0
    %4082 = vmatprep.subr.mxu0 0.0
    %4083 = vmatpush1.msra.mxu0 0.0
    %4084 = vmatprep.subr.mxu0 0.0
    %4085 = vmatpush1.msra.mxu0 0.0
    %4086 = vmatprep.subr.mxu0 0.0
    %4087 = vmatpush1.msra.mxu0 0.0
    %4088 = vmatprep.subr.mxu0 0.0
    %4089 = vmatpush1.msra.mxu0 0.0
    %4090 = vmatprep.subr.mxu0 0.0
    %4091 = vmatpush1.msra.mxu0 0.0
    %4092 = vmatprep.subr.mxu0 0.0
    %4093 = vmatpush1.msra.mxu0 0.0
    %4094 = vmatprep.subr.mxu0 0.0
    %4095 = vmatpush1.msra.mxu0 0.0
    %4096 = vmatprep.subr.mxu0 0.0
    %4097 = vmatpush1.msra.mxu0 0.0
    %4098 = vmatprep.subr.mxu0 0.0
    %4099 = vmatpush1.msra.mxu0 0.0
    %4100 = vmatprep.subr.mxu0 0.0
    %4101 = vmatpush1.msra.mxu0 0.0
    %4102 = vmatprep.subr.mxu0 0.0
    %4103 = vmatpush1.msra.mxu0 0.0
    %4104 = vmatprep.subr.mxu0 0.0
    %4105 = vmatpush1.msra.mxu0 0.0
    %4106 = vmatprep.subr.mxu0 0.0
    %4107 = vmatpush1.msra.mxu0 0.0
    %4108 = vmatprep.subr.mxu0 0.0
    %4109 = vmatpush1.msra.mxu0 0.0
    %4110 = vmatprep.mubr.f32.mxu0 0.0
    %4111 = vmatmul.mubr.f32.gmra.mrb[0].mxu0 %v3873
    %v4112 = vpop.f32.mrb[0].mxu0
    %v4113 = vadd.f32 0.0, %v4112
    %v4114 = vpop.f32.mrb[0].mxu0
    %4115 = vdwg.mxu0
    %v4117 = vsel %vm145, %v4043, 0
    %4119 = vmatprep.subr.mxu0 0.0
    %4120 = vmatpush1.msra.mxu0 %v41
    %4121 = vmatprep.subr.mxu0 0.0
    %4122 = vmatpush1.msra.mxu0 %v42
    %4123 = vmatprep.subr.mxu0 0.0
    %4124 = vmatpush1.msra.mxu0 0.0
    %4125 = vmatprep.subr.mxu0 0.0
    %4126 = vmatpush1.msra.mxu0 0.0
    %4127 = vmatprep.subr.mxu0 0.0
    %4128 = vmatpush1.msra.mxu0 0.0
    %4129 = vmatprep.subr.mxu0 0.0
    %4130 = vmatpush1.msra.mxu0 0.0
    %4131 = vmatprep.subr.mxu0 0.0
    %4132 = vmatpush1.msra.mxu0 0.0
    %4133 = vmatprep.subr.mxu0 0.0
    %4134 = vmatpush1.msra.mxu0 0.0
    %4135 = vmatprep.subr.mxu0 0.0
    %4136 = vmatpush1.msra.mxu0 0.0
    %4137 = vmatprep.subr.mxu0 0.0
    %4138 = vmatpush1.msra.mxu0 0.0
    %4139 = vmatprep.subr.mxu0 0.0
    %4140 = vmatpush1.msra.mxu0 0.0
    %4141 = vmatprep.subr.mxu0 0.0
    %4142 = vmatpush1.msra.mxu0 0.0
    %4143 = vmatprep.subr.mxu0 0.0
    %4144 = vmatpush1.msra.mxu0 0.0
    %4145 = vmatprep.subr.mxu0 0.0
    %4146 = vmatpush1.msra.mxu0 0.0
    %4147 = vmatprep.subr.mxu0 0.0
    %4148 = vmatpush1.msra.mxu0 0.0
    %4149 = vmatprep.subr.mxu0 0.0
    %4150 = vmatpush1.msra.mxu0 0.0
    %4151 = vmatprep.subr.mxu0 0.0
    %4152 = vmatpush1.msra.mxu0 0.0
    %4153 = vmatprep.subr.mxu0 0.0
    %4154 = vmatpush1.msra.mxu0 0.0
    %4155 = vmatprep.subr.mxu0 0.0
    %4156 = vmatpush1.msra.mxu0 0.0
    %4157 = vmatprep.subr.mxu0 0.0
    %4158 = vmatpush1.msra.mxu0 0.0
    %4159 = vmatprep.subr.mxu0 0.0
    %4160 = vmatpush1.msra.mxu0 0.0
    %4161 = vmatprep.subr.mxu0 0.0
    %4162 = vmatpush1.msra.mxu0 0.0
    %4163 = vmatprep.subr.mxu0 0.0
    %4164 = vmatpush1.msra.mxu0 0.0
    %4165 = vmatprep.subr.mxu0 0.0
    %4166 = vmatpush1.msra.mxu0 0.0
    %4167 = vmatprep.subr.mxu0 0.0
    %4168 = vmatpush1.msra.mxu0 0.0
    %4169 = vmatprep.subr.mxu0 0.0
    %4170 = vmatpush1.msra.mxu0 0.0
    %4171 = vmatprep.subr.mxu0 0.0
    %4172 = vmatpush1.msra.mxu0 0.0
    %4173 = vmatprep.subr.mxu0 0.0
    %4174 = vmatpush1.msra.mxu0 0.0
    %4175 = vmatprep.subr.mxu0 0.0
    %4176 = vmatpush1.msra.mxu0 0.0
    %4177 = vmatprep.subr.mxu0 0.0
    %4178 = vmatpush1.msra.mxu0 0.0
    %4179 = vmatprep.subr.mxu0 0.0
    %4180 = vmatpush1.msra.mxu0 0.0
    %4181 = vmatprep.subr.mxu0 0.0
    %4182 = vmatpush1.msra.mxu0 0.0
    %4183 = vmatprep.mubr.f32.mxu0 0.0
    %4184 = vmatmul.mubr.f32.gmra.mrb[0].mxu0 %v4117
    %v4185 = vpop.f32.mrb[0].mxu0
    %v4186 = vadd.f32 %v4113, %v4185
    %v4187 = vpop.f32.mrb[0].mxu0
    %4188 = vdwg.mxu0
    %v4189 = vadd.f32 %v4186, %v61
    %v4190 = vmul.f32 %v4189, %v87
    %v4191 = vtanh.pop %v4190
    %v4192 = vmul.f32 %v4191, %v87
    %v4193 = vadd.f32 %v4192, %v88
    %v4194 = vmul.f32 %v4193, %v3788
    %4196 = vrot.lane.b32.xlu0 %v4193, 64
    %v4197 = vpop.permute.xlu0 %4196
    %v4199 = vmul.f32 %v4193, %v4197
    %4201 = vrot.lane.b32.xlu0 %v4199, 32
    %v4202 = vpop.permute.xlu0 %4201
    %v4204 = vadd.f32 %v4194, %v4202
    %v4205 = vtanh.pop %v4204
    %4207 = vrot.lane.b32.xlu0 %v4205, 64
    %v4208 = vpop.permute.xlu0 %4207
    %v4210 = vmul.f32 %v4193, %v4208
    %4211 = vrot.lane.b32.xlu0 %v3966, 32
    %v4212 = vpop.permute.xlu0 %4211
    %v4213 = vsel %vm269, %v4212, 0
    %4215 = vmatprep.subr.mxu0 0.0
    %4216 = vmatpush1.msra.mxu0 %v52
    %4217 = vmatprep.subr.mxu0 0.0
    %4218 = vmatpush1.msra.mxu0 %v53
    %4219 = vmatprep.subr.mxu0 0.0
    %4220 = vmatpush1.msra.mxu0 %v54
    %4221 = vmatprep.subr.mxu0 0.0
    %4222 = vmatpush1.msra.mxu0 %v55
    %4223 = vmatprep.subr.mxu0 0.0
    %4224 = vmatpush1.msra.mxu0 0.0
    %4225 = vmatprep.subr.mxu0 0.0
    %4226 = vmatpush1.msra.mxu0 0.0
    %4227 = vmatprep.subr.mxu0 0.0
    %4228 = vmatpush1.msra.mxu0 0.0
    %4229 = vmatprep.subr.mxu0 0.0
    %4230 = vmatpush1.msra.mxu0 0.0
    %4231 = vmatprep.subr.mxu0 0.0
    %4232 = vmatpush1.msra.mxu0 0.0
    %4233 = vmatprep.subr.mxu0 0.0
    %4234 = vmatpush1.msra.mxu0 0.0
    %4235 = vmatprep.subr.mxu0 0.0
    %4236 = vmatpush1.msra.mxu0 0.0
    %4237 = vmatprep.subr.mxu0 0.0
    %4238 = vmatpush1.msra.mxu0 0.0
    %4239 = vmatprep.subr.mxu0 0.0
    %4240 = vmatpush1.msra.mxu0 0.0
    %4241 = vmatprep.subr.mxu0 0.0
    %4242 = vmatpush1.msra.mxu0 0.0
    %4243 = vmatprep.subr.mxu0 0.0
    %4244 = vmatpush1.msra.mxu0 0.0
    %4245 = vmatprep.subr.mxu0 0.0
    %4246 = vmatpush1.msra.mxu0 0.0
    %4247 = vmatprep.subr.mxu0 0.0
    %4248 = vmatpush1.msra.mxu0 0.0
    %4249 = vmatprep.subr.mxu0 0.0
    %4250 = vmatpush1.msra.mxu0 0.0
    %4251 = vmatprep.subr.mxu0 0.0
    %4252 = vmatpush1.msra.mxu0 0.0
    %4253 = vmatprep.subr.mxu0 0.0
    %4254 = vmatpush1.msra.mxu0 0.0
    %4255 = vmatprep.subr.mxu0 0.0
    %4256 = vmatpush1.msra.mxu0 0.0
    %4257 = vmatprep.subr.mxu0 0.0
    %4258 = vmatpush1.msra.mxu0 0.0
    %4259 = vmatprep.subr.mxu0 0.0
    %4260 = vmatpush1.msra.mxu0 0.0
    %4261 = vmatprep.subr.mxu0 0.0
    %4262 = vmatpush1.msra.mxu0 0.0
    %4263 = vmatprep.subr.mxu0 0.0
    %4264 = vmatpush1.msra.mxu0 0.0
    %4265 = vmatprep.subr.mxu0 0.0
    %4266 = vmatpush1.msra.mxu0 0.0
    %4267 = vmatprep.subr.mxu0 0.0
    %4268 = vmatpush1.msra.mxu0 0.0
    %4269 = vmatprep.subr.mxu0 0.0
    %4270 = vmatpush1.msra.mxu0 0.0
    %4271 = vmatprep.subr.mxu0 0.0
    %4272 = vmatpush1.msra.mxu0 0.0
    %4273 = vmatprep.subr.mxu0 0.0
    %4274 = vmatpush1.msra.mxu0 0.0
    %4275 = vmatprep.subr.mxu0 0.0
    %4276 = vmatpush1.msra.mxu0 0.0
    %4277 = vmatprep.subr.mxu0 0.0
    %4278 = vmatpush1.msra.mxu0 0.0
    %4279 = vmatprep.mubr.f32.mxu0 0.0
    %4280 = vmatmul.mubr.f32.gmra.mrb[0].mxu0 %v4213
    %v4281 = vpop.f32.mrb[0].mxu0
    %v4282 = vadd.f32 0.0, %v4281
    %v4283 = vpop.f32.mrb[0].mxu0
    %4284 = vdwg.mxu0
    %4286 = vrot.lane.b32.xlu0 %v4210, 32
    %v4287 = vpop.permute.xlu0 %4286
    %v4288 = vsel %vm269, %v4287, 0
    %4290 = vmatprep.subr.mxu0 0.0
    %4291 = vmatpush1.msra.mxu0 %v48
    %4292 = vmatprep.subr.mxu0 0.0
    %4293 = vmatpush1.msra.mxu0 %v49
    %4294 = vmatprep.subr.mxu0 0.0
    %4295 = vmatpush1.msra.mxu0 %v50
    %4296 = vmatprep.subr.mxu0 0.0
    %4297 = vmatpush1.msra.mxu0 %v51
    %4298 = vmatprep.subr.mxu0 0.0
    %4299 = vmatpush1.msra.mxu0 0.0
    %4300 = vmatprep.subr.mxu0 0.0
    %4301 = vmatpush1.msra.mxu0 0.0
    %4302 = vmatprep.subr.mxu0 0.0
    %4303 = vmatpush1.msra.mxu0 0.0
    %4304 = vmatprep.subr.mxu0 0.0
    %4305 = vmatpush1.msra.mxu0 0.0
    %4306 = vmatprep.subr.mxu0 0.0
    %4307 = vmatpush1.msra.mxu0 0.0
    %4308 = vmatprep.subr.mxu0 0.0
    %4309 = vmatpush1.msra.mxu0 0.0
    %4310 = vmatprep.subr.mxu0 0.0
    %4311 = vmatpush1.msra.mxu0 0.0
    %4312 = vmatprep.subr.mxu0 0.0
    %4313 = vmatpush1.msra.mxu0 0.0
    %4314 = vmatprep.subr.mxu0 0.0
    %4315 = vmatpush1.msra.mxu0 0.0
    %4316 = vmatprep.subr.mxu0 0.0
    %4317 = vmatpush1.msra.mxu0 0.0
    %4318 = vmatprep.subr.mxu0 0.0
    %4319 = vmatpush1.msra.mxu0 0.0
    %4320 = vmatprep.subr.mxu0 0.0
    %4321 = vmatpush1.msra.mxu0 0.0
    %4322 = vmatprep.subr.mxu0 0.0
    %4323 = vmatpush1.msra.mxu0 0.0
    %4324 = vmatprep.subr.mxu0 0.0
    %4325 = vmatpush1.msra.mxu0 0.0
    %4326 = vmatprep.subr.mxu0 0.0
    %4327 = vmatpush1.msra.mxu0 0.0
    %4328 = vmatprep.subr.mxu0 0.0
    %4329 = vmatpush1.msra.mxu0 0.0
    %4330 = vmatprep.subr.mxu0 0.0
    %4331 = vmatpush1.msra.mxu0 0.0
    %4332 = vmatprep.subr.mxu0 0.0
    %4333 = vmatpush1.msra.mxu0 0.0
    %4334 = vmatprep.subr.mxu0 0.0
    %4335 = vmatpush1.msra.mxu0 0.0
    %4336 = vmatprep.subr.mxu0 0.0
    %4337 = vmatpush1.msra.mxu0 0.0
    %4338 = vmatprep.subr.mxu0 0.0
    %4339 = vmatpush1.msra.mxu0 0.0
    %4340 = vmatprep.subr.mxu0 0.0
    %4341 = vmatpush1.msra.mxu0 0.0
    %4342 = vmatprep.subr.mxu0 0.0
    %4343 = vmatpush1.msra.mxu0 0.0
    %4344 = vmatprep.subr.mxu0 0.0
    %4345 = vmatpush1.msra.mxu0 0.0
    %4346 = vmatprep.subr.mxu0 0.0
    %4347 = vmatpush1.msra.mxu0 0.0
    %4348 = vmatprep.subr.mxu0 0.0
    %4349 = vmatpush1.msra.mxu0 0.0
    %4350 = vmatprep.subr.mxu0 0.0
    %4351 = vmatpush1.msra.mxu0 0.0
    %4352 = vmatprep.subr.mxu0 0.0
    %4353 = vmatpush1.msra.mxu0 0.0
    %4354 = vmatprep.mubr.f32.mxu0 0.0
    %4355 = vmatmul.mubr.f32.gmra.mrb[0].mxu0 %v4288
    %v4356 = vpop.f32.mrb[0].mxu0
    %v4357 = vadd.f32 %v4282, %v4356
    %v4358 = vpop.f32.mrb[0].mxu0
    %4359 = vdwg.mxu0
    %v4360 = vadd.f32 %v4357, %v69
    %v4361 = vmul.f32 %v4360, %v87
    %v4362 = vtanh.pop %v4361
    %v4363 = vmul.f32 %v4362, %v87
    %v4364 = vadd.f32 %v4363, %v88
    %v4365 = vmul.f32 %v4364, %v3960
    %4367 = vrot.lane.b32.xlu0 %v4364, 64
    %v4368 = vpop.permute.xlu0 %4367
    %v4370 = vmul.f32 %v4364, %v4368
    %4372 = vrot.lane.b32.xlu0 %v4370, 32
    %v4373 = vpop.permute.xlu0 %4372
    %v4375 = vadd.f32 %v4365, %v4373
    %v4376 = vtanh.pop %v4375
    %4378 = vrot.lane.b32.xlu0 %v4376, 64
    %v4379 = vpop.permute.xlu0 %4378
    %v4381 = vmul.f32 %v4364, %v4379
    %4382 = vmatprep.subr.mxu0 0.0
    %4383 = vmatpush1.msra.mxu0 %v43
    %4384 = vmatprep.subr.mxu0 0.0
    %4385 = vmatpush1.msra.mxu0 %v44
    %4386 = vmatprep.subr.mxu0 0.0
    %4387 = vmatpush1.msra.mxu0 %v45
    %4388 = vmatprep.subr.mxu0 0.0
    %4389 = vmatpush1.msra.mxu0 %v46
    %4390 = vmatprep.subr.mxu0 0.0
    %4391 = vmatpush1.msra.mxu0 0.0
    %4392 = vmatprep.subr.mxu0 0.0
    %4393 = vmatpush1.msra.mxu0 0.0
    %4394 = vmatprep.subr.mxu0 0.0
    %4395 = vmatpush1.msra.mxu0 0.0
    %4396 = vmatprep.subr.mxu0 0.0
    %4397 = vmatpush1.msra.mxu0 0.0
    %4398 = vmatprep.subr.mxu0 0.0
    %4399 = vmatpush1.msra.mxu0 0.0
    %4400 = vmatprep.subr.mxu0 0.0
    %4401 = vmatpush1.msra.mxu0 0.0
    %4402 = vmatprep.subr.mxu0 0.0
    %4403 = vmatpush1.msra.mxu0 0.0
    %4404 = vmatprep.subr.mxu0 0.0
    %4405 = vmatpush1.msra.mxu0 0.0
    %4406 = vmatprep.subr.mxu0 0.0
    %4407 = vmatpush1.msra.mxu0 0.0
    %4408 = vmatprep.subr.mxu0 0.0
    %4409 = vmatpush1.msra.mxu0 0.0
    %4410 = vmatprep.subr.mxu0 0.0
    %4411 = vmatpush1.msra.mxu0 0.0
    %4412 = vmatprep.subr.mxu0 0.0
    %4413 = vmatpush1.msra.mxu0 0.0
    %4414 = vmatprep.subr.mxu0 0.0
    %4415 = vmatpush1.msra.mxu0 0.0
    %4416 = vmatprep.subr.mxu0 0.0
    %4417 = vmatpush1.msra.mxu0 0.0
    %4418 = vmatprep.subr.mxu0 0.0
    %4419 = vmatpush1.msra.mxu0 0.0
    %4420 = vmatprep.subr.mxu0 0.0
    %4421 = vmatpush1.msra.mxu0 0.0
    %4422 = vmatprep.subr.mxu0 0.0
    %4423 = vmatpush1.msra.mxu0 0.0
    %4424 = vmatprep.subr.mxu0 0.0
    %4425 = vmatpush1.msra.mxu0 0.0
    %4426 = vmatprep.subr.mxu0 0.0
    %4427 = vmatpush1.msra.mxu0 0.0
    %4428 = vmatprep.subr.mxu0 0.0
    %4429 = vmatpush1.msra.mxu0 0.0
    %4430 = vmatprep.subr.mxu0 0.0
    %4431 = vmatpush1.msra.mxu0 0.0
    %4432 = vmatprep.subr.mxu0 0.0
    %4433 = vmatpush1.msra.mxu0 0.0
    %4434 = vmatprep.subr.mxu0 0.0
    %4435 = vmatpush1.msra.mxu0 0.0
    %4436 = vmatprep.subr.mxu0 0.0
    %4437 = vmatpush1.msra.mxu0 0.0
    %4438 = vmatprep.subr.mxu0 0.0
    %4439 = vmatpush1.msra.mxu0 0.0
    %4440 = vmatprep.subr.mxu0 0.0
    %4441 = vmatpush1.msra.mxu0 0.0
    %4442 = vmatprep.subr.mxu0 0.0
    %4443 = vmatpush1.msra.mxu0 0.0
    %4444 = vmatprep.subr.mxu0 0.0
    %4445 = vmatpush1.msra.mxu0 0.0
    %4446 = vmatprep.mubr.f32.mxu0 0.0
    %4447 = vmatmul.mubr.f32.gmra.mrb[0].mxu0 %v4288
    %v4448 = vpop.f32.mrb[0].mxu0
    %v4449 = vadd.f32 0.0, %v4448
    %v4450 = vpop.f32.mrb[0].mxu0
    %4451 = vdwg.mxu0
    %v4452 = vrot.slane %v4043, 2
    %v4453 = vsel %vm145, %v4452, 0
    %4455 = vmatprep.subr.mxu0 0.0
    %4456 = vmatpush1.msra.mxu0 %v41
    %4457 = vmatprep.subr.mxu0 0.0
    %4458 = vmatpush1.msra.mxu0 %v42
    %4459 = vmatprep.subr.mxu0 0.0
    %4460 = vmatpush1.msra.mxu0 0.0
    %4461 = vmatprep.subr.mxu0 0.0
    %4462 = vmatpush1.msra.mxu0 0.0
    %4463 = vmatprep.subr.mxu0 0.0
    %4464 = vmatpush1.msra.mxu0 0.0
    %4465 = vmatprep.subr.mxu0 0.0
    %4466 = vmatpush1.msra.mxu0 0.0
    %4467 = vmatprep.subr.mxu0 0.0
    %4468 = vmatpush1.msra.mxu0 0.0
    %4469 = vmatprep.subr.mxu0 0.0
    %4470 = vmatpush1.msra.mxu0 0.0
    %4471 = vmatprep.subr.mxu0 0.0
    %4472 = vmatpush1.msra.mxu0 0.0
    %4473 = vmatprep.subr.mxu0 0.0
    %4474 = vmatpush1.msra.mxu0 0.0
    %4475 = vmatprep.subr.mxu0 0.0
    %4476 = vmatpush1.msra.mxu0 0.0
    %4477 = vmatprep.subr.mxu0 0.0
    %4478 = vmatpush1.msra.mxu0 0.0
    %4479 = vmatprep.subr.mxu0 0.0
    %4480 = vmatpush1.msra.mxu0 0.0
    %4481 = vmatprep.subr.mxu0 0.0
    %4482 = vmatpush1.msra.mxu0 0.0
    %4483 = vmatprep.subr.mxu0 0.0
    %4484 = vmatpush1.msra.mxu0 0.0
    %4485 = vmatprep.subr.mxu0 0.0
    %4486 = vmatpush1.msra.mxu0 0.0
    %4487 = vmatprep.subr.mxu0 0.0
    %4488 = vmatpush1.msra.mxu0 0.0
    %4489 = vmatprep.subr.mxu0 0.0
    %4490 = vmatpush1.msra.mxu0 0.0
    %4491 = vmatprep.subr.mxu0 0.0
    %4492 = vmatpush1.msra.mxu0 0.0
    %4493 = vmatprep.subr.mxu0 0.0
    %4494 = vmatpush1.msra.mxu0 0.0
    %4495 = vmatprep.subr.mxu0 0.0
    %4496 = vmatpush1.msra.mxu0 0.0
    %4497 = vmatprep.subr.mxu0 0.0
    %4498 = vmatpush1.msra.mxu0 0.0
    %4499 = vmatprep.subr.mxu0 0.0
    %4500 = vmatpush1.msra.mxu0 0.0
    %4501 = vmatprep.subr.mxu0 0.0
    %4502 = vmatpush1.msra.mxu0 0.0
    %4503 = vmatprep.subr.mxu0 0.0
    %4504 = vmatpush1.msra.mxu0 0.0
    %4505 = vmatprep.subr.mxu0 0.0
    %4506 = vmatpush1.msra.mxu0 0.0
    %4507 = vmatprep.subr.mxu0 0.0
    %4508 = vmatpush1.msra.mxu0 0.0
    %4509 = vmatprep.subr.mxu0 0.0
    %4510 = vmatpush1.msra.mxu0 0.0
    %4511 = vmatprep.subr.mxu0 0.0
    %4512 = vmatpush1.msra.mxu0 0.0
    %4513 = vmatprep.subr.mxu0 0.0
    %4514 = vmatpush1.msra.mxu0 0.0
    %4515 = vmatprep.subr.mxu0 0.0
    %4516 = vmatpush1.msra.mxu0 0.0
    %4517 = vmatprep.subr.mxu0 0.0
    %4518 = vmatpush1.msra.mxu0 0.0
    %4519 = vmatprep.mubr.f32.mxu0 0.0
    %4520 = vmatmul.mubr.f32.gmra.mrb[0].mxu0 %v4453
    %v4521 = vpop.f32.mrb[0].mxu0
    %v4522 = vadd.f32 %v4449, %v4521
    %v4523 = vpop.f32.mrb[0].mxu0
    %4524 = vdwg.mxu0
    %v4525 = vadd.f32 %v4522, %v61
    %v4526 = vmul.f32 %v4525, %v87
    %v4527 = vtanh.pop %v4526
    %v4528 = vmul.f32 %v4527, %v87
    %v4529 = vadd.f32 %v4528, %v88
    %v4530 = vmul.f32 %v4529, %v4204
    %4532 = vrot.lane.b32.xlu0 %v4529, 64
    %v4533 = vpop.permute.xlu0 %4532
    %v4535 = vmul.f32 %v4529, %v4533
    %4537 = vrot.lane.b32.xlu0 %v4535, 32
    %v4538 = vpop.permute.xlu0 %4537
    %v4540 = vadd.f32 %v4530, %v4538
    %v4541 = vtanh.pop %v4540
    %4543 = vrot.lane.b32.xlu0 %v4541, 64
    %v4544 = vpop.permute.xlu0 %4543
    %v4546 = vmul.f32 %v4529, %v4544
    %4548 = vrot.lane.b32.xlu0 %v4381, 32
    %v4549 = vpop.permute.xlu0 %4548
    %v4550 = vsel %vm269, %v4549, 0
    %4552 = vmatprep.subr.mxu0 0.0
    %4553 = vmatpush1.msra.mxu0 %v52
    %4554 = vmatprep.subr.mxu0 0.0
    %4555 = vmatpush1.msra.mxu0 %v53
    %4556 = vmatprep.subr.mxu0 0.0
    %4557 = vmatpush1.msra.mxu0 %v54
    %4558 = vmatprep.subr.mxu0 0.0
    %4559 = vmatpush1.msra.mxu0 %v55
    %4560 = vmatprep.subr.mxu0 0.0
    %4561 = vmatpush1.msra.mxu0 0.0
    %4562 = vmatprep.subr.mxu0 0.0
    %4563 = vmatpush1.msra.mxu0 0.0
    %4564 = vmatprep.subr.mxu0 0.0
    %4565 = vmatpush1.msra.mxu0 0.0
    %4566 = vmatprep.subr.mxu0 0.0
    %4567 = vmatpush1.msra.mxu0 0.0
    %4568 = vmatprep.subr.mxu0 0.0
    %4569 = vmatpush1.msra.mxu0 0.0
    %4570 = vmatprep.subr.mxu0 0.0
    %4571 = vmatpush1.msra.mxu0 0.0
    %4572 = vmatprep.subr.mxu0 0.0
    %4573 = vmatpush1.msra.mxu0 0.0
    %4574 = vmatprep.subr.mxu0 0.0
    %4575 = vmatpush1.msra.mxu0 0.0
    %4576 = vmatprep.subr.mxu0 0.0
    %4577 = vmatpush1.msra.mxu0 0.0
    %4578 = vmatprep.subr.mxu0 0.0
    %4579 = vmatpush1.msra.mxu0 0.0
    %4580 = vmatprep.subr.mxu0 0.0
    %4581 = vmatpush1.msra.mxu0 0.0
    %4582 = vmatprep.subr.mxu0 0.0
    %4583 = vmatpush1.msra.mxu0 0.0
    %4584 = vmatprep.subr.mxu0 0.0
    %4585 = vmatpush1.msra.mxu0 0.0
    %4586 = vmatprep.subr.mxu0 0.0
    %4587 = vmatpush1.msra.mxu0 0.0
    %4588 = vmatprep.subr.mxu0 0.0
    %4589 = vmatpush1.msra.mxu0 0.0
    %4590 = vmatprep.subr.mxu0 0.0
    %4591 = vmatpush1.msra.mxu0 0.0
    %4592 = vmatprep.subr.mxu0 0.0
    %4593 = vmatpush1.msra.mxu0 0.0
    %4594 = vmatprep.subr.mxu0 0.0
    %4595 = vmatpush1.msra.mxu0 0.0
    %4596 = vmatprep.subr.mxu0 0.0
    %4597 = vmatpush1.msra.mxu0 0.0
    %4598 = vmatprep.subr.mxu0 0.0
    %4599 = vmatpush1.msra.mxu0 0.0
    %4600 = vmatprep.subr.mxu0 0.0
    %4601 = vmatpush1.msra.mxu0 0.0
    %4602 = vmatprep.subr.mxu0 0.0
    %4603 = vmatpush1.msra.mxu0 0.0
    %4604 = vmatprep.subr.mxu0 0.0
    %4605 = vmatpush1.msra.mxu0 0.0
    %4606 = vmatprep.subr.mxu0 0.0
    %4607 = vmatpush1.msra.mxu0 0.0
    %4608 = vmatprep.subr.mxu0 0.0
    %4609 = vmatpush1.msra.mxu0 0.0
    %4610 = vmatprep.subr.mxu0 0.0
    %4611 = vmatpush1.msra.mxu0 0.0
    %4612 = vmatprep.subr.mxu0 0.0
    %4613 = vmatpush1.msra.mxu0 0.0
    %4614 = vmatprep.subr.mxu0 0.0
    %4615 = vmatpush1.msra.mxu0 0.0
    %4616 = vmatprep.mubr.f32.mxu0 0.0
    %4617 = vmatmul.mubr.f32.gmra.mrb[0].mxu0 %v4550
    %v4618 = vpop.f32.mrb[0].mxu0
    %v4619 = vadd.f32 0.0, %v4618
    %v4620 = vpop.f32.mrb[0].mxu0
    %4621 = vdwg.mxu0
    %4623 = vrot.lane.b32.xlu0 %v4546, 32
    %v4624 = vpop.permute.xlu0 %4623
    %v4625 = vsel %vm269, %v4624, 0
    %4627 = vmatprep.subr.mxu0 0.0
    %4628 = vmatpush1.msra.mxu0 %v48
    %4629 = vmatprep.subr.mxu0 0.0
    %4630 = vmatpush1.msra.mxu0 %v49
    %4631 = vmatprep.subr.mxu0 0.0
    %4632 = vmatpush1.msra.mxu0 %v50
    %4633 = vmatprep.subr.mxu0 0.0
    %4634 = vmatpush1.msra.mxu0 %v51
    %4635 = vmatprep.subr.mxu0 0.0
    %4636 = vmatpush1.msra.mxu0 0.0
    %4637 = vmatprep.subr.mxu0 0.0
    %4638 = vmatpush1.msra.mxu0 0.0
    %4639 = vmatprep.subr.mxu0 0.0
    %4640 = vmatpush1.msra.mxu0 0.0
    %4641 = vmatprep.subr.mxu0 0.0
    %4642 = vmatpush1.msra.mxu0 0.0
    %4643 = vmatprep.subr.mxu0 0.0
    %4644 = vmatpush1.msra.mxu0 0.0
    %4645 = vmatprep.subr.mxu0 0.0
    %4646 = vmatpush1.msra.mxu0 0.0
    %4647 = vmatprep.subr.mxu0 0.0
    %4648 = vmatpush1.msra.mxu0 0.0
    %4649 = vmatprep.subr.mxu0 0.0
    %4650 = vmatpush1.msra.mxu0 0.0
    %4651 = vmatprep.subr.mxu0 0.0
    %4652 = vmatpush1.msra.mxu0 0.0
    %4653 = vmatprep.subr.mxu0 0.0
    %4654 = vmatpush1.msra.mxu0 0.0
    %4655 = vmatprep.subr.mxu0 0.0
    %4656 = vmatpush1.msra.mxu0 0.0
    %4657 = vmatprep.subr.mxu0 0.0
    %4658 = vmatpush1.msra.mxu0 0.0
    %4659 = vmatprep.subr.mxu0 0.0
    %4660 = vmatpush1.msra.mxu0 0.0
    %4661 = vmatprep.subr.mxu0 0.0
    %4662 = vmatpush1.msra.mxu0 0.0
    %4663 = vmatprep.subr.mxu0 0.0
    %4664 = vmatpush1.msra.mxu0 0.0
    %4665 = vmatprep.subr.mxu0 0.0
    %4666 = vmatpush1.msra.mxu0 0.0
    %4667 = vmatprep.subr.mxu0 0.0
    %4668 = vmatpush1.msra.mxu0 0.0
    %4669 = vmatprep.subr.mxu0 0.0
    %4670 = vmatpush1.msra.mxu0 0.0
    %4671 = vmatprep.subr.mxu0 0.0
    %4672 = vmatpush1.msra.mxu0 0.0
    %4673 = vmatprep.subr.mxu0 0.0
    %4674 = vmatpush1.msra.mxu0 0.0
    %4675 = vmatprep.subr.mxu0 0.0
    %4676 = vmatpush1.msra.mxu0 0.0
    %4677 = vmatprep.subr.mxu0 0.0
    %4678 = vmatpush1.msra.mxu0 0.0
    %4679 = vmatprep.subr.mxu0 0.0
    %4680 = vmatpush1.msra.mxu0 0.0
    %4681 = vmatprep.subr.mxu0 0.0
    %4682 = vmatpush1.msra.mxu0 0.0
    %4683 = vmatprep.subr.mxu0 0.0
    %4684 = vmatpush1.msra.mxu0 0.0
    %4685 = vmatprep.subr.mxu0 0.0
    %4686 = vmatpush1.msra.mxu0 0.0
    %4687 = vmatprep.subr.mxu0 0.0
    %4688 = vmatpush1.msra.mxu0 0.0
    %4689 = vmatprep.subr.mxu0 0.0
    %4690 = vmatpush1.msra.mxu0 0.0
    %4691 = vmatprep.mubr.f32.mxu0 0.0
    %4692 = vmatmul.mubr.f32.gmra.mrb[0].mxu0 %v4625
    %v4693 = vpop.f32.mrb[0].mxu0
    %v4694 = vadd.f32 %v4619, %v4693
    %v4695 = vpop.f32.mrb[0].mxu0
    %4696 = vdwg.mxu0
    %v4697 = vadd.f32 %v4694, %v69
    %v4698 = vmul.f32 %v4697, %v87
    %v4699 = vtanh.pop %v4698
    %v4700 = vmul.f32 %v4699, %v87
    %v4701 = vadd.f32 %v4700, %v88
    %v4702 = vmul.f32 %v4701, %v4375
    %4704 = vrot.lane.b32.xlu0 %v4701, 64
    %v4705 = vpop.permute.xlu0 %4704
    %v4707 = vmul.f32 %v4701, %v4705
    %4709 = vrot.lane.b32.xlu0 %v4707, 32
    %v4710 = vpop.permute.xlu0 %4709
    %v4712 = vadd.f32 %v4702, %v4710
    %v4713 = vtanh.pop %v4712
    %4715 = vrot.lane.b32.xlu0 %v4713, 64
    %v4716 = vpop.permute.xlu0 %4715
    %v4718 = vmul.f32 %v4701, %v4716
    %4720 = vrot.lane.b32.xlu0 %v4718, 32
    %v4721 = vpop.permute.xlu0 %4720
    %vm4728 = vcmask 254976
    %4729 = vst.msk [vmem:[#allocation5] sm:$0x3] %vm4728, %v3120
    %4730 = vst.msk [vmem:[#allocation5 + $0x2] sm:$0x3] %vm4728, %v3460
    %4731 = vst.msk [vmem:[#allocation5 + $0x4] sm:$0x3] %vm4728, %v3872
    %4732 = vst.msk [vmem:[#allocation5 + $0x6] sm:$0x3] %vm4728, %v4212
    %4733 = vst.msk [vmem:[#allocation5 + $0x8] sm:$0x3] %vm4728, %v4624
    %4734 = vst.msk [vmem:[#allocation5 + $0xa] sm:$0x3] %vm4728, %v4721
    // Predicated region
    $region34: #{lstm_predictor_forward.1} parent=1 // pred_check
      _
    $region35: #{lstm_predictor_forward.1} parent=1 // pred_check_branch
      %4736 = sbr.rel (0) target = $region37
    $region36: #{lstm_predictor_forward.1} parent=1 // pred_region
      %s4738 = ssub.s32 192, 192
      %4739 = vsyncadd [#allocation4], %s4738
      %s4740 = sshll.u32 [#allocation5], 4
      %s4741 = int_to_ptr.vmem [resolvable:$true] %s4740
      %4746 = dma.vmem_to_hbm [thread:$0]  %s4741, 192, %s7, [#allocation4], 32, 32, 2
    $region37: #{lstm_predictor_forward.1} parent=1 // pred_fallthru
      _
    // Predicated region
    $region38: #{lstm_predictor_forward.1} parent=1 // pred_check
      _
    $region39: #{lstm_predictor_forward.1} parent=1 // pred_check_branch
      %4748 = sbr.rel (0) target = $region41
    $region40: #{lstm_predictor_forward.1} parent=1 // pred_region
      %4749 = dma.done [#allocation4], 192
    $region41: #{lstm_predictor_forward.1} parent=1 // pred_fallthru
      _
    %4750 = vsyncpa [#allocation3], 1
    %4751 = vsyncpa [#allocation4], 1

</llo_original>
